<compile_context>
chip_gen: v7x
topology: tpu7x:2x2x1
jax: 0.10.0
libtpu: 0.0.40
codegen_flags: <defaults>
</compile_context>

<pallas_src>
import functools

import jax
import jax.numpy as jnp
from jax.experimental import pallas as pl
from jax.experimental.pallas import tpu as pltpu

RESCALE = 0.5 ** 0.5
BN_EPS = 1e-5


# ----------------------------- Pallas kernels --------------------------------

def _bn_stats_kernel(x_ref, mean_ref, var_ref, *, inv_n):
    """Row-tiled reduction: per-channel mean and biased variance (train-mode BN)."""
    i = pl.program_id(0)

    @pl.when(i == 0)
    def _init():
        mean_ref[...] = jnp.zeros_like(mean_ref)
        var_ref[...] = jnp.zeros_like(var_ref)

    x = x_ref[...]
    mean_ref[...] += jnp.sum(x, axis=0, keepdims=True) * inv_n
    var_ref[...] += jnp.sum(x * x, axis=0, keepdims=True) * inv_n   # E[x^2] so far

    @pl.when(i == pl.num_programs(0) - 1)
    def _finalize():
        m = mean_ref[...]
        var_ref[...] = var_ref[...] - m * m          # biased variance


def _convglu_fused_kernel(*refs, H, W, C, dilation, has_c):
    """One batch image per grid step: BN apply -> dilated 3x3 conv (in-VMEM
    shifted-window matmuls) -> conditioned GLU -> fused [up1x1 | skip1x1] +
    residuals, stored as one lane-dense (M, 2C) slab."""
    if has_c:
        (xs_ref, mask_ref, cp_ref, mean_ref, var_ref, gamma_ref, beta_ref,
         cw_ref, cb_ref, suw_ref, sub_ref, o_ref, hbuf) = refs
    else:
        (xs_ref, mask_ref, mean_ref, var_ref, gamma_ref, beta_ref,
         cw_ref, cb_ref, suw_ref, sub_ref, o_ref, hbuf) = refs
        cp_ref = None

    d = dilation
    Wp = W + 2 * d
    M = H * Wp - 2 * d                   # rows covering every output pixel
    margin = d * Wp + d                  # flat offset of padded pixel (d, d)
    half = C // 2

    # --- BatchNorm2d apply (batch statistics from the companion kernel) ------
    scale = gamma_ref[...] * jax.lax.rsqrt(var_ref[...] + BN_EPS)     # (1, C)
    shift = beta_ref[...] - mean_ref[...] * scale                     # (1, C)
    # conv pads the *normalized* activation with zeros -> re-zero the pad ring.
    hbuf[...] = (xs_ref[0, :, :C] * scale + shift) * mask_ref[...]    # (P, C)

    # --- dilated 3x3 conv: 9 shifted row-windows of hbuf, one MXU matmul per
    # tap, accumulated in f32.  Output row q = i*Wp + j holds pixel (i, j);
    # tap (ki, kj) starts at flat offset ki*d*Wp + kj*d.
    y = cb_ref[...]                                                   # (1, C) bias
    taps = [(ki, kj) for ki in range(3) for kj in range(3)]
    for t, (ki, kj) in enumerate(taps):
        off = ki * d * Wp + kj * d
        tap = hbuf[pl.ds(off, M), :]                                  # (M, C)
        y = y + jnp.dot(tap, cw_ref[t * C:(t + 1) * C, :],
                        preferred_element_type=jnp.float32)

    # --- gated linear unit (optionally conditioned; per-batch row broadcast) --
    a = y[:, :half]
    b = y[:, half:]
    if has_c:
        cp = cp_ref[0]                                                # (1, C)
        a = (a + cp[:, :half]) * RESCALE
        b = (b + cp[:, half:]) * RESCALE
    g = jax.nn.sigmoid(a) * b                                         # (M, half)

    # --- fused [up1x1 | skip1x1] matmul + residuals, one lane-dense store -----
    z = jnp.dot(g, suw_ref[...], preferred_element_type=jnp.float32) + sub_ref[...]
    res = xs_ref[0, pl.ds(margin, M), :]         # [x | skip] residual, same rows
    o_ref[0] = (z + res) * RESCALE               # columns: [new_out | new_skip]


# ----------------------------- kernel wrappers --------------------------------

def _row_tile(n, cap=2048):
    """Largest divisor of n that is a multiple of 8 and <= cap; else n itself
    (a full-array block is always legal)."""
    for t in range(min(cap, n), 7, -1):
        if n % t == 0 and t % 8 == 0:
            return t
    return n


def bn_batch_stats(xf):
    """Train-mode BatchNorm2d statistics over rows of (N, C)."""
    N, C = xf.shape
    tile = _row_tile(N)
    mean, var = pl.pallas_call(
        functools.partial(_bn_stats_kernel, inv_n=1.0 / N),
        grid=(N // tile,),
        in_specs=[pl.BlockSpec((tile, C), lambda i: (i, 0))],
        out_specs=(pl.BlockSpec((1, C), lambda i: (0, 0)),
                   pl.BlockSpec((1, C), lambda i: (0, 0))),
        out_shape=(jax.ShapeDtypeStruct((1, C), jnp.float32),
                   jax.ShapeDtypeStruct((1, C), jnp.float32)),
        compiler_params=pltpu.CompilerParams(dimension_semantics=("arbitrary",)),
    )(xf)
    return mean, var


def conv_glu_forward(params, x_nchw, skip_nchw, c=None, dilation=1):
    """ConvGLU forward, PyTorch semantics (train-mode BN).  NCHW in / NCHW out."""
    x = jnp.transpose(x_nchw, (0, 2, 3, 1)).astype(jnp.float32)       # NHWC
    skip = jnp.transpose(skip_nchw, (0, 2, 3, 1)).astype(jnp.float32)
    B, H, W, C = x.shape
    d = dilation                                   # padding = (3-1)*dilation//2 = d
    Hp, Wp = H + 2 * d, W + 2 * d
    P = Hp * Wp
    M = H * Wp - 2 * d
    half = C // 2

    # pass 1: per-channel batch statistics (full reduction over B*H*W rows).
    mean, var = bn_batch_stats(x.reshape(-1, C))

    # [x | skip] stacked on channels, zero-padded spatially, spatial flattened:
    # every conv tap becomes a contiguous row window of one VMEM buffer.
    xs = jnp.concatenate([x, skip], axis=-1)
    xs = jnp.pad(xs, ((0, 0), (d, d), (d, d), (0, 0))).reshape(B, P, 2 * C)

    # interior mask: 1 at real pixels, 0 on the pad ring (constant under jit).
    ii = jnp.arange(Hp, dtype=jnp.int32)[:, None]
    jj = jnp.arange(Wp, dtype=jnp.int32)[None, :]
    mask = (((ii >= d) & (ii < d + H) & (jj >= d) & (jj < d + W))
            .astype(jnp.float32).reshape(P, 1))

    gamma = params["bn_gamma"].reshape(1, C)
    beta = params["bn_beta"].reshape(1, C)
    conv_w = params["conv_w"]                                         # (9C, C)
    conv_b = params["conv_b"].reshape(1, C)
    # fused [up1x1 | skip1x1] weight -> one matmul, lane-dense (rows, 2C) slab.
    suw = jnp.concatenate([params["up_w"], params["skip_w"]], axis=1)
    sub = jnp.concatenate([params["up_b"], params["skip_b"]]).reshape(1, 2 * C)

    has_c = c is not None
    inputs = [xs, mask]
    in_specs = [pl.BlockSpec((1, P, 2 * C), lambda bi: (bi, 0, 0)),
                pl.BlockSpec((P, 1), lambda bi: (0, 0))]
    if has_c:
        # c_proj (nn.Linear) is a tiny (B, c_dim) matmul; keep it in XLA and
        # broadcast per-batch inside the kernel (no (B*H*W, C) repeat in HBM).
        cp = c.astype(jnp.float32) @ params["cproj_w"] + params["cproj_b"]
        inputs.append(cp.reshape(B, 1, C))
        in_specs.append(pl.BlockSpec((1, 1, C), lambda bi: (bi, 0, 0)))
    inputs += [mean, var, gamma, beta, conv_w, conv_b, suw, sub]
    in_specs += [pl.BlockSpec((1, C), lambda bi: (0, 0))] * 4 + [
        pl.BlockSpec((9 * C, C), lambda bi: (0, 0)),
        pl.BlockSpec((1, C), lambda bi: (0, 0)),
        pl.BlockSpec((half, 2 * C), lambda bi: (0, 0)),
        pl.BlockSpec((1, 2 * C), lambda bi: (0, 0)),
    ]

    slab = pl.pallas_call(
        functools.partial(_convglu_fused_kernel, H=H, W=W, C=C,
                          dilation=d, has_c=has_c),
        grid=(B,),
        in_specs=in_specs,
        out_specs=pl.BlockSpec((1, M, 2 * C), lambda bi: (bi, 0, 0)),
        out_shape=jax.ShapeDtypeStruct((B, M, 2 * C), jnp.float32),
        scratch_shapes=[pltpu.VMEM((P, C), jnp.float32)],
        compiler_params=pltpu.CompilerParams(dimension_semantics=("parallel",)),
    )(*inputs)

    # slab rows are padded-row coordinates q = i*Wp + j (j < W valid): recover
    # the (B, H, W, .) image and split [out | skip].
    slab = jnp.pad(slab, ((0, 0), (0, H * Wp - M), (0, 0)))
    slab = slab.reshape(B, H, Wp, 2 * C)[:, :, :W, :]
    out = jnp.transpose(slab[..., :C], (0, 3, 1, 2))
    new_skip = jnp.transpose(slab[..., C:], (0, 3, 1, 2))
    return out, new_skip


# ----------------------------- reference & init -------------------------------

def conv_glu_reference(params, x_nchw, skip_nchw, c=None, dilation=1):
    """Pure-JAX reference with the same weight layout (validation only)."""
    x = jnp.transpose(x_nchw, (0, 2, 3, 1)).astype(jnp.float32)
    skip = jnp.transpose(skip_nchw, (0, 2, 3, 1)).astype(jnp.float32)
    B, H, W, C = x.shape
    half, d = C // 2, dilation
    xf = x.reshape(-1, C)
    mean = jnp.mean(xf, axis=0, keepdims=True)
    var = jnp.mean((xf - mean) ** 2, axis=0, keepdims=True)
    h = (xf - mean) * jax.lax.rsqrt(var + BN_EPS) * params["bn_gamma"] + params["bn_beta"]
    hp = jnp.pad(h.reshape(B, H, W, C), ((0, 0), (d, d), (d, d), (0, 0)))
    cols = [hp[:, ki * d:ki * d + H, kj * d:kj * d + W, :]
            for ki in range(3) for kj in range(3)]
    y = jnp.concatenate(cols, axis=-1).reshape(B * H * W, 9 * C) @ params["conv_w"]
    y = y + params["conv_b"]
    a, b = y[:, :half], y[:, half:]
    if c is not None:
        cp = c.astype(jnp.float32) @ params["cproj_w"] + params["cproj_b"]
        a = (a + jnp.repeat(cp[:, :half], H * W, axis=0)) * RESCALE
        b = (b + jnp.repeat(cp[:, half:], H * W, axis=0)) * RESCALE
    g = jax.nn.sigmoid(a) * b
    suw = jnp.concatenate([params["up_w"], params["skip_w"]], axis=1)
    sub = jnp.concatenate([params["up_b"], params["skip_b"]])
    z = g @ suw + sub
    out = RESCALE * (z[:, :C] + xf)
    new_skip = RESCALE * (z[:, C:] + skip.reshape(-1, C))
    to_nchw = lambda t: jnp.transpose(t.reshape(B, H, W, C), (0, 3, 1, 2))
    return to_nchw(out), to_nchw(new_skip)


def init_convglu_params(key, channels, c_dim=None):
    """Random ConvGLU parameters in the matmul layouts used by the kernel.

      conv_w (9C, C): torch conv.weight (C, C, 3, 3) -> permute(2, 3, 1, 0).reshape(9C, C)
      up_w / skip_w (C//2, C): torch 1x1 conv weight (C, C//2, 1, 1) -> (C//2, C)
      cproj_w (c_dim, C): torch nn.Linear weight transposed
    BN affine is random (instead of gamma=1/beta=0) so the zero-padding path
    of the conv is actually exercised by the validation check.
    """
    C, half = channels, channels // 2
    ks = jax.random.split(key, 10)
    p = dict(
        bn_gamma=1.0 + 0.2 * jax.random.normal(ks[0], (C,), jnp.float32),
        bn_beta=0.5 * jax.random.normal(ks[1], (C,), jnp.float32),
        conv_w=0.1 * jax.random.normal(ks[2], (9 * C, C), jnp.float32),
        conv_b=0.05 * jax.random.normal(ks[3], (C,), jnp.float32),
        up_w=0.1 * jax.random.normal(ks[4], (half, C), jnp.float32),
        up_b=0.05 * jax.random.normal(ks[5], (C,), jnp.float32),
        skip_w=0.1 * jax.random.normal(ks[6], (half, C), jnp.float32),
        skip_b=0.05 * jax.random.normal(ks[7], (C,), jnp.float32),
    )
    if c_dim is not None:
        p["cproj_w"] = 0.1 * jax.random.normal(ks[8], (c_dim, C), jnp.float32)
        p["cproj_b"] = 0.05 * jax.random.normal(ks[9], (C,), jnp.float32)
    return p


# ---------------------------------- main --------------------------------------

if __name__ == "__main__":
    key = jax.random.PRNGKey(0)
    pk, xk, sk, ck = jax.random.split(key, 4)

    B, C, H, W, C_DIM = 2, 8, 16, 16, 16
    params = init_convglu_params(pk, channels=C, c_dim=C_DIM)
    x = jax.random.normal(xk, (B, C, H, W), jnp.float32)      # NCHW like PyTorch
    skip = jax.random.normal(sk, (B, C, H, W), jnp.float32)
    c = jax.random.normal(ck, (B, C_DIM), jnp.float32)

    fwd = jax.jit(conv_glu_forward, static_argnames=("dilation",))

    # conditioned path, dilation=1 (padding=1)
    out1, skip1 = fwd(params, x, skip, c, dilation=1)
    jax.block_until_ready((out1, skip1))
    assert out1.shape == (B, C, H, W) and skip1.shape == (B, C, H, W)
    assert out1.dtype == jnp.float32 and skip1.dtype == jnp.float32
    r_out1, r_skip1 = conv_glu_reference(params, x, skip, c, dilation=1)
    assert float(jnp.max(jnp.abs(out1 - r_out1))) < 2e-2
    assert float(jnp.max(jnp.abs(skip1 - r_skip1))) < 2e-2

    # unconditioned path, dilation=2 (dilated conv, padding=2)
    out2, skip2 = fwd(params, x, skip, None, dilation=2)
    jax.block_until_ready((out2, skip2))
    r_out2, r_skip2 = conv_glu_reference(params, x, skip, None, dilation=2)
    assert float(jnp.max(jnp.abs(out2 - r_out2))) < 2e-2
    assert float(jnp.max(jnp.abs(skip2 - r_skip2))) < 2e-2

    print("KERNEL_OK")
</pallas_src>

<mosaic_0001>
module attributes {stable_mosaic.version = 11 : i64} {
  func.func @_bn_stats_kernel(%arg0: i32, %arg1: memref<512x8xf32, #tpu.memory_space<vmem>>, %arg2: memref<1x8xf32, #tpu.memory_space<vmem>>, %arg3: memref<1x8xf32, #tpu.memory_space<vmem>>) attributes {dimension_semantics = [#tpu.dimension_semantics<arbitrary>], iteration_bounds = array<i64: 1>, scalar_prefetch = 0 : i64, scratch_operands = 0 : i64, tpu.core_type = #tpu.core_type<tc>, window_params = [{transform_indices = @transform_0, window_bounds = array<i64: 512, 8>}, {pipeline_mode = #tpu.pipeline_mode<synchronous>, transform_indices = @transform_1, window_bounds = array<i64: 1, 8>}, {pipeline_mode = #tpu.pipeline_mode<synchronous>, transform_indices = @transform_2, window_bounds = array<i64: 1, 8>}]} {
    %c0_i32 = arith.constant 0 : i32
    %0 = arith.cmpi eq, %arg0, %c0_i32 : i32
    %1 = arith.extui %0 : i1 to i32
    %c0_i32_0 = arith.constant 0 : i32
    %2 = arith.cmpi ne, %1, %c0_i32_0 : i32
    scf.if %2 {
      %cst_15 = arith.constant 0.000000e+00 : f32
      %22 = vector.broadcast %cst_15 : f32 to vector<1x8xf32>
      %c0_16 = arith.constant 0 : index
      %c0_17 = arith.constant 0 : index
      %23 = vector.load %arg2[%c0_16, %c0_17] : memref<1x8xf32, #tpu.memory_space<vmem>>, vector<1x8xf32>
      tpu.vector_store %arg2[%c0_16, %c0_17], %22 {strides = array<i32>} : memref<1x8xf32, #tpu.memory_space<vmem>>, vector<1x8xf32>,
      %cst_18 = arith.constant 0.000000e+00 : f32
      %24 = vector.broadcast %cst_18 : f32 to vector<1x8xf32>
      %c0_19 = arith.constant 0 : index
      %c0_20 = arith.constant 0 : index
      %25 = vector.load %arg3[%c0_19, %c0_20] : memref<1x8xf32, #tpu.memory_space<vmem>>, vector<1x8xf32>
      tpu.vector_store %arg3[%c0_19, %c0_20], %24 {strides = array<i32>} : memref<1x8xf32, #tpu.memory_space<vmem>>, vector<1x8xf32>,
    } else {
    }
    %c0 = arith.constant 0 : index
    %c0_1 = arith.constant 0 : index
    %3 = vector.load %arg1[%c0, %c0_1] : memref<512x8xf32, #tpu.memory_space<vmem>>, vector<512x8xf32>
    %c0_2 = arith.constant 0 : index
    %c0_3 = arith.constant 0 : index
    %4 = vector.load %arg2[%c0_2, %c0_3] : memref<1x8xf32, #tpu.memory_space<vmem>>, vector<1x8xf32>
    %cst = arith.constant dense<0.000000e+00> : vector<8xf32>
    %5 = vector.multi_reduction <add>, %3, %cst [0] : vector<512x8xf32> to vector<8xf32>
    %6 = vector.shape_cast %5 : vector<8xf32> to vector<1x8xf32>
    %cst_4 = arith.constant 0.001953125 : f32
    %7 = vector.broadcast %cst_4 : f32 to vector<1x8xf32>
    %8 = arith.mulf %6, %7 : vector<1x8xf32>
    %9 = arith.addf %4, %8 : vector<1x8xf32>
    %c0_5 = arith.constant 0 : index
    %c0_6 = arith.constant 0 : index
    %10 = vector.load %arg2[%c0_5, %c0_6] : memref<1x8xf32, #tpu.memory_space<vmem>>, vector<1x8xf32>
    tpu.vector_store %arg2[%c0_5, %c0_6], %9 {strides = array<i32>} : memref<1x8xf32, #tpu.memory_space<vmem>>, vector<1x8xf32>,
    %c0_7 = arith.constant 0 : index
    %c0_8 = arith.constant 0 : index
    %11 = vector.load %arg3[%c0_7, %c0_8] : memref<1x8xf32, #tpu.memory_space<vmem>>, vector<1x8xf32>
    %12 = arith.mulf %3, %3 : vector<512x8xf32>
    %cst_9 = arith.constant dense<0.000000e+00> : vector<8xf32>
    %13 = vector.multi_reduction <add>, %12, %cst_9 [0] : vector<512x8xf32> to vector<8xf32>
    %14 = vector.shape_cast %13 : vector<8xf32> to vector<1x8xf32>
    %cst_10 = arith.constant 0.001953125 : f32
    %15 = vector.broadcast %cst_10 : f32 to vector<1x8xf32>
    %16 = arith.mulf %14, %15 : vector<1x8xf32>
    %17 = arith.addf %11, %16 : vector<1x8xf32>
    %c0_11 = arith.constant 0 : index
    %c0_12 = arith.constant 0 : index
    %18 = vector.load %arg3[%c0_11, %c0_12] : memref<1x8xf32, #tpu.memory_space<vmem>>, vector<1x8xf32>
    tpu.vector_store %arg3[%c0_11, %c0_12], %17 {strides = array<i32>} : memref<1x8xf32, #tpu.memory_space<vmem>>, vector<1x8xf32>,
    %c0_i32_13 = arith.constant 0 : i32
    %19 = arith.cmpi eq, %arg0, %c0_i32_13 : i32
    %20 = arith.extui %19 : i1 to i32
    %c0_i32_14 = arith.constant 0 : i32
    %21 = arith.cmpi ne, %20, %c0_i32_14 : i32
    scf.if %21 {
      %c0_15 = arith.constant 0 : index
      %c0_16 = arith.constant 0 : index
      %22 = vector.load %arg2[%c0_15, %c0_16] : memref<1x8xf32, #tpu.memory_space<vmem>>, vector<1x8xf32>
      %c0_17 = arith.constant 0 : index
      %c0_18 = arith.constant 0 : index
      %23 = vector.load %arg3[%c0_17, %c0_18] : memref<1x8xf32, #tpu.memory_space<vmem>>, vector<1x8xf32>
      %24 = arith.mulf %22, %22 : vector<1x8xf32>
      %25 = arith.subf %23, %24 : vector<1x8xf32>
      %c0_19 = arith.constant 0 : index
      %c0_20 = arith.constant 0 : index
      %26 = vector.load %arg3[%c0_19, %c0_20] : memref<1x8xf32, #tpu.memory_space<vmem>>, vector<1x8xf32>
      tpu.vector_store %arg3[%c0_19, %c0_20], %25 {strides = array<i32>} : memref<1x8xf32, #tpu.memory_space<vmem>>, vector<1x8xf32>,
    } else {
    }
    return
  }
  func.func @transform_0(%arg0: i32) -> (i32, i32) {
    %c0_i32 = arith.constant 0 : i32
    %c0_i32_0 = arith.constant 0 : i32
    return %arg0, %c0_i32 : i32, i32
  }
  func.func @transform_1(%arg0: i32) -> (i32, i32) {
    %c0_i32 = arith.constant 0 : i32
    %c0_i32_0 = arith.constant 0 : i32
    %c0_i32_1 = arith.constant 0 : i32
    return %c0_i32, %c0_i32_0 : i32, i32
  }
  func.func @transform_2(%arg0: i32) -> (i32, i32) {
    %c0_i32 = arith.constant 0 : i32
    %c0_i32_0 = arith.constant 0 : i32
    %c0_i32_1 = arith.constant 0 : i32
    return %c0_i32, %c0_i32_0 : i32, i32
  }
}

module attributes {stable_mosaic.version = 11 : i64} {
  func.func @_convglu_fused_kernel(%arg0: i32, %arg1: memref<1x324x16xf32, #tpu.memory_space<vmem>>, %arg2: memref<324x1xf32, #tpu.memory_space<vmem>>, %arg3: memref<1x1x8xf32, #tpu.memory_space<vmem>>, %arg4: memref<1x8xf32, #tpu.memory_space<vmem>>, %arg5: memref<1x8xf32, #tpu.memory_space<vmem>>, %arg6: memref<1x8xf32, #tpu.memory_space<vmem>>, %arg7: memref<1x8xf32, #tpu.memory_space<vmem>>, %arg8: memref<72x8xf32, #tpu.memory_space<vmem>>, %arg9: memref<1x8xf32, #tpu.memory_space<vmem>>, %arg10: memref<4x16xf32, #tpu.memory_space<vmem>>, %arg11: memref<1x16xf32, #tpu.memory_space<vmem>>, %arg12: memref<1x286x16xf32, #tpu.memory_space<vmem>>, %arg13: memref<324x8xf32, #tpu.memory_space<vmem>>) attributes {dimension_semantics = [#tpu.dimension_semantics<parallel>], iteration_bounds = array<i64: 2>, scalar_prefetch = 0 : i64, scratch_operands = 1 : i64, tpu.core_type = #tpu.core_type<tc>, window_params = [{transform_indices = @transform_0, window_bounds = array<i64: 1, 324, 16>}, {pipeline_mode = #tpu.pipeline_mode<synchronous>, transform_indices = @transform_1, window_bounds = array<i64: 324, 1>}, {transform_indices = @transform_2, window_bounds = array<i64: 1, 1, 8>}, {pipeline_mode = #tpu.pipeline_mode<synchronous>, transform_indices = @transform_3, window_bounds = array<i64: 1, 8>}, {pipeline_mode = #tpu.pipeline_mode<synchronous>, transform_indices = @transform_4, window_bounds = array<i64: 1, 8>}, {pipeline_mode = #tpu.pipeline_mode<synchronous>, transform_indices = @transform_5, window_bounds = array<i64: 1, 8>}, {pipeline_mode = #tpu.pipeline_mode<synchronous>, transform_indices = @transform_6, window_bounds = array<i64: 1, 8>}, {pipeline_mode = #tpu.pipeline_mode<synchronous>, transform_indices = @transform_7, window_bounds = array<i64: 72, 8>}, {pipeline_mode = #tpu.pipeline_mode<synchronous>, transform_indices = @transform_8, window_bounds = array<i64: 1, 8>}, {pipeline_mode = #tpu.pipeline_mode<synchronous>, transform_indices = @transform_9, window_bounds = array<i64: 4, 16>}, {pipeline_mode = #tpu.pipeline_mode<synchronous>, transform_indices = @transform_10, window_bounds = array<i64: 1, 16>}, {transform_indices = @transform_11, window_bounds = array<i64: 1, 286, 16>}]} {
    %c0 = arith.constant 0 : index
    %c0_0 = arith.constant 0 : index
    %0 = vector.load %arg6[%c0, %c0_0] : memref<1x8xf32, #tpu.memory_space<vmem>>, vector<1x8xf32>
    %c0_1 = arith.constant 0 : index
    %c0_2 = arith.constant 0 : index
    %1 = vector.load %arg5[%c0_1, %c0_2] : memref<1x8xf32, #tpu.memory_space<vmem>>, vector<1x8xf32>
    %cst = arith.constant 9.99999974E-6 : f32
    %2 = vector.broadcast %cst : f32 to vector<1x8xf32>
    %3 = arith.addf %1, %2 : vector<1x8xf32>
    %4 = math.rsqrt %3 : vector<1x8xf32>
    %5 = arith.mulf %0, %4 : vector<1x8xf32>
    %c0_3 = arith.constant 0 : index
    %c0_4 = arith.constant 0 : index
    %6 = vector.load %arg7[%c0_3, %c0_4] : memref<1x8xf32, #tpu.memory_space<vmem>>, vector<1x8xf32>
    %c0_5 = arith.constant 0 : index
    %c0_6 = arith.constant 0 : index
    %7 = vector.load %arg4[%c0_5, %c0_6] : memref<1x8xf32, #tpu.memory_space<vmem>>, vector<1x8xf32>
    %8 = arith.mulf %7, %5 : vector<1x8xf32>
    %9 = arith.subf %6, %8 : vector<1x8xf32>
    %c0_7 = arith.constant 0 : index
    %c0_8 = arith.constant 0 : index
    %c0_9 = arith.constant 0 : index
    %10 = vector.load %arg1[%c0_7, %c0_8, %c0_9] : memref<1x324x16xf32, #tpu.memory_space<vmem>>, vector<1x324x8xf32>
    %11 = vector.shape_cast %10 : vector<1x324x8xf32> to vector<324x8xf32>
    %12 = vector.broadcast %5 : vector<1x8xf32> to vector<324x8xf32>
    %13 = arith.mulf %11, %12 : vector<324x8xf32>
    %14 = vector.broadcast %9 : vector<1x8xf32> to vector<324x8xf32>
    %15 = arith.addf %13, %14 : vector<324x8xf32>
    %c0_10 = arith.constant 0 : index
    %c0_11 = arith.constant 0 : index
    %16 = vector.load %arg2[%c0_10, %c0_11] : memref<324x1xf32, #tpu.memory_space<vmem>>, vector<324x1xf32>
    %17 = vector.broadcast %16 : vector<324x1xf32> to vector<324x8xf32>
    %18 = arith.mulf %15, %17 : vector<324x8xf32>
    %c0_12 = arith.constant 0 : index
    %c0_13 = arith.constant 0 : index
    %19 = vector.load %arg13[%c0_12, %c0_13] : memref<324x8xf32, #tpu.memory_space<vmem>>, vector<324x8xf32>
    tpu.vector_store %arg13[%c0_12, %c0_13], %18 {strides = array<i32>} : memref<324x8xf32, #tpu.memory_space<vmem>>, vector<324x8xf32>,
    %c0_14 = arith.constant 0 : index
    %c0_15 = arith.constant 0 : index
    %20 = vector.load %arg9[%c0_14, %c0_15] : memref<1x8xf32, #tpu.memory_space<vmem>>, vector<1x8xf32>
    %c0_16 = arith.constant 0 : index
    %c0_17 = arith.constant 0 : index
    %21 = vector.load %arg13[%c0_16, %c0_17] : memref<324x8xf32, #tpu.memory_space<vmem>>, vector<286x8xf32>
    %c0_18 = arith.constant 0 : index
    %c0_19 = arith.constant 0 : index
    %22 = vector.load %arg8[%c0_18, %c0_19] : memref<72x8xf32, #tpu.memory_space<vmem>>, vector<8x8xf32>
    %cst_20 = arith.constant dense<0.000000e+00> : vector<286x8xf32>
    %23 = tpu.matmul %21, %22, %cst_20 {dimension_numbers = #tpu.dot_dimension_numbers<[1], [0], [0], [1], [0, 0, 1, 1], [], []>} : vector<286x8xf32>, vector<8x8xf32>, vector<286x8xf32> -> vector<286x8xf32>
    %24 = vector.broadcast %20 : vector<1x8xf32> to vector<286x8xf32>
    %25 = arith.addf %24, %23 : vector<286x8xf32>
    %c1 = arith.constant 1 : index
    %c0_21 = arith.constant 0 : index
    %26 = vector.load %arg13[%c1, %c0_21] : memref<324x8xf32, #tpu.memory_space<vmem>>, vector<286x8xf32>
    %c8 = arith.constant 8 : index
    %c0_22 = arith.constant 0 : index
    %27 = vector.load %arg8[%c8, %c0_22] : memref<72x8xf32, #tpu.memory_space<vmem>>, vector<8x8xf32>
    %cst_23 = arith.constant dense<0.000000e+00> : vector<286x8xf32>
    %28 = tpu.matmul %26, %27, %cst_23 {dimension_numbers = #tpu.dot_dimension_numbers<[1], [0], [0], [1], [0, 0, 1, 1], [], []>} : vector<286x8xf32>, vector<8x8xf32>, vector<286x8xf32> -> vector<286x8xf32>
    %29 = arith.addf %25, %28 : vector<286x8xf32>
    %c2 = arith.constant 2 : index
    %c0_24 = arith.constant 0 : index
    %30 = vector.load %arg13[%c2, %c0_24] : memref<324x8xf32, #tpu.memory_space<vmem>>, vector<286x8xf32>
    %c16 = arith.constant 16 : index
    %c0_25 = arith.constant 0 : index
    %31 = vector.load %arg8[%c16, %c0_25] : memref<72x8xf32, #tpu.memory_space<vmem>>, vector<8x8xf32>
    %cst_26 = arith.constant dense<0.000000e+00> : vector<286x8xf32>
    %32 = tpu.matmul %30, %31, %cst_26 {dimension_numbers = #tpu.dot_dimension_numbers<[1], [0], [0], [1], [0, 0, 1, 1], [], []>} : vector<286x8xf32>, vector<8x8xf32>, vector<286x8xf32> -> vector<286x8xf32>
    %33 = arith.addf %29, %32 : vector<286x8xf32>
    %c18 = arith.constant 18 : index
    %c0_27 = arith.constant 0 : index
    %34 = vector.load %arg13[%c18, %c0_27] : memref<324x8xf32, #tpu.memory_space<vmem>>, vector<286x8xf32>
    %c24 = arith.constant 24 : index
    %c0_28 = arith.constant 0 : index
    %35 = vector.load %arg8[%c24, %c0_28] : memref<72x8xf32, #tpu.memory_space<vmem>>, vector<8x8xf32>
    %cst_29 = arith.constant dense<0.000000e+00> : vector<286x8xf32>
    %36 = tpu.matmul %34, %35, %cst_29 {dimension_numbers = #tpu.dot_dimension_numbers<[1], [0], [0], [1], [0, 0, 1, 1], [], []>} : vector<286x8xf32>, vector<8x8xf32>, vector<286x8xf32> -> vector<286x8xf32>
    %37 = arith.addf %33, %36 : vector<286x8xf32>
    %c19 = arith.constant 19 : index
    %c0_30 = arith.constant 0 : index
    %38 = vector.load %arg13[%c19, %c0_30] : memref<324x8xf32, #tpu.memory_space<vmem>>, vector<286x8xf32>
    %c32 = arith.constant 32 : index
    %c0_31 = arith.constant 0 : index
    %39 = vector.load %arg8[%c32, %c0_31] : memref<72x8xf32, #tpu.memory_space<vmem>>, vector<8x8xf32>
    %cst_32 = arith.constant dense<0.000000e+00> : vector<286x8xf32>
    %40 = tpu.matmul %38, %39, %cst_32 {dimension_numbers = #tpu.dot_dimension_numbers<[1], [0], [0], [1], [0, 0, 1, 1], [], []>} : vector<286x8xf32>, vector<8x8xf32>, vector<286x8xf32> -> vector<286x8xf32>
    %41 = arith.addf %37, %40 : vector<286x8xf32>
    %c20 = arith.constant 20 : index
    %c0_33 = arith.constant 0 : index
    %42 = vector.load %arg13[%c20, %c0_33] : memref<324x8xf32, #tpu.memory_space<vmem>>, vector<286x8xf32>
    %c40 = arith.constant 40 : index
    %c0_34 = arith.constant 0 : index
    %43 = vector.load %arg8[%c40, %c0_34] : memref<72x8xf32, #tpu.memory_space<vmem>>, vector<8x8xf32>
    %cst_35 = arith.constant dense<0.000000e+00> : vector<286x8xf32>
    %44 = tpu.matmul %42, %43, %cst_35 {dimension_numbers = #tpu.dot_dimension_numbers<[1], [0], [0], [1], [0, 0, 1, 1], [], []>} : vector<286x8xf32>, vector<8x8xf32>, vector<286x8xf32> -> vector<286x8xf32>
    %45 = arith.addf %41, %44 : vector<286x8xf32>
    %c36 = arith.constant 36 : index
    %c0_36 = arith.constant 0 : index
    %46 = vector.load %arg13[%c36, %c0_36] : memref<324x8xf32, #tpu.memory_space<vmem>>, vector<286x8xf32>
    %c48 = arith.constant 48 : index
    %c0_37 = arith.constant 0 : index
    %47 = vector.load %arg8[%c48, %c0_37] : memref<72x8xf32, #tpu.memory_space<vmem>>, vector<8x8xf32>
    %cst_38 = arith.constant dense<0.000000e+00> : vector<286x8xf32>
    %48 = tpu.matmul %46, %47, %cst_38 {dimension_numbers = #tpu.dot_dimension_numbers<[1], [0], [0], [1], [0, 0, 1, 1], [], []>} : vector<286x8xf32>, vector<8x8xf32>, vector<286x8xf32> -> vector<286x8xf32>
    %49 = arith.addf %45, %48 : vector<286x8xf32>
    %c37 = arith.constant 37 : index
    %c0_39 = arith.constant 0 : index
    %50 = vector.load %arg13[%c37, %c0_39] : memref<324x8xf32, #tpu.memory_space<vmem>>, vector<286x8xf32>
    %c56 = arith.constant 56 : index
    %c0_40 = arith.constant 0 : index
    %51 = vector.load %arg8[%c56, %c0_40] : memref<72x8xf32, #tpu.memory_space<vmem>>, vector<8x8xf32>
    %cst_41 = arith.constant dense<0.000000e+00> : vector<286x8xf32>
    %52 = tpu.matmul %50, %51, %cst_41 {dimension_numbers = #tpu.dot_dimension_numbers<[1], [0], [0], [1], [0, 0, 1, 1], [], []>} : vector<286x8xf32>, vector<8x8xf32>, vector<286x8xf32> -> vector<286x8xf32>
    %53 = arith.addf %49, %52 : vector<286x8xf32>
    %c38 = arith.constant 38 : index
    %c0_42 = arith.constant 0 : index
    %54 = vector.load %arg13[%c38, %c0_42] : memref<324x8xf32, #tpu.memory_space<vmem>>, vector<286x8xf32>
    %c64 = arith.constant 64 : index
    %c0_43 = arith.constant 0 : index
    %55 = vector.load %arg8[%c64, %c0_43] : memref<72x8xf32, #tpu.memory_space<vmem>>, vector<8x8xf32>
    %cst_44 = arith.constant dense<0.000000e+00> : vector<286x8xf32>
    %56 = tpu.matmul %54, %55, %cst_44 {dimension_numbers = #tpu.dot_dimension_numbers<[1], [0], [0], [1], [0, 0, 1, 1], [], []>} : vector<286x8xf32>, vector<8x8xf32>, vector<286x8xf32> -> vector<286x8xf32>
    %57 = arith.addf %53, %56 : vector<286x8xf32>
    %58 = vector.extract_strided_slice %57 {offsets = [0, 0], sizes = [286, 4], strides = [1, 1]} : vector<286x8xf32> to vector<286x4xf32>
    %59 = vector.extract_strided_slice %57 {offsets = [0, 4], sizes = [286, 4], strides = [1, 1]} : vector<286x8xf32> to vector<286x4xf32>
    %c0_45 = arith.constant 0 : index
    %c0_46 = arith.constant 0 : index
    %c0_47 = arith.constant 0 : index
    %60 = vector.load %arg3[%c0_45, %c0_46, %c0_47] : memref<1x1x8xf32, #tpu.memory_space<vmem>>, vector<1x1x8xf32>
    %61 = vector.shape_cast %60 : vector<1x1x8xf32> to vector<1x8xf32>
    %62 = vector.extract_strided_slice %61 {offsets = [0, 0], sizes = [1, 4], strides = [1, 1]} : vector<1x8xf32> to vector<1x4xf32>
    %63 = vector.broadcast %62 : vector<1x4xf32> to vector<286x4xf32>
    %64 = arith.addf %58, %63 : vector<286x4xf32>
    %cst_48 = arith.constant 0.707106769 : f32
    %65 = vector.broadcast %cst_48 : f32 to vector<286x4xf32>
    %66 = arith.mulf %64, %65 : vector<286x4xf32>
    %67 = vector.extract_strided_slice %61 {offsets = [0, 4], sizes = [1, 4], strides = [1, 1]} : vector<1x8xf32> to vector<1x4xf32>
    %68 = vector.broadcast %67 : vector<1x4xf32> to vector<286x4xf32>
    %69 = arith.addf %59, %68 : vector<286x4xf32>
    %cst_49 = arith.constant 0.707106769 : f32
    %70 = vector.broadcast %cst_49 : f32 to vector<286x4xf32>
    %71 = arith.mulf %69, %70 : vector<286x4xf32>
    %72 = arith.negf %66 : vector<286x4xf32>
    %73 = math.exp %72 : vector<286x4xf32>
    %cst_50 = arith.constant 1.000000e+00 : f32
    %74 = vector.broadcast %cst_50 : f32 to vector<286x4xf32>
    %75 = arith.addf %74, %73 : vector<286x4xf32>
    %76 = arith.divf %74, %75 : vector<286x4xf32>
    %77 = arith.mulf %76, %71 : vector<286x4xf32>
    %c0_51 = arith.constant 0 : index
    %c0_52 = arith.constant 0 : index
    %78 = vector.load %arg10[%c0_51, %c0_52] : memref<4x16xf32, #tpu.memory_space<vmem>>, vector<4x16xf32>
    %cst_53 = arith.constant dense<0.000000e+00> : vector<286x16xf32>
    %79 = tpu.matmul %77, %78, %cst_53 {dimension_numbers = #tpu.dot_dimension_numbers<[1], [0], [0], [1], [0, 0, 1, 1], [], []>} : vector<286x4xf32>, vector<4x16xf32>, vector<286x16xf32> -> vector<286x16xf32>
    %c0_54 = arith.constant 0 : index
    %c0_55 = arith.constant 0 : index
    %80 = vector.load %arg11[%c0_54, %c0_55] : memref<1x16xf32, #tpu.memory_space<vmem>>, vector<1x16xf32>
    %81 = vector.broadcast %80 : vector<1x16xf32> to vector<286x16xf32>
    %82 = arith.addf %79, %81 : vector<286x16xf32>
    %c0_56 = arith.constant 0 : index
    %c19_57 = arith.constant 19 : index
    %c0_58 = arith.constant 0 : index
    %83 = vector.load %arg1[%c0_56, %c19_57, %c0_58] : memref<1x324x16xf32, #tpu.memory_space<vmem>>, vector<1x286x16xf32>
    %84 = vector.shape_cast %83 : vector<1x286x16xf32> to vector<286x16xf32>
    %85 = arith.addf %82, %84 : vector<286x16xf32>
    %cst_59 = arith.constant 0.707106769 : f32
    %86 = vector.broadcast %cst_59 : f32 to vector<286x16xf32>
    %87 = arith.mulf %85, %86 : vector<286x16xf32>
    %c0_60 = arith.constant 0 : index
    %c0_61 = arith.constant 0 : index
    %c0_62 = arith.constant 0 : index
    %88 = vector.load %arg12[%c0_60, %c0_61, %c0_62] : memref<1x286x16xf32, #tpu.memory_space<vmem>>, vector<1x286x16xf32>
    %89 = vector.shape_cast %88 : vector<1x286x16xf32> to vector<286x16xf32>
    %90 = vector.shape_cast %87 : vector<286x16xf32> to vector<1x286x16xf32>
    tpu.vector_store %arg12[%c0_60, %c0_61, %c0_62], %90 {strides = array<i32>} : memref<1x286x16xf32, #tpu.memory_space<vmem>>, vector<1x286x16xf32>,
    return
  }
  func.func @transform_0(%arg0: i32) -> (i32, i32, i32) {
    %c0_i32 = arith.constant 0 : i32
    %c0_i32_0 = arith.constant 0 : i32
    %c0_i32_1 = arith.constant 0 : i32
    return %arg0, %c0_i32, %c0_i32_0 : i32, i32, i32
  }
  func.func @transform_1(%arg0: i32) -> (i32, i32) {
    %c0_i32 = arith.constant 0 : i32
    %c0_i32_0 = arith.constant 0 : i32
    %c0_i32_1 = arith.constant 0 : i32
    return %c0_i32, %c0_i32_0 : i32, i32
  }
  func.func @transform_2(%arg0: i32) -> (i32, i32, i32) {
    %c0_i32 = arith.constant 0 : i32
    %c0_i32_0 = arith.constant 0 : i32
    %c0_i32_1 = arith.constant 0 : i32
    return %arg0, %c0_i32, %c0_i32_0 : i32, i32, i32
  }
  func.func @transform_3(%arg0: i32) -> (i32, i32) {
    %c0_i32 = arith.constant 0 : i32
    %c0_i32_0 = arith.constant 0 : i32
    %c0_i32_1 = arith.constant 0 : i32
    return %c0_i32, %c0_i32_0 : i32, i32
  }
  func.func @transform_4(%arg0: i32) -> (i32, i32) {
    %c0_i32 = arith.constant 0 : i32
    %c0_i32_0 = arith.constant 0 : i32
    %c0_i32_1 = arith.constant 0 : i32
    return %c0_i32, %c0_i32_0 : i32, i32
  }
  func.func @transform_5(%arg0: i32) -> (i32, i32) {
    %c0_i32 = arith.constant 0 : i32
    %c0_i32_0 = arith.constant 0 : i32
    %c0_i32_1 = arith.constant 0 : i32
    return %c0_i32, %c0_i32_0 : i32, i32
  }
  func.func @transform_6(%arg0: i32) -> (i32, i32) {
    %c0_i32 = arith.constant 0 : i32
    %c0_i32_0 = arith.constant 0 : i32
    %c0_i32_1 = arith.constant 0 : i32
    return %c0_i32, %c0_i32_0 : i32, i32
  }
  func.func @transform_7(%arg0: i32) -> (i32, i32) {
    %c0_i32 = arith.constant 0 : i32
    %c0_i32_0 = arith.constant 0 : i32
    %c0_i32_1 = arith.constant 0 : i32
    return %c0_i32, %c0_i32_0 : i32, i32
  }
  func.func @transform_8(%arg0: i32) -> (i32, i32) {
    %c0_i32 = arith.constant 0 : i32
    %c0_i32_0 = arith.constant 0 : i32
    %c0_i32_1 = arith.constant 0 : i32
    return %c0_i32, %c0_i32_0 : i32, i32
  }
  func.func @transform_9(%arg0: i32) -> (i32, i32) {
    %c0_i32 = arith.constant 0 : i32
    %c0_i32_0 = arith.constant 0 : i32
    %c0_i32_1 = arith.constant 0 : i32
    return %c0_i32, %c0_i32_0 : i32, i32
  }
  func.func @transform_10(%arg0: i32) -> (i32, i32) {
    %c0_i32 = arith.constant 0 : i32
    %c0_i32_0 = arith.constant 0 : i32
    %c0_i32_1 = arith.constant 0 : i32
    return %c0_i32, %c0_i32_0 : i32, i32
  }
  func.func @transform_11(%arg0: i32) -> (i32, i32, i32) {
    %c0_i32 = arith.constant 0 : i32
    %c0_i32_0 = arith.constant 0 : i32
    %c0_i32_1 = arith.constant 0 : i32
    return %arg0, %c0_i32, %c0_i32_0 : i32, i32, i32
  }
}

</mosaic_0001>

<llo_original>
// kernel: conv_glu_forward.2
$region0: #{conv_glu_forward.2}
  #allocation0 [shape = 'u32[]', space=smem, size = 0x4, offset = 0x4, fixed_abs, tag = 'smem constant byte address 0x4 - core index']
  #allocation1 [shape = 'u32[144,128]{1,0:T(1,128)}', space=vmem, size = 0x12000, scoped, tag = 'internal scratch']
  %s0 = inlined_call_operand.vmem [shape: f32[512,8], index: 0, kind: input, shape index: {}]
  %s1 = inlined_call_operand.vmem [shape: f32[1,8], index: 1, kind: output, shape index: {0}]
  %s2 = inlined_call_operand.vmem [shape: f32[1,8], index: 2, kind: output, shape index: {1}]
  %3 = xla_tuple %s1, %s2
  %s4 = sld [smem:[#allocation0]]
  $region30: #{conv_glu_forward.2} parent=0
    _
  %s6 = ssub.s32 1, %s4
  %s7 = scalar_select 0, %s6, %s4
  // Predicated region
  $region2: #{conv_glu_forward.2} parent=0 // pred_check
    _
  $region3: #{conv_glu_forward.2} parent=0 // pred_check_branch
    %9 = sbr.rel (0) target = $region5
  $region4: #{conv_glu_forward.2} parent=0 // pred_region
    _
  $region5: #{conv_glu_forward.2} parent=0 // pred_fallthru
    _
  %p10 = scmp.eq.s32.totalorder 0, 0
  // Predicated region
  $region6: #{conv_glu_forward.2} parent=0 // pred_check
    %p11 = pneg %p10
  $region7: #{conv_glu_forward.2} parent=0 // pred_check_branch
    %13 = sbr.rel (%p11) target = $region9
  $region8: #{conv_glu_forward.2} parent=0 // pred_region
    %vm14 = vcmask 57344
    %15 = vst.msk [vmem:[%s1] sm:$0x1] %vm14, 0.0
    %16 = vst.msk [vmem:[%s2] sm:$0x1] %vm14, 0.0
  $region9: #{conv_glu_forward.2} parent=0 // pred_fallthru
    _
  %v17 = vld [vmem:[%s0] sm:$0xff]
  %v18 = vld [vmem:[%s0 + $0x8] sm:$0xff]
  %v19 = vld [vmem:[%s0 + $0x10] sm:$0xff]
  %v20 = vld [vmem:[%s0 + $0x18] sm:$0xff]
  %v21 = vld [vmem:[%s0 + $0x20] sm:$0xff]
  %v22 = vld [vmem:[%s0 + $0x28] sm:$0xff]
  %v23 = vld [vmem:[%s0 + $0x30] sm:$0xff]
  %v24 = vld [vmem:[%s0 + $0x38] sm:$0xff]
  %v25 = vld [vmem:[%s0 + $0x40] sm:$0xff]
  %v26 = vld [vmem:[%s0 + $0x48] sm:$0xff]
  %v27 = vld [vmem:[%s0 + $0x50] sm:$0xff]
  %v28 = vld [vmem:[%s0 + $0x58] sm:$0xff]
  %v29 = vld [vmem:[%s0 + $0x60] sm:$0xff]
  %v30 = vld [vmem:[%s0 + $0x68] sm:$0xff]
  %v31 = vld [vmem:[%s0 + $0x70] sm:$0xff]
  %v32 = vld [vmem:[%s0 + $0x78] sm:$0xff]
  %v33 = vld [vmem:[%s0 + $0x80] sm:$0xff]
  %v34 = vld [vmem:[%s0 + $0x88] sm:$0xff]
  %v35 = vld [vmem:[%s0 + $0x90] sm:$0xff]
  %v36 = vld [vmem:[%s0 + $0x98] sm:$0xff]
  %v37 = vld [vmem:[%s0 + $0xa0] sm:$0xff]
  %v38 = vld [vmem:[%s0 + $0xa8] sm:$0xff]
  %v39 = vld [vmem:[%s0 + $0xb0] sm:$0xff]
  %v40 = vld [vmem:[%s0 + $0xb8] sm:$0xff]
  %v41 = vld [vmem:[%s0 + $0xc0] sm:$0xff]
  %v42 = vld [vmem:[%s0 + $0xc8] sm:$0xff]
  %v43 = vld [vmem:[%s0 + $0xd0] sm:$0xff]
  %v44 = vld [vmem:[%s0 + $0xd8] sm:$0xff]
  %v45 = vld [vmem:[%s0 + $0xe0] sm:$0xff]
  %v46 = vld [vmem:[%s0 + $0xe8] sm:$0xff]
  %v47 = vld [vmem:[%s0 + $0xf0] sm:$0xff]
  %v48 = vld [vmem:[%s0 + $0xf8] sm:$0xff]
  %v49 = vld [vmem:[%s0 + $0x100] sm:$0xff]
  %v50 = vld [vmem:[%s0 + $0x108] sm:$0xff]
  %v51 = vld [vmem:[%s0 + $0x110] sm:$0xff]
  %v52 = vld [vmem:[%s0 + $0x118] sm:$0xff]
  %v53 = vld [vmem:[%s0 + $0x120] sm:$0xff]
  %v54 = vld [vmem:[%s0 + $0x128] sm:$0xff]
  %v55 = vld [vmem:[%s0 + $0x130] sm:$0xff]
  %v56 = vld [vmem:[%s0 + $0x138] sm:$0xff]
  %v57 = vld [vmem:[%s0 + $0x140] sm:$0xff]
  %v58 = vld [vmem:[%s0 + $0x148] sm:$0xff]
  %v59 = vld [vmem:[%s0 + $0x150] sm:$0xff]
  %v60 = vld [vmem:[%s0 + $0x158] sm:$0xff]
  %v61 = vld [vmem:[%s0 + $0x160] sm:$0xff]
  %v62 = vld [vmem:[%s0 + $0x168] sm:$0xff]
  %v63 = vld [vmem:[%s0 + $0x170] sm:$0xff]
  %v64 = vld [vmem:[%s0 + $0x178] sm:$0xff]
  %v65 = vld [vmem:[%s0 + $0x180] sm:$0xff]
  %v66 = vld [vmem:[%s0 + $0x188] sm:$0xff]
  %v67 = vld [vmem:[%s0 + $0x190] sm:$0xff]
  %v68 = vld [vmem:[%s0 + $0x198] sm:$0xff]
  %v69 = vld [vmem:[%s0 + $0x1a0] sm:$0xff]
  %v70 = vld [vmem:[%s0 + $0x1a8] sm:$0xff]
  %v71 = vld [vmem:[%s0 + $0x1b0] sm:$0xff]
  %v72 = vld [vmem:[%s0 + $0x1b8] sm:$0xff]
  %v73 = vld [vmem:[%s0 + $0x1c0] sm:$0xff]
  %v74 = vld [vmem:[%s0 + $0x1c8] sm:$0xff]
  %v75 = vld [vmem:[%s0 + $0x1d0] sm:$0xff]
  %v76 = vld [vmem:[%s0 + $0x1d8] sm:$0xff]
  %v77 = vld [vmem:[%s0 + $0x1e0] sm:$0xff]
  %v78 = vld [vmem:[%s0 + $0x1e8] sm:$0xff]
  %v79 = vld [vmem:[%s0 + $0x1f0] sm:$0xff]
  %v80 = vld [vmem:[%s0 + $0x1f8] sm:$0xff]
  %v81 = vld [vmem:[%s1] sm:$0x1]
  %vm82 = vcmask 64512
  %v83 = vsel %vm82, %v17, 0.0
  %v84 = vsel %vm82, %v18, 0.0
  %v85 = vadd.f32 %v83, %v84
  %v86 = vsel %vm82, %v19, 0.0
  %v87 = vadd.f32 %v85, %v86
  %v88 = vsel %vm82, %v20, 0.0
  %v89 = vadd.f32 %v87, %v88
  %v90 = vsel %vm82, %v21, 0.0
  %v91 = vadd.f32 %v89, %v90
  %v92 = vsel %vm82, %v22, 0.0
  %v93 = vadd.f32 %v91, %v92
  %v94 = vsel %vm82, %v23, 0.0
  %v95 = vadd.f32 %v93, %v94
  %v96 = vsel %vm82, %v24, 0.0
  %v97 = vadd.f32 %v95, %v96
  %v98 = vsel %vm82, %v25, 0.0
  %v99 = vadd.f32 %v97, %v98
  %v100 = vsel %vm82, %v26, 0.0
  %v101 = vadd.f32 %v99, %v100
  %v102 = vsel %vm82, %v27, 0.0
  %v103 = vadd.f32 %v101, %v102
  %v104 = vsel %vm82, %v28, 0.0
  %v105 = vadd.f32 %v103, %v104
  %v106 = vsel %vm82, %v29, 0.0
  %v107 = vadd.f32 %v105, %v106
  %v108 = vsel %vm82, %v30, 0.0
  %v109 = vadd.f32 %v107, %v108
  %v110 = vsel %vm82, %v31, 0.0
  %v111 = vadd.f32 %v109, %v110
  %v112 = vsel %vm82, %v32, 0.0
  %v113 = vadd.f32 %v111, %v112
  %v114 = vsel %vm82, %v33, 0.0
  %v115 = vadd.f32 %v113, %v114
  %v116 = vsel %vm82, %v34, 0.0
  %v117 = vadd.f32 %v115, %v116
  %v118 = vsel %vm82, %v35, 0.0
  %v119 = vadd.f32 %v117, %v118
  %v120 = vsel %vm82, %v36, 0.0
  %v121 = vadd.f32 %v119, %v120
  %v122 = vsel %vm82, %v37, 0.0
  %v123 = vadd.f32 %v121, %v122
  %v124 = vsel %vm82, %v38, 0.0
  %v125 = vadd.f32 %v123, %v124
  %v126 = vsel %vm82, %v39, 0.0
  %v127 = vadd.f32 %v125, %v126
  %v128 = vsel %vm82, %v40, 0.0
  %v129 = vadd.f32 %v127, %v128
  %v130 = vsel %vm82, %v41, 0.0
  %v131 = vadd.f32 %v129, %v130
  %v132 = vsel %vm82, %v42, 0.0
  %v133 = vadd.f32 %v131, %v132
  %v134 = vsel %vm82, %v43, 0.0
  %v135 = vadd.f32 %v133, %v134
  %v136 = vsel %vm82, %v44, 0.0
  %v137 = vadd.f32 %v135, %v136
  %v138 = vsel %vm82, %v45, 0.0
  %v139 = vadd.f32 %v137, %v138
  %v140 = vsel %vm82, %v46, 0.0
  %v141 = vadd.f32 %v139, %v140
  %v142 = vsel %vm82, %v47, 0.0
  %v143 = vadd.f32 %v141, %v142
  %v144 = vsel %vm82, %v48, 0.0
  %v145 = vadd.f32 %v143, %v144
  %v146 = vsel %vm82, %v49, 0.0
  %v147 = vadd.f32 %v145, %v146
  %v148 = vsel %vm82, %v50, 0.0
  %v149 = vadd.f32 %v147, %v148
  %v150 = vsel %vm82, %v51, 0.0
  %v151 = vadd.f32 %v149, %v150
  %v152 = vsel %vm82, %v52, 0.0
  %v153 = vadd.f32 %v151, %v152
  %v154 = vsel %vm82, %v53, 0.0
  %v155 = vadd.f32 %v153, %v154
  %v156 = vsel %vm82, %v54, 0.0
  %v157 = vadd.f32 %v155, %v156
  %v158 = vsel %vm82, %v55, 0.0
  %v159 = vadd.f32 %v157, %v158
  %v160 = vsel %vm82, %v56, 0.0
  %v161 = vadd.f32 %v159, %v160
  %v162 = vsel %vm82, %v57, 0.0
  %v163 = vadd.f32 %v161, %v162
  %v164 = vsel %vm82, %v58, 0.0
  %v165 = vadd.f32 %v163, %v164
  %v166 = vsel %vm82, %v59, 0.0
  %v167 = vadd.f32 %v165, %v166
  %v168 = vsel %vm82, %v60, 0.0
  %v169 = vadd.f32 %v167, %v168
  %v170 = vsel %vm82, %v61, 0.0
  %v171 = vadd.f32 %v169, %v170
  %v172 = vsel %vm82, %v62, 0.0
  %v173 = vadd.f32 %v171, %v172
  %v174 = vsel %vm82, %v63, 0.0
  %v175 = vadd.f32 %v173, %v174
  %v176 = vsel %vm82, %v64, 0.0
  %v177 = vadd.f32 %v175, %v176
  %v178 = vsel %vm82, %v65, 0.0
  %v179 = vadd.f32 %v177, %v178
  %v180 = vsel %vm82, %v66, 0.0
  %v181 = vadd.f32 %v179, %v180
  %v182 = vsel %vm82, %v67, 0.0
  %v183 = vadd.f32 %v181, %v182
  %v184 = vsel %vm82, %v68, 0.0
  %v185 = vadd.f32 %v183, %v184
  %v186 = vsel %vm82, %v69, 0.0
  %v187 = vadd.f32 %v185, %v186
  %v188 = vsel %vm82, %v70, 0.0
  %v189 = vadd.f32 %v187, %v188
  %v190 = vsel %vm82, %v71, 0.0
  %v191 = vadd.f32 %v189, %v190
  %v192 = vsel %vm82, %v72, 0.0
  %v193 = vadd.f32 %v191, %v192
  %v194 = vsel %vm82, %v73, 0.0
  %v195 = vadd.f32 %v193, %v194
  %v196 = vsel %vm82, %v74, 0.0
  %v197 = vadd.f32 %v195, %v196
  %v198 = vsel %vm82, %v75, 0.0
  %v199 = vadd.f32 %v197, %v198
  %v200 = vsel %vm82, %v76, 0.0
  %v201 = vadd.f32 %v199, %v200
  %v202 = vsel %vm82, %v77, 0.0
  %v203 = vadd.f32 %v201, %v202
  %v204 = vsel %vm82, %v78, 0.0
  %v205 = vadd.f32 %v203, %v204
  %v206 = vsel %vm82, %v79, 0.0
  %v207 = vadd.f32 %v205, %v206
  %v208 = vsel %vm82, %v80, 0.0
  %v209 = vadd.f32 %v207, %v208
  %v210 = vrot.slane %v209, 4
  %v211 = vadd.f32 %v209, %v210
  %v212 = vrot.slane %v211, 2
  %v213 = vadd.f32 %v211, %v212
  %v214 = vrot.slane %v213, 1
  %v215 = vadd.f32 %v213, %v214
  %v216 = vmul.f32 %v215, 0.001953125
  %v217 = vadd.f32 %v81, %v216
  %vm218 = vcmask 57344
  %219 = vst.msk [vmem:[%s1] sm:$0x1] %vm218, %v217
  %v220 = vld [vmem:[%s2] sm:$0x1]
  %v221 = vmul.f32 %v17, %v17
  %v222 = vmul.f32 %v18, %v18
  %v223 = vmul.f32 %v19, %v19
  %v224 = vmul.f32 %v20, %v20
  %v225 = vmul.f32 %v21, %v21
  %v226 = vmul.f32 %v22, %v22
  %v227 = vmul.f32 %v23, %v23
  %v228 = vmul.f32 %v24, %v24
  %v229 = vmul.f32 %v25, %v25
  %v230 = vmul.f32 %v26, %v26
  %v231 = vmul.f32 %v27, %v27
  %v232 = vmul.f32 %v28, %v28
  %v233 = vmul.f32 %v29, %v29
  %v234 = vmul.f32 %v30, %v30
  %v235 = vmul.f32 %v31, %v31
  %v236 = vmul.f32 %v32, %v32
  %v237 = vmul.f32 %v33, %v33
  %v238 = vmul.f32 %v34, %v34
  %v239 = vmul.f32 %v35, %v35
  %v240 = vmul.f32 %v36, %v36
  %v241 = vmul.f32 %v37, %v37
  %v242 = vmul.f32 %v38, %v38
  %v243 = vmul.f32 %v39, %v39
  %v244 = vmul.f32 %v40, %v40
  %v245 = vmul.f32 %v41, %v41
  %v246 = vmul.f32 %v42, %v42
  %v247 = vmul.f32 %v43, %v43
  %v248 = vmul.f32 %v44, %v44
  %v249 = vmul.f32 %v45, %v45
  %v250 = vmul.f32 %v46, %v46
  %v251 = vmul.f32 %v47, %v47
  %v252 = vmul.f32 %v48, %v48
  %v253 = vmul.f32 %v49, %v49
  %v254 = vmul.f32 %v50, %v50
  %v255 = vmul.f32 %v51, %v51
  %v256 = vmul.f32 %v52, %v52
  %v257 = vmul.f32 %v53, %v53
  %v258 = vmul.f32 %v54, %v54
  %v259 = vmul.f32 %v55, %v55
  %v260 = vmul.f32 %v56, %v56
  %v261 = vmul.f32 %v57, %v57
  %v262 = vmul.f32 %v58, %v58
  %v263 = vmul.f32 %v59, %v59
  %v264 = vmul.f32 %v60, %v60
  %v265 = vmul.f32 %v61, %v61
  %v266 = vmul.f32 %v62, %v62
  %v267 = vmul.f32 %v63, %v63
  %v268 = vmul.f32 %v64, %v64
  %v269 = vmul.f32 %v65, %v65
  %v270 = vmul.f32 %v66, %v66
  %v271 = vmul.f32 %v67, %v67
  %v272 = vmul.f32 %v68, %v68
  %v273 = vmul.f32 %v69, %v69
  %v274 = vmul.f32 %v70, %v70
  %v275 = vmul.f32 %v71, %v71
  %v276 = vmul.f32 %v72, %v72
  %v277 = vmul.f32 %v73, %v73
  %v278 = vmul.f32 %v74, %v74
  %v279 = vmul.f32 %v75, %v75
  %v280 = vmul.f32 %v76, %v76
  %v281 = vmul.f32 %v77, %v77
  %v282 = vmul.f32 %v78, %v78
  %v283 = vmul.f32 %v79, %v79
  %v284 = vmul.f32 %v80, %v80
  %v285 = vsel %vm82, %v221, 0.0
  %v286 = vsel %vm82, %v222, 0.0
  %v287 = vadd.f32 %v285, %v286
  %v288 = vsel %vm82, %v223, 0.0
  %v289 = vadd.f32 %v287, %v288
  %v290 = vsel %vm82, %v224, 0.0
  %v291 = vadd.f32 %v289, %v290
  %v292 = vsel %vm82, %v225, 0.0
  %v293 = vadd.f32 %v291, %v292
  %v294 = vsel %vm82, %v226, 0.0
  %v295 = vadd.f32 %v293, %v294
  %v296 = vsel %vm82, %v227, 0.0
  %v297 = vadd.f32 %v295, %v296
  %v298 = vsel %vm82, %v228, 0.0
  %v299 = vadd.f32 %v297, %v298
  %v300 = vsel %vm82, %v229, 0.0
  %v301 = vadd.f32 %v299, %v300
  %v302 = vsel %vm82, %v230, 0.0
  %v303 = vadd.f32 %v301, %v302
  %v304 = vsel %vm82, %v231, 0.0
  %v305 = vadd.f32 %v303, %v304
  %v306 = vsel %vm82, %v232, 0.0
  %v307 = vadd.f32 %v305, %v306
  %v308 = vsel %vm82, %v233, 0.0
  %v309 = vadd.f32 %v307, %v308
  %v310 = vsel %vm82, %v234, 0.0
  %v311 = vadd.f32 %v309, %v310
  %v312 = vsel %vm82, %v235, 0.0
  %v313 = vadd.f32 %v311, %v312
  %v314 = vsel %vm82, %v236, 0.0
  %v315 = vadd.f32 %v313, %v314
  %v316 = vsel %vm82, %v237, 0.0
  %v317 = vadd.f32 %v315, %v316
  %v318 = vsel %vm82, %v238, 0.0
  %v319 = vadd.f32 %v317, %v318
  %v320 = vsel %vm82, %v239, 0.0
  %v321 = vadd.f32 %v319, %v320
  %v322 = vsel %vm82, %v240, 0.0
  %v323 = vadd.f32 %v321, %v322
  %v324 = vsel %vm82, %v241, 0.0
  %v325 = vadd.f32 %v323, %v324
  %v326 = vsel %vm82, %v242, 0.0
  %v327 = vadd.f32 %v325, %v326
  %v328 = vsel %vm82, %v243, 0.0
  %v329 = vadd.f32 %v327, %v328
  %v330 = vsel %vm82, %v244, 0.0
  %v331 = vadd.f32 %v329, %v330
  %v332 = vsel %vm82, %v245, 0.0
  %v333 = vadd.f32 %v331, %v332
  %v334 = vsel %vm82, %v246, 0.0
  %v335 = vadd.f32 %v333, %v334
  %v336 = vsel %vm82, %v247, 0.0
  %v337 = vadd.f32 %v335, %v336
  %v338 = vsel %vm82, %v248, 0.0
  %v339 = vadd.f32 %v337, %v338
  %v340 = vsel %vm82, %v249, 0.0
  %v341 = vadd.f32 %v339, %v340
  %v342 = vsel %vm82, %v250, 0.0
  %v343 = vadd.f32 %v341, %v342
  %v344 = vsel %vm82, %v251, 0.0
  %v345 = vadd.f32 %v343, %v344
  %v346 = vsel %vm82, %v252, 0.0
  %v347 = vadd.f32 %v345, %v346
  %v348 = vsel %vm82, %v253, 0.0
  %v349 = vadd.f32 %v347, %v348
  %v350 = vsel %vm82, %v254, 0.0
  %v351 = vadd.f32 %v349, %v350
  %v352 = vsel %vm82, %v255, 0.0
  %v353 = vadd.f32 %v351, %v352
  %v354 = vsel %vm82, %v256, 0.0
  %v355 = vadd.f32 %v353, %v354
  %v356 = vsel %vm82, %v257, 0.0
  %v357 = vadd.f32 %v355, %v356
  %v358 = vsel %vm82, %v258, 0.0
  %v359 = vadd.f32 %v357, %v358
  %v360 = vsel %vm82, %v259, 0.0
  %v361 = vadd.f32 %v359, %v360
  %v362 = vsel %vm82, %v260, 0.0
  %v363 = vadd.f32 %v361, %v362
  %v364 = vsel %vm82, %v261, 0.0
  %v365 = vadd.f32 %v363, %v364
  %v366 = vsel %vm82, %v262, 0.0
  %v367 = vadd.f32 %v365, %v366
  %v368 = vsel %vm82, %v263, 0.0
  %v369 = vadd.f32 %v367, %v368
  %v370 = vsel %vm82, %v264, 0.0
  %v371 = vadd.f32 %v369, %v370
  %v372 = vsel %vm82, %v265, 0.0
  %v373 = vadd.f32 %v371, %v372
  %v374 = vsel %vm82, %v266, 0.0
  %v375 = vadd.f32 %v373, %v374
  %v376 = vsel %vm82, %v267, 0.0
  %v377 = vadd.f32 %v375, %v376
  %v378 = vsel %vm82, %v268, 0.0
  %v379 = vadd.f32 %v377, %v378
  %v380 = vsel %vm82, %v269, 0.0
  %v381 = vadd.f32 %v379, %v380
  %v382 = vsel %vm82, %v270, 0.0
  %v383 = vadd.f32 %v381, %v382
  %v384 = vsel %vm82, %v271, 0.0
  %v385 = vadd.f32 %v383, %v384
  %v386 = vsel %vm82, %v272, 0.0
  %v387 = vadd.f32 %v385, %v386
  %v388 = vsel %vm82, %v273, 0.0
  %v389 = vadd.f32 %v387, %v388
  %v390 = vsel %vm82, %v274, 0.0
  %v391 = vadd.f32 %v389, %v390
  %v392 = vsel %vm82, %v275, 0.0
  %v393 = vadd.f32 %v391, %v392
  %v394 = vsel %vm82, %v276, 0.0
  %v395 = vadd.f32 %v393, %v394
  %v396 = vsel %vm82, %v277, 0.0
  %v397 = vadd.f32 %v395, %v396
  %v398 = vsel %vm82, %v278, 0.0
  %v399 = vadd.f32 %v397, %v398
  %v400 = vsel %vm82, %v279, 0.0
  %v401 = vadd.f32 %v399, %v400
  %v402 = vsel %vm82, %v280, 0.0
  %v403 = vadd.f32 %v401, %v402
  %v404 = vsel %vm82, %v281, 0.0
  %v405 = vadd.f32 %v403, %v404
  %v406 = vsel %vm82, %v282, 0.0
  %v407 = vadd.f32 %v405, %v406
  %v408 = vsel %vm82, %v283, 0.0
  %v409 = vadd.f32 %v407, %v408
  %v410 = vsel %vm82, %v284, 0.0
  %v411 = vadd.f32 %v409, %v410
  %v412 = vrot.slane %v411, 4
  %v413 = vadd.f32 %v411, %v412
  %v414 = vrot.slane %v413, 2
  %v415 = vadd.f32 %v413, %v414
  %v416 = vrot.slane %v415, 1
  %v417 = vadd.f32 %v415, %v416
  %v418 = vmul.f32 %v417, 0.001953125
  %v419 = vadd.f32 %v220, %v418
  %420 = vst.msk [vmem:[%s2] sm:$0x1] %vm218, %v419
  // Predicated region
  $region10: #{conv_glu_forward.2} parent=0 // pred_check
    %p421 = pneg %p10
  $region11: #{conv_glu_forward.2} parent=0 // pred_check_branch
    %423 = sbr.rel (%p421) target = $region13
  $region12: #{conv_glu_forward.2} parent=0 // pred_region
    %v424 = vld [vmem:[%s1] sm:$0x1]
    %v425 = vld [vmem:[%s2] sm:$0x1]
    %v426 = vmul.f32 %v424, %v424
    %v427 = vsub.f32 %v425, %v426
    %428 = vst.msk [vmem:[%s2] sm:$0x1] %vm218, %v427
  $region13: #{conv_glu_forward.2} parent=0 // pred_fallthru
    _
  // Predicated region
  $region14: #{conv_glu_forward.2} parent=0 // pred_check
    _
  $region15: #{conv_glu_forward.2} parent=0 // pred_check_branch
    %430 = sbr.rel (0) target = $region17
  $region16: #{conv_glu_forward.2} parent=0 // pred_region
    _
  $region17: #{conv_glu_forward.2} parent=0 // pred_fallthru
    _
  // Predicated region
  $region18: #{conv_glu_forward.2} parent=0 // pred_check
    _
  $region19: #{conv_glu_forward.2} parent=0 // pred_check_branch
    %432 = sbr.rel (0) target = $region21
  $region20: #{conv_glu_forward.2} parent=0 // pred_region
    _
  $region21: #{conv_glu_forward.2} parent=0 // pred_fallthru
    _
  // Predicated region
  $region22: #{conv_glu_forward.2} parent=0 // pred_check
    _
  $region23: #{conv_glu_forward.2} parent=0 // pred_check_branch
    %434 = sbr.rel (0) target = $region25
  $region24: #{conv_glu_forward.2} parent=0 // pred_region
    _
  $region25: #{conv_glu_forward.2} parent=0 // pred_fallthru
    _
  // Predicated region
  $region26: #{conv_glu_forward.2} parent=0 // pred_check
    _
  $region27: #{conv_glu_forward.2} parent=0 // pred_check_branch
    %436 = sbr.rel (0) target = $region29
  $region28: #{conv_glu_forward.2} parent=0 // pred_region
    _
  $region29: #{conv_glu_forward.2} parent=0 // pred_fallthru
    _

// kernel: conv_glu_forward.3
$region0: #{conv_glu_forward.3}
  #allocation0 [shape = 'u32[]', space=smem, size = 0x4, offset = 0x4, fixed_abs, tag = 'smem constant byte address 0x4 - core index']
  #allocation1 [shape = 'u32[144,128]{1,0:T(1,128)}', space=vmem, size = 0x12000, scoped, tag = 'internal scratch']
  #allocation2 [shape = 'f32[324,8]{1,0:T(8,128)}', space=vmem, size = 0x29000, scoped, tag = 'scratch operand']
  %s0 = inlined_call_operand.vmem [shape: f32[2,324,16], index: 0, kind: input, shape index: {}]
  %s1 = inlined_call_operand.vmem [shape: f32[324,1], index: 1, kind: input, shape index: {}]
  %s2 = inlined_call_operand.vmem [shape: f32[2,1,8], index: 2, kind: input, shape index: {}]
  %s3 = inlined_call_operand.vmem [shape: f32[1,8], index: 3, kind: input, shape index: {}]
  %s4 = inlined_call_operand.vmem [shape: f32[1,8], index: 4, kind: input, shape index: {}]
  %s5 = inlined_call_operand.vmem [shape: f32[1,8], index: 5, kind: input, shape index: {}]
  %s6 = inlined_call_operand.vmem [shape: f32[1,8], index: 6, kind: input, shape index: {}]
  %s7 = inlined_call_operand.vmem [shape: f32[72,8], index: 7, kind: input, shape index: {}]
  %s8 = inlined_call_operand.vmem [shape: f32[1,8], index: 8, kind: input, shape index: {}]
  %s9 = inlined_call_operand.vmem [shape: f32[4,16], index: 9, kind: input, shape index: {}]
  %s10 = inlined_call_operand.vmem [shape: f32[1,16], index: 10, kind: input, shape index: {}]
  %s11 = inlined_call_operand.vmem [shape: f32[2,286,16], index: 11, kind: output, shape index: {}]
  %s12 = sld [smem:[#allocation0]]
  $region77: #{conv_glu_forward.3} parent=0
    _
  %s14 = ssub.s32 1, %s12
  %s15 = scalar_select 0, %s14, %s12
  loop: start=0, step=1, limit=4
  $region2: #{conv_glu_forward.3} parent=0 // loop_pre_header
    _
  $region3: #{conv_glu_forward.3} parent=0 // loop_header
    %s17 = sphi 0, %s21
    %p18 = scmp.ge.s32.totalorder %s17, 4
    %s27 = sphi 0, %s29
    %s30 = sphi 0, %s27
    %s31 = sphi 0, %s30
    %s47 = sphi 0, %s31
    %s51 = sphi 0, %s51
    %s53 = sphi 0, %s51
    %s54 = sphi 0, %s53
    %s68 = sphi 0, %s54
    %s74 = sphi 0, %s76
    %s77 = sphi 0, %s74
    %s78 = sphi 0, %s77
    %s94 = sphi 0, %s78
    %s98 = sphi 0, %s98
    %s100 = sphi 0, %s98
    %s101 = sphi 0, %s100
    %s115 = sphi 0, %s101
    %s119 = sphi 0, %s119
    %s121 = sphi 0, %s119
    %s122 = sphi 0, %s121
    %s136 = sphi 0, %s122
    %s140 = sphi 0, %s140
    %s142 = sphi 0, %s140
    %s143 = sphi 0, %s142
    %s157 = sphi 0, %s143
    %s161 = sphi 0, %s161
    %s163 = sphi 0, %s161
    %s164 = sphi 0, %s163
    %s178 = sphi 0, %s164
    %s182 = sphi 0, %s182
    %s184 = sphi 0, %s182
    %s185 = sphi 0, %s184
    %s199 = sphi 0, %s185
    %s203 = sphi 0, %s203
    %s205 = sphi 0, %s203
    %s206 = sphi 0, %s205
    %s220 = sphi 0, %s206
    %s224 = sphi 0, %s224
    %s226 = sphi 0, %s224
    %s227 = sphi 0, %s226
    %s241 = sphi 0, %s227
    %s245 = sphi 0, %s245
    %s247 = sphi 0, %s245
    %s248 = sphi 0, %s247
    %s262 = sphi 0, %s248
    %s268 = sphi 0, %s270
    %s271 = sphi 0, %s268
    %s272 = sphi 0, %s271
    %s288 = sphi 0, %s272
  $region4: #{conv_glu_forward.3} parent=0 // loop_header_branch
    %20 = sbr.rel (%p18) target = $region8
  $region5: #{conv_glu_forward.3} parent=0 // loop_body
    %s22 = ssub.s32 %s17, 1
    %s23 = ssub.s32 %s17, 2
    %s24 = sadd.s32 %s17, 1
    %s25 = ssub.s32 %s17, %s24
    %p26 = scmp.eq.s32.totalorder %s25, 0
    %s28 = sadd.s32 %s27, 1
    %s29 = scalar_select %p26, %s27, %s28
    %p32 = pneg %p26
    %p33 = scmp.eq.s32.totalorder %s17, 1
    %p34 = por %p32, %p33
    %p35 = scmp.ne.s32.totalorder %s27, %s30
    %p36 = scmp.eq.s32.totalorder %s17, 0
    %p37 = por %p35, %p36
    %p38 = scmp.ne.s32.totalorder %s27, %s30
    %p39 = scmp.eq.s32.totalorder %s22, 1
    %p40 = por %p38, %p39
    %p41 = scmp.ne.s32.totalorder %s30, %s31
    %p42 = scmp.eq.s32.totalorder %s22, 0
    %p43 = por %p41, %p42
    %p44 = scmp.ne.s32.totalorder %s30, %s31
    %p45 = scmp.eq.s32.totalorder %s23, 1
    %p46 = por %p44, %p45
    %p48 = scmp.ne.s32.totalorder %s31, %s47
    %p49 = scmp.eq.s32.totalorder %s23, 0
    %p50 = por %p48, %p49
    %s52 = sadd.s32 %s51, 1
    %p55 = scmp.eq.s32.totalorder %s17, 1
    %p56 = scmp.ne.s32.totalorder %s51, %s53
    %p57 = scmp.eq.s32.totalorder %s17, 0
    %p58 = por %p56, %p57
    %p59 = scmp.ne.s32.totalorder %s51, %s53
    %p60 = scmp.eq.s32.totalorder %s22, 1
    %p61 = por %p59, %p60
    %p62 = scmp.ne.s32.totalorder %s53, %s54
    %p63 = scmp.eq.s32.totalorder %s22, 0
    %p64 = por %p62, %p63
    %p65 = scmp.ne.s32.totalorder %s53, %s54
    %p66 = scmp.eq.s32.totalorder %s23, 1
    %p67 = por %p65, %p66
    %p69 = scmp.ne.s32.totalorder %s54, %s68
    %p70 = scmp.eq.s32.totalorder %s23, 0
    %p71 = por %p69, %p70
    %s72 = ssub.s32 %s17, %s24
    %p73 = scmp.eq.s32.totalorder %s72, 0
    %s75 = sadd.s32 %s74, 1
    %s76 = scalar_select %p73, %s74, %s75
    %p79 = pneg %p73
    %p80 = scmp.eq.s32.totalorder %s17, 1
    %p81 = por %p79, %p80
    %p82 = scmp.ne.s32.totalorder %s74, %s77
    %p83 = scmp.eq.s32.totalorder %s17, 0
    %p84 = por %p82, %p83
    %p85 = scmp.ne.s32.totalorder %s74, %s77
    %p86 = scmp.eq.s32.totalorder %s22, 1
    %p87 = por %p85, %p86
    %p88 = scmp.ne.s32.totalorder %s77, %s78
    %p89 = scmp.eq.s32.totalorder %s22, 0
    %p90 = por %p88, %p89
    %p91 = scmp.ne.s32.totalorder %s77, %s78
    %p92 = scmp.eq.s32.totalorder %s23, 1
    %p93 = por %p91, %p92
    %p95 = scmp.ne.s32.totalorder %s78, %s94
    %p96 = scmp.eq.s32.totalorder %s23, 0
    %p97 = por %p95, %p96
    %s99 = sadd.s32 %s98, 1
    %p102 = scmp.eq.s32.totalorder %s17, 1
    %p103 = scmp.ne.s32.totalorder %s98, %s100
    %p104 = scmp.eq.s32.totalorder %s17, 0
    %p105 = por %p103, %p104
    %p106 = scmp.ne.s32.totalorder %s98, %s100
    %p107 = scmp.eq.s32.totalorder %s22, 1
    %p108 = por %p106, %p107
    %p109 = scmp.ne.s32.totalorder %s100, %s101
    %p110 = scmp.eq.s32.totalorder %s22, 0
    %p111 = por %p109, %p110
    %p112 = scmp.ne.s32.totalorder %s100, %s101
    %p113 = scmp.eq.s32.totalorder %s23, 1
    %p114 = por %p112, %p113
    %p116 = scmp.ne.s32.totalorder %s101, %s115
    %p117 = scmp.eq.s32.totalorder %s23, 0
    %p118 = por %p116, %p117
    %s120 = sadd.s32 %s119, 1
    %p123 = scmp.eq.s32.totalorder %s17, 1
    %p124 = scmp.ne.s32.totalorder %s119, %s121
    %p125 = scmp.eq.s32.totalorder %s17, 0
    %p126 = por %p124, %p125
    %p127 = scmp.ne.s32.totalorder %s119, %s121
    %p128 = scmp.eq.s32.totalorder %s22, 1
    %p129 = por %p127, %p128
    %p130 = scmp.ne.s32.totalorder %s121, %s122
    %p131 = scmp.eq.s32.totalorder %s22, 0
    %p132 = por %p130, %p131
    %p133 = scmp.ne.s32.totalorder %s121, %s122
    %p134 = scmp.eq.s32.totalorder %s23, 1
    %p135 = por %p133, %p134
    %p137 = scmp.ne.s32.totalorder %s122, %s136
    %p138 = scmp.eq.s32.totalorder %s23, 0
    %p139 = por %p137, %p138
    %s141 = sadd.s32 %s140, 1
    %p144 = scmp.eq.s32.totalorder %s17, 1
    %p145 = scmp.ne.s32.totalorder %s140, %s142
    %p146 = scmp.eq.s32.totalorder %s17, 0
    %p147 = por %p145, %p146
    %p148 = scmp.ne.s32.totalorder %s140, %s142
    %p149 = scmp.eq.s32.totalorder %s22, 1
    %p150 = por %p148, %p149
    %p151 = scmp.ne.s32.totalorder %s142, %s143
    %p152 = scmp.eq.s32.totalorder %s22, 0
    %p153 = por %p151, %p152
    %p154 = scmp.ne.s32.totalorder %s142, %s143
    %p155 = scmp.eq.s32.totalorder %s23, 1
    %p156 = por %p154, %p155
    %p158 = scmp.ne.s32.totalorder %s143, %s157
    %p159 = scmp.eq.s32.totalorder %s23, 0
    %p160 = por %p158, %p159
    %s162 = sadd.s32 %s161, 1
    %p165 = scmp.eq.s32.totalorder %s17, 1
    %p166 = scmp.ne.s32.totalorder %s161, %s163
    %p167 = scmp.eq.s32.totalorder %s17, 0
    %p168 = por %p166, %p167
    %p169 = scmp.ne.s32.totalorder %s161, %s163
    %p170 = scmp.eq.s32.totalorder %s22, 1
    %p171 = por %p169, %p170
    %p172 = scmp.ne.s32.totalorder %s163, %s164
    %p173 = scmp.eq.s32.totalorder %s22, 0
    %p174 = por %p172, %p173
    %p175 = scmp.ne.s32.totalorder %s163, %s164
    %p176 = scmp.eq.s32.totalorder %s23, 1
    %p177 = por %p175, %p176
    %p179 = scmp.ne.s32.totalorder %s164, %s178
    %p180 = scmp.eq.s32.totalorder %s23, 0
    %p181 = por %p179, %p180
    %s183 = sadd.s32 %s182, 1
    %p186 = scmp.eq.s32.totalorder %s17, 1
    %p187 = scmp.ne.s32.totalorder %s182, %s184
    %p188 = scmp.eq.s32.totalorder %s17, 0
    %p189 = por %p187, %p188
    %p190 = scmp.ne.s32.totalorder %s182, %s184
    %p191 = scmp.eq.s32.totalorder %s22, 1
    %p192 = por %p190, %p191
    %p193 = scmp.ne.s32.totalorder %s184, %s185
    %p194 = scmp.eq.s32.totalorder %s22, 0
    %p195 = por %p193, %p194
    %p196 = scmp.ne.s32.totalorder %s184, %s185
    %p197 = scmp.eq.s32.totalorder %s23, 1
    %p198 = por %p196, %p197
    %p200 = scmp.ne.s32.totalorder %s185, %s199
    %p201 = scmp.eq.s32.totalorder %s23, 0
    %p202 = por %p200, %p201
    %s204 = sadd.s32 %s203, 1
    %p207 = scmp.eq.s32.totalorder %s17, 1
    %p208 = scmp.ne.s32.totalorder %s203, %s205
    %p209 = scmp.eq.s32.totalorder %s17, 0
    %p210 = por %p208, %p209
    %p211 = scmp.ne.s32.totalorder %s203, %s205
    %p212 = scmp.eq.s32.totalorder %s22, 1
    %p213 = por %p211, %p212
    %p214 = scmp.ne.s32.totalorder %s205, %s206
    %p215 = scmp.eq.s32.totalorder %s22, 0
    %p216 = por %p214, %p215
    %p217 = scmp.ne.s32.totalorder %s205, %s206
    %p218 = scmp.eq.s32.totalorder %s23, 1
    %p219 = por %p217, %p218
    %p221 = scmp.ne.s32.totalorder %s206, %s220
    %p222 = scmp.eq.s32.totalorder %s23, 0
    %p223 = por %p221, %p222
    %s225 = sadd.s32 %s224, 1
    %p228 = scmp.eq.s32.totalorder %s17, 1
    %p229 = scmp.ne.s32.totalorder %s224, %s226
    %p230 = scmp.eq.s32.totalorder %s17, 0
    %p231 = por %p229, %p230
    %p232 = scmp.ne.s32.totalorder %s224, %s226
    %p233 = scmp.eq.s32.totalorder %s22, 1
    %p234 = por %p232, %p233
    %p235 = scmp.ne.s32.totalorder %s226, %s227
    %p236 = scmp.eq.s32.totalorder %s22, 0
    %p237 = por %p235, %p236
    %p238 = scmp.ne.s32.totalorder %s226, %s227
    %p239 = scmp.eq.s32.totalorder %s23, 1
    %p240 = por %p238, %p239
    %p242 = scmp.ne.s32.totalorder %s227, %s241
    %p243 = scmp.eq.s32.totalorder %s23, 0
    %p244 = por %p242, %p243
    %s246 = sadd.s32 %s245, 1
    %p249 = scmp.eq.s32.totalorder %s17, 1
    %p250 = scmp.ne.s32.totalorder %s245, %s247
    %p251 = scmp.eq.s32.totalorder %s17, 0
    %p252 = por %p250, %p251
    %p253 = scmp.ne.s32.totalorder %s245, %s247
    %p254 = scmp.eq.s32.totalorder %s22, 1
    %p255 = por %p253, %p254
    %p256 = scmp.ne.s32.totalorder %s247, %s248
    %p257 = scmp.eq.s32.totalorder %s22, 0
    %p258 = por %p256, %p257
    %p259 = scmp.ne.s32.totalorder %s247, %s248
    %p260 = scmp.eq.s32.totalorder %s23, 1
    %p261 = por %p259, %p260
    %p263 = scmp.ne.s32.totalorder %s248, %s262
    %p264 = scmp.eq.s32.totalorder %s23, 0
    %p265 = por %p263, %p264
    %s266 = ssub.s32 %s17, %s24
    %p267 = scmp.eq.s32.totalorder %s266, 0
    %s269 = sadd.s32 %s268, 1
    %s270 = scalar_select %p267, %s268, %s269
    %p273 = pneg %p267
    %p274 = scmp.eq.s32.totalorder %s17, 1
    %p275 = por %p273, %p274
    %p276 = scmp.ne.s32.totalorder %s268, %s271
    %p277 = scmp.eq.s32.totalorder %s17, 0
    %p278 = por %p276, %p277
    %p279 = scmp.ne.s32.totalorder %s268, %s271
    %p280 = scmp.eq.s32.totalorder %s22, 1
    %p281 = por %p279, %p280
    %p282 = scmp.ne.s32.totalorder %s271, %s272
    %p283 = scmp.eq.s32.totalorder %s22, 0
    %p284 = por %p282, %p283
    %p285 = scmp.ne.s32.totalorder %s271, %s272
    %p286 = scmp.eq.s32.totalorder %s23, 1
    %p287 = por %p285, %p286
    %p289 = scmp.ne.s32.totalorder %s272, %s288
    %p290 = scmp.eq.s32.totalorder %s23, 0
    %p291 = por %p289, %p290
    %p292 = scmp.le.s32.totalorder 1, %s17
    %p293 = scmp.lt.s32.totalorder %s17, 3
    %p294 = pnand %p292, %p293
    %p295 = pneg %p294
    // Predicated region
    $region9: #{conv_glu_forward.3} parent=5 // pred_check
      _
    $region10: #{conv_glu_forward.3} parent=5 // pred_check_branch
      %297 = sbr.rel (%p294) target = $region12
    $region11: #{conv_glu_forward.3} parent=5 // pred_region
      %s298 = ssub.s32 %s17, 1
      // Predicated region
      $region13: #{conv_glu_forward.3} parent=11 // pred_check
        %p299 = pneg %p64
      $region14: #{conv_glu_forward.3} parent=11 // pred_check_branch
        %301 = sbr.rel (%p299) target = $region16
      $region15: #{conv_glu_forward.3} parent=11 // pred_region
        _
      $region16: #{conv_glu_forward.3} parent=11 // pred_fallthru
        _
      // Predicated region
      $region17: #{conv_glu_forward.3} parent=11 // pred_check
        %p302 = pneg %p111
      $region18: #{conv_glu_forward.3} parent=11 // pred_check_branch
        %304 = sbr.rel (%p302) target = $region20
      $region19: #{conv_glu_forward.3} parent=11 // pred_region
        _
      $region20: #{conv_glu_forward.3} parent=11 // pred_fallthru
        _
      // Predicated region
      $region21: #{conv_glu_forward.3} parent=11 // pred_check
        %p305 = pneg %p132
      $region22: #{conv_glu_forward.3} parent=11 // pred_check_branch
        %307 = sbr.rel (%p305) target = $region24
      $region23: #{conv_glu_forward.3} parent=11 // pred_region
        _
      $region24: #{conv_glu_forward.3} parent=11 // pred_fallthru
        _
      // Predicated region
      $region25: #{conv_glu_forward.3} parent=11 // pred_check
        %p308 = pneg %p153
      $region26: #{conv_glu_forward.3} parent=11 // pred_check_branch
        %310 = sbr.rel (%p308) target = $region28
      $region27: #{conv_glu_forward.3} parent=11 // pred_region
        _
      $region28: #{conv_glu_forward.3} parent=11 // pred_fallthru
        _
      // Predicated region
      $region29: #{conv_glu_forward.3} parent=11 // pred_check
        %p311 = pneg %p174
      $region30: #{conv_glu_forward.3} parent=11 // pred_check_branch
        %313 = sbr.rel (%p311) target = $region32
      $region31: #{conv_glu_forward.3} parent=11 // pred_region
        _
      $region32: #{conv_glu_forward.3} parent=11 // pred_fallthru
        _
      // Predicated region
      $region33: #{conv_glu_forward.3} parent=11 // pred_check
        %p314 = pneg %p195
      $region34: #{conv_glu_forward.3} parent=11 // pred_check_branch
        %316 = sbr.rel (%p314) target = $region36
      $region35: #{conv_glu_forward.3} parent=11 // pred_region
        _
      $region36: #{conv_glu_forward.3} parent=11 // pred_fallthru
        _
      // Predicated region
      $region37: #{conv_glu_forward.3} parent=11 // pred_check
        %p317 = pneg %p216
      $region38: #{conv_glu_forward.3} parent=11 // pred_check_branch
        %319 = sbr.rel (%p317) target = $region40
      $region39: #{conv_glu_forward.3} parent=11 // pred_region
        _
      $region40: #{conv_glu_forward.3} parent=11 // pred_fallthru
        _
      // Predicated region
      $region41: #{conv_glu_forward.3} parent=11 // pred_check
        %p320 = pneg %p237
      $region42: #{conv_glu_forward.3} parent=11 // pred_check_branch
        %322 = sbr.rel (%p320) target = $region44
      $region43: #{conv_glu_forward.3} parent=11 // pred_region
        _
      $region44: #{conv_glu_forward.3} parent=11 // pred_fallthru
        _
      // Predicated region
      $region45: #{conv_glu_forward.3} parent=11 // pred_check
        %p323 = pneg %p258
      $region46: #{conv_glu_forward.3} parent=11 // pred_check_branch
        %325 = sbr.rel (%p323) target = $region48
      $region47: #{conv_glu_forward.3} parent=11 // pred_region
        _
      $region48: #{conv_glu_forward.3} parent=11 // pred_fallthru
        _
    $region12: #{conv_glu_forward.3} parent=5 // pred_fallthru
      _
    %p326 = scmp.lt.s32.totalorder %s17, 2
    // Predicated region
    $region49: #{conv_glu_forward.3} parent=5 // pred_check
      %p327 = pneg %p326
    $region50: #{conv_glu_forward.3} parent=5 // pred_check_branch
      %329 = sbr.rel (%p327) target = $region52
    $region51: #{conv_glu_forward.3} parent=5 // pred_region
      // Predicated region
      $region53: #{conv_glu_forward.3} parent=51 // pred_check
        %p330 = pneg %p37
      $region54: #{conv_glu_forward.3} parent=51 // pred_check_branch
        %332 = sbr.rel (%p330) target = $region56
      $region55: #{conv_glu_forward.3} parent=51 // pred_region
        %p333 = scmp.lt.s32.totalorder %s17, 1
        %s334 = scalar_select %p333, %s17, 1
        %s335 = smul.addr %s334, 41
        %s336 = smul.addr %s335, 8
        %s337 = scalar_lea.vmem %s0, %s336
      $region56: #{conv_glu_forward.3} parent=51 // pred_fallthru
        _
      // Predicated region
      $region57: #{conv_glu_forward.3} parent=51 // pred_check
        %p338 = pneg %p84
      $region58: #{conv_glu_forward.3} parent=51 // pred_check_branch
        %340 = sbr.rel (%p338) target = $region60
      $region59: #{conv_glu_forward.3} parent=51 // pred_region
        %p341 = scmp.lt.s32.totalorder %s17, 1
        %s342 = scalar_select %p341, %s17, 1
        %s343 = scalar_lea.vmem %s2, %s342
      $region60: #{conv_glu_forward.3} parent=51 // pred_fallthru
        _
    $region52: #{conv_glu_forward.3} parent=5 // pred_fallthru
      _
    %p344 = scmp.le.s32.totalorder 1, %s17
    %p345 = scmp.lt.s32.totalorder %s17, 3
    %p346 = pnand %p344, %p345
    %p347 = pneg %p346
    // Predicated region
    $region61: #{conv_glu_forward.3} parent=5 // pred_check
      _
    $region62: #{conv_glu_forward.3} parent=5 // pred_check_branch
      %349 = sbr.rel (%p346) target = $region64
    $region63: #{conv_glu_forward.3} parent=5 // pred_region
      %s350 = ssub.s32 %s17, 1
      %p351 = scmp.lt.s32.totalorder %s22, 1
      %s352 = scalar_select %p351, %s22, 1
      %s353 = smul.addr %s352, 41
      %s354 = smul.addr %s353, 8
      %s355 = scalar_lea.vmem %s0, %s354
      %p356 = pneg %p43
      %p357 = pneg %p40
      %p358 = pneg %p64
      %p359 = pneg %p61
      %p360 = scmp.lt.s32.totalorder %s22, 1
      %s361 = scalar_select %p360, %s22, 1
      %s362 = scalar_lea.vmem %s2, %s361
      %p363 = pneg %p90
      %p364 = pneg %p87
      %p365 = pneg %p111
      %p366 = pneg %p108
      %p367 = pneg %p132
      %p368 = pneg %p129
      %p369 = pneg %p153
      %p370 = pneg %p150
      %p371 = pneg %p174
      %p372 = pneg %p171
      %p373 = pneg %p195
      %p374 = pneg %p192
      %p375 = pneg %p216
      %p376 = pneg %p213
      %p377 = pneg %p237
      %p378 = pneg %p234
      %p379 = pneg %p258
      %p380 = pneg %p255
      %p381 = pneg %p284
      %p382 = pneg %p281
      %p383 = scmp.lt.s32.totalorder %s22, 1
      %s384 = scalar_select %p383, %s22, 1
      %s385 = smul.addr %s384, 36
      %s386 = smul.addr %s385, 8
      %s387 = scalar_lea.vmem %s11, %s386
      %p388 = scmp.lt.s32.totalorder %s22, 1
      %s389 = scalar_select %p388, %s22, 1
      %s390 = smul.addr %s389, 41
      %s391 = smul.addr %s390, 8
      %s392 = scalar_lea.vmem %s0, %s391
      %p393 = scmp.lt.s32.totalorder %s22, 1
      %s394 = scalar_select %p393, %s22, 1
      %s395 = scalar_lea.vmem %s2, %s394
      %p396 = scmp.lt.s32.totalorder %s22, 1
      %s397 = scalar_select %p396, %s22, 1
      %s398 = smul.addr %s397, 36
      %s399 = smul.addr %s398, 8
      %s400 = scalar_lea.vmem %s11, %s399
      %v401 = vld [vmem:[%s5] sm:$0x1]
      %v402 = vld [vmem:[%s4] sm:$0x1]
      %v403 = vadd.f32 %v402, 1e-05
      %v404 = vrsqrt.pop %v403
      %v405 = vmul.f32 %v401, %v404
      %v406 = vld [vmem:[%s6] sm:$0x1]
      %v407 = vld [vmem:[%s3] sm:$0x1]
      %v408 = vmul.f32 %v407, %v405
      %v409 = vsub.f32 %v406, %v408
      %v410 = vld [vmem:[%s392] sm:$0xff]
      %v411 = vld [vmem:[%s392 + $0x8] sm:$0xff]
      %v412 = vld [vmem:[%s392 + $0x10] sm:$0xff]
      %v413 = vld [vmem:[%s392 + $0x18] sm:$0xff]
      %v414 = vld [vmem:[%s392 + $0x20] sm:$0xff]
      %v415 = vld [vmem:[%s392 + $0x28] sm:$0xff]
      %v416 = vld [vmem:[%s392 + $0x30] sm:$0xff]
      %v417 = vld [vmem:[%s392 + $0x38] sm:$0xff]
      %v418 = vld [vmem:[%s392 + $0x40] sm:$0xff]
      %v419 = vld [vmem:[%s392 + $0x48] sm:$0xff]
      %v420 = vld [vmem:[%s392 + $0x50] sm:$0xff]
      %v421 = vld [vmem:[%s392 + $0x58] sm:$0xff]
      %v422 = vld [vmem:[%s392 + $0x60] sm:$0xff]
      %v423 = vld [vmem:[%s392 + $0x68] sm:$0xff]
      %v424 = vld [vmem:[%s392 + $0x70] sm:$0xff]
      %v425 = vld [vmem:[%s392 + $0x78] sm:$0xff]
      %v426 = vld [vmem:[%s392 + $0x80] sm:$0xff]
      %v427 = vld [vmem:[%s392 + $0x88] sm:$0xff]
      %v428 = vld [vmem:[%s392 + $0x90] sm:$0xff]
      %v429 = vld [vmem:[%s392 + $0x98] sm:$0xff]
      %v430 = vld [vmem:[%s392 + $0xa0] sm:$0xff]
      %v431 = vld [vmem:[%s392 + $0xa8] sm:$0xff]
      %v432 = vld [vmem:[%s392 + $0xb0] sm:$0xff]
      %v433 = vld [vmem:[%s392 + $0xb8] sm:$0xff]
      %v434 = vld [vmem:[%s392 + $0xc0] sm:$0xff]
      %v435 = vld [vmem:[%s392 + $0xc8] sm:$0xff]
      %v436 = vld [vmem:[%s392 + $0xd0] sm:$0xff]
      %v437 = vld [vmem:[%s392 + $0xd8] sm:$0xff]
      %v438 = vld [vmem:[%s392 + $0xe0] sm:$0xff]
      %v439 = vld [vmem:[%s392 + $0xe8] sm:$0xff]
      %v440 = vld [vmem:[%s392 + $0xf0] sm:$0xff]
      %v441 = vld [vmem:[%s392 + $0xf8] sm:$0xff]
      %v442 = vld [vmem:[%s392 + $0x100] sm:$0xff]
      %v443 = vld [vmem:[%s392 + $0x108] sm:$0xff]
      %v444 = vld [vmem:[%s392 + $0x110] sm:$0xff]
      %v445 = vld [vmem:[%s392 + $0x118] sm:$0xff]
      %v446 = vld [vmem:[%s392 + $0x120] sm:$0xff]
      %v447 = vld [vmem:[%s392 + $0x128] sm:$0xff]
      %v448 = vld [vmem:[%s392 + $0x130] sm:$0xff]
      %v449 = vld [vmem:[%s392 + $0x138] sm:$0xff]
      %v450 = vld [vmem:[%s392 + $0x140] sm:$0xf]
      %v452 = vlaneseq
      %v453 = vshrl.u32 %v452, 7
      %v454 = vsub.s32 0, %v453
      %v455 = vrot.slane %v405, %v454
      %v457 = vmul.f32 %v410, %v455
      %v458 = vmul.f32 %v411, %v455
      %v459 = vmul.f32 %v412, %v455
      %v460 = vmul.f32 %v413, %v455
      %v461 = vmul.f32 %v414, %v455
      %v462 = vmul.f32 %v415, %v455
      %v463 = vmul.f32 %v416, %v455
      %v464 = vmul.f32 %v417, %v455
      %v465 = vmul.f32 %v418, %v455
      %v466 = vmul.f32 %v419, %v455
      %v467 = vmul.f32 %v420, %v455
      %v468 = vmul.f32 %v421, %v455
      %v469 = vmul.f32 %v422, %v455
      %v470 = vmul.f32 %v423, %v455
      %v471 = vmul.f32 %v424, %v455
      %v472 = vmul.f32 %v425, %v455
      %v473 = vmul.f32 %v426, %v455
      %v474 = vmul.f32 %v427, %v455
      %v475 = vmul.f32 %v428, %v455
      %v476 = vmul.f32 %v429, %v455
      %v477 = vmul.f32 %v430, %v455
      %v478 = vmul.f32 %v431, %v455
      %v479 = vmul.f32 %v432, %v455
      %v480 = vmul.f32 %v433, %v455
      %v481 = vmul.f32 %v434, %v455
      %v482 = vmul.f32 %v435, %v455
      %v483 = vmul.f32 %v436, %v455
      %v484 = vmul.f32 %v437, %v455
      %v485 = vmul.f32 %v438, %v455
      %v486 = vmul.f32 %v439, %v455
      %v487 = vmul.f32 %v440, %v455
      %v488 = vmul.f32 %v441, %v455
      %v489 = vmul.f32 %v442, %v455
      %v490 = vmul.f32 %v443, %v455
      %v491 = vmul.f32 %v444, %v455
      %v492 = vmul.f32 %v445, %v455
      %v493 = vmul.f32 %v446, %v455
      %v494 = vmul.f32 %v447, %v455
      %v495 = vmul.f32 %v448, %v455
      %v496 = vmul.f32 %v449, %v455
      %v497 = vmul.f32 %v450, %v455
      %v499 = vlaneseq
      %v500 = vshrl.u32 %v499, 7
      %v501 = vsub.s32 0, %v500
      %v502 = vrot.slane %v409, %v501
      %v504 = vadd.f32 %v457, %v502
      %v505 = vadd.f32 %v458, %v502
      %v506 = vadd.f32 %v459, %v502
      %v507 = vadd.f32 %v460, %v502
      %v508 = vadd.f32 %v461, %v502
      %v509 = vadd.f32 %v462, %v502
      %v510 = vadd.f32 %v463, %v502
      %v511 = vadd.f32 %v464, %v502
      %v512 = vadd.f32 %v465, %v502
      %v513 = vadd.f32 %v466, %v502
      %v514 = vadd.f32 %v467, %v502
      %v515 = vadd.f32 %v468, %v502
      %v516 = vadd.f32 %v469, %v502
      %v517 = vadd.f32 %v470, %v502
      %v518 = vadd.f32 %v471, %v502
      %v519 = vadd.f32 %v472, %v502
      %v520 = vadd.f32 %v473, %v502
      %v521 = vadd.f32 %v474, %v502
      %v522 = vadd.f32 %v475, %v502
      %v523 = vadd.f32 %v476, %v502
      %v524 = vadd.f32 %v477, %v502
      %v525 = vadd.f32 %v478, %v502
      %v526 = vadd.f32 %v479, %v502
      %v527 = vadd.f32 %v480, %v502
      %v528 = vadd.f32 %v481, %v502
      %v529 = vadd.f32 %v482, %v502
      %v530 = vadd.f32 %v483, %v502
      %v531 = vadd.f32 %v484, %v502
      %v532 = vadd.f32 %v485, %v502
      %v533 = vadd.f32 %v486, %v502
      %v534 = vadd.f32 %v487, %v502
      %v535 = vadd.f32 %v488, %v502
      %v536 = vadd.f32 %v489, %v502
      %v537 = vadd.f32 %v490, %v502
      %v538 = vadd.f32 %v491, %v502
      %v539 = vadd.f32 %v492, %v502
      %v540 = vadd.f32 %v493, %v502
      %v541 = vadd.f32 %v494, %v502
      %v542 = vadd.f32 %v495, %v502
      %v543 = vadd.f32 %v496, %v502
      %v544 = vadd.f32 %v497, %v502
      %v545 = vld [vmem:[%s1] sm:$0xff]
      %v546 = vld [vmem:[%s1 + $0x8] sm:$0xff]
      %v547 = vld [vmem:[%s1 + $0x10] sm:$0xff]
      %v548 = vld [vmem:[%s1 + $0x18] sm:$0xff]
      %v549 = vld [vmem:[%s1 + $0x20] sm:$0xff]
      %v550 = vld [vmem:[%s1 + $0x28] sm:$0xff]
      %v551 = vld [vmem:[%s1 + $0x30] sm:$0xff]
      %v552 = vld [vmem:[%s1 + $0x38] sm:$0xff]
      %v553 = vld [vmem:[%s1 + $0x40] sm:$0xff]
      %v554 = vld [vmem:[%s1 + $0x48] sm:$0xff]
      %v555 = vld [vmem:[%s1 + $0x50] sm:$0xff]
      %v556 = vld [vmem:[%s1 + $0x58] sm:$0xff]
      %v557 = vld [vmem:[%s1 + $0x60] sm:$0xff]
      %v558 = vld [vmem:[%s1 + $0x68] sm:$0xff]
      %v559 = vld [vmem:[%s1 + $0x70] sm:$0xff]
      %v560 = vld [vmem:[%s1 + $0x78] sm:$0xff]
      %v561 = vld [vmem:[%s1 + $0x80] sm:$0xff]
      %v562 = vld [vmem:[%s1 + $0x88] sm:$0xff]
      %v563 = vld [vmem:[%s1 + $0x90] sm:$0xff]
      %v564 = vld [vmem:[%s1 + $0x98] sm:$0xff]
      %v565 = vld [vmem:[%s1 + $0xa0] sm:$0xff]
      %v566 = vld [vmem:[%s1 + $0xa8] sm:$0xff]
      %v567 = vld [vmem:[%s1 + $0xb0] sm:$0xff]
      %v568 = vld [vmem:[%s1 + $0xb8] sm:$0xff]
      %v569 = vld [vmem:[%s1 + $0xc0] sm:$0xff]
      %v570 = vld [vmem:[%s1 + $0xc8] sm:$0xff]
      %v571 = vld [vmem:[%s1 + $0xd0] sm:$0xff]
      %v572 = vld [vmem:[%s1 + $0xd8] sm:$0xff]
      %v573 = vld [vmem:[%s1 + $0xe0] sm:$0xff]
      %v574 = vld [vmem:[%s1 + $0xe8] sm:$0xff]
      %v575 = vld [vmem:[%s1 + $0xf0] sm:$0xff]
      %v576 = vld [vmem:[%s1 + $0xf8] sm:$0xff]
      %v577 = vld [vmem:[%s1 + $0x100] sm:$0xff]
      %v578 = vld [vmem:[%s1 + $0x108] sm:$0xff]
      %v579 = vld [vmem:[%s1 + $0x110] sm:$0xff]
      %v580 = vld [vmem:[%s1 + $0x118] sm:$0xff]
      %v581 = vld [vmem:[%s1 + $0x120] sm:$0xff]
      %v582 = vld [vmem:[%s1 + $0x128] sm:$0xff]
      %v583 = vld [vmem:[%s1 + $0x130] sm:$0xff]
      %v584 = vld [vmem:[%s1 + $0x138] sm:$0xff]
      %v585 = vld [vmem:[%s1 + $0x140] sm:$0xf]
      %587 = vset.pattern.permute.xlu0 0
      %588 = vperm.xlu0 %587, %v545
      %v589 = vpop.permute.xlu0 %588
      %592 = vset.pattern.permute.xlu0 0
      %593 = vperm.xlu0 %592, %v546
      %v594 = vpop.permute.xlu0 %593
      %597 = vset.pattern.permute.xlu0 0
      %598 = vperm.xlu0 %597, %v547
      %v599 = vpop.permute.xlu0 %598
      %602 = vset.pattern.permute.xlu0 0
      %603 = vperm.xlu0 %602, %v548
      %v604 = vpop.permute.xlu0 %603
      %607 = vset.pattern.permute.xlu0 0
      %608 = vperm.xlu0 %607, %v549
      %v609 = vpop.permute.xlu0 %608
      %612 = vset.pattern.permute.xlu0 0
      %613 = vperm.xlu0 %612, %v550
      %v614 = vpop.permute.xlu0 %613
      %617 = vset.pattern.permute.xlu0 0
      %618 = vperm.xlu0 %617, %v551
      %v619 = vpop.permute.xlu0 %618
      %622 = vset.pattern.permute.xlu0 0
      %623 = vperm.xlu0 %622, %v552
      %v624 = vpop.permute.xlu0 %623
      %627 = vset.pattern.permute.xlu0 0
      %628 = vperm.xlu0 %627, %v553
      %v629 = vpop.permute.xlu0 %628
      %632 = vset.pattern.permute.xlu0 0
      %633 = vperm.xlu0 %632, %v554
      %v634 = vpop.permute.xlu0 %633
      %637 = vset.pattern.permute.xlu0 0
      %638 = vperm.xlu0 %637, %v555
      %v639 = vpop.permute.xlu0 %638
      %642 = vset.pattern.permute.xlu0 0
      %643 = vperm.xlu0 %642, %v556
      %v644 = vpop.permute.xlu0 %643
      %647 = vset.pattern.permute.xlu0 0
      %648 = vperm.xlu0 %647, %v557
      %v649 = vpop.permute.xlu0 %648
      %652 = vset.pattern.permute.xlu0 0
      %653 = vperm.xlu0 %652, %v558
      %v654 = vpop.permute.xlu0 %653
      %657 = vset.pattern.permute.xlu0 0
      %658 = vperm.xlu0 %657, %v559
      %v659 = vpop.permute.xlu0 %658
      %662 = vset.pattern.permute.xlu0 0
      %663 = vperm.xlu0 %662, %v560
      %v664 = vpop.permute.xlu0 %663
      %667 = vset.pattern.permute.xlu0 0
      %668 = vperm.xlu0 %667, %v561
      %v669 = vpop.permute.xlu0 %668
      %672 = vset.pattern.permute.xlu0 0
      %673 = vperm.xlu0 %672, %v562
      %v674 = vpop.permute.xlu0 %673
      %677 = vset.pattern.permute.xlu0 0
      %678 = vperm.xlu0 %677, %v563
      %v679 = vpop.permute.xlu0 %678
      %682 = vset.pattern.permute.xlu0 0
      %683 = vperm.xlu0 %682, %v564
      %v684 = vpop.permute.xlu0 %683
      %687 = vset.pattern.permute.xlu0 0
      %688 = vperm.xlu0 %687, %v565
      %v689 = vpop.permute.xlu0 %688
      %692 = vset.pattern.permute.xlu0 0
      %693 = vperm.xlu0 %692, %v566
      %v694 = vpop.permute.xlu0 %693
      %697 = vset.pattern.permute.xlu0 0
      %698 = vperm.xlu0 %697, %v567
      %v699 = vpop.permute.xlu0 %698
      %702 = vset.pattern.permute.xlu0 0
      %703 = vperm.xlu0 %702, %v568
      %v704 = vpop.permute.xlu0 %703
      %707 = vset.pattern.permute.xlu0 0
      %708 = vperm.xlu0 %707, %v569
      %v709 = vpop.permute.xlu0 %708
      %712 = vset.pattern.permute.xlu0 0
      %713 = vperm.xlu0 %712, %v570
      %v714 = vpop.permute.xlu0 %713
      %717 = vset.pattern.permute.xlu0 0
      %718 = vperm.xlu0 %717, %v571
      %v719 = vpop.permute.xlu0 %718
      %722 = vset.pattern.permute.xlu0 0
      %723 = vperm.xlu0 %722, %v572
      %v724 = vpop.permute.xlu0 %723
      %727 = vset.pattern.permute.xlu0 0
      %728 = vperm.xlu0 %727, %v573
      %v729 = vpop.permute.xlu0 %728
      %732 = vset.pattern.permute.xlu0 0
      %733 = vperm.xlu0 %732, %v574
      %v734 = vpop.permute.xlu0 %733
      %737 = vset.pattern.permute.xlu0 0
      %738 = vperm.xlu0 %737, %v575
      %v739 = vpop.permute.xlu0 %738
      %742 = vset.pattern.permute.xlu0 0
      %743 = vperm.xlu0 %742, %v576
      %v744 = vpop.permute.xlu0 %743
      %747 = vset.pattern.permute.xlu0 0
      %748 = vperm.xlu0 %747, %v577
      %v749 = vpop.permute.xlu0 %748
      %752 = vset.pattern.permute.xlu0 0
      %753 = vperm.xlu0 %752, %v578
      %v754 = vpop.permute.xlu0 %753
      %757 = vset.pattern.permute.xlu0 0
      %758 = vperm.xlu0 %757, %v579
      %v759 = vpop.permute.xlu0 %758
      %762 = vset.pattern.permute.xlu0 0
      %763 = vperm.xlu0 %762, %v580
      %v764 = vpop.permute.xlu0 %763
      %767 = vset.pattern.permute.xlu0 0
      %768 = vperm.xlu0 %767, %v581
      %v769 = vpop.permute.xlu0 %768
      %772 = vset.pattern.permute.xlu0 0
      %773 = vperm.xlu0 %772, %v582
      %v774 = vpop.permute.xlu0 %773
      %777 = vset.pattern.permute.xlu0 0
      %778 = vperm.xlu0 %777, %v583
      %v779 = vpop.permute.xlu0 %778
      %782 = vset.pattern.permute.xlu0 0
      %783 = vperm.xlu0 %782, %v584
      %v784 = vpop.permute.xlu0 %783
      %787 = vset.pattern.permute.xlu0 0
      %788 = vperm.xlu0 %787, %v585
      %v789 = vpop.permute.xlu0 %788
      %v791 = vmul.f32 %v504, %v589
      %v792 = vmul.f32 %v505, %v594
      %v793 = vmul.f32 %v506, %v599
      %v794 = vmul.f32 %v507, %v604
      %v795 = vmul.f32 %v508, %v609
      %v796 = vmul.f32 %v509, %v614
      %v797 = vmul.f32 %v510, %v619
      %v798 = vmul.f32 %v511, %v624
      %v799 = vmul.f32 %v512, %v629
      %v800 = vmul.f32 %v513, %v634
      %v801 = vmul.f32 %v514, %v639
      %v802 = vmul.f32 %v515, %v644
      %v803 = vmul.f32 %v516, %v649
      %v804 = vmul.f32 %v517, %v654
      %v805 = vmul.f32 %v518, %v659
      %v806 = vmul.f32 %v519, %v664
      %v807 = vmul.f32 %v520, %v669
      %v808 = vmul.f32 %v521, %v674
      %v809 = vmul.f32 %v522, %v679
      %v810 = vmul.f32 %v523, %v684
      %v811 = vmul.f32 %v524, %v689
      %v812 = vmul.f32 %v525, %v694
      %v813 = vmul.f32 %v526, %v699
      %v814 = vmul.f32 %v527, %v704
      %v815 = vmul.f32 %v528, %v709
      %v816 = vmul.f32 %v529, %v714
      %v817 = vmul.f32 %v530, %v719
      %v818 = vmul.f32 %v531, %v724
      %v819 = vmul.f32 %v532, %v729
      %v820 = vmul.f32 %v533, %v734
      %v821 = vmul.f32 %v534, %v739
      %v822 = vmul.f32 %v535, %v744
      %v823 = vmul.f32 %v536, %v749
      %v824 = vmul.f32 %v537, %v754
      %v825 = vmul.f32 %v538, %v759
      %v826 = vmul.f32 %v539, %v764
      %v827 = vmul.f32 %v540, %v769
      %v828 = vmul.f32 %v541, %v774
      %v829 = vmul.f32 %v542, %v779
      %v830 = vmul.f32 %v543, %v784
      %v831 = vmul.f32 %v544, %v789
      %vm832 = vcmask 64512
      %833 = vst.msk [vmem:[#allocation2] sm:$0xff] %vm832, %v791
      %834 = vst.msk [vmem:[#allocation2 + $0x8] sm:$0xff] %vm832, %v792
      %835 = vst.msk [vmem:[#allocation2 + $0x10] sm:$0xff] %vm832, %v793
      %836 = vst.msk [vmem:[#allocation2 + $0x18] sm:$0xff] %vm832, %v794
      %837 = vst.msk [vmem:[#allocation2 + $0x20] sm:$0xff] %vm832, %v795
      %838 = vst.msk [vmem:[#allocation2 + $0x28] sm:$0xff] %vm832, %v796
      %839 = vst.msk [vmem:[#allocation2 + $0x30] sm:$0xff] %vm832, %v797
      %840 = vst.msk [vmem:[#allocation2 + $0x38] sm:$0xff] %vm832, %v798
      %841 = vst.msk [vmem:[#allocation2 + $0x40] sm:$0xff] %vm832, %v799
      %842 = vst.msk [vmem:[#allocation2 + $0x48] sm:$0xff] %vm832, %v800
      %843 = vst.msk [vmem:[#allocation2 + $0x50] sm:$0xff] %vm832, %v801
      %844 = vst.msk [vmem:[#allocation2 + $0x58] sm:$0xff] %vm832, %v802
      %845 = vst.msk [vmem:[#allocation2 + $0x60] sm:$0xff] %vm832, %v803
      %846 = vst.msk [vmem:[#allocation2 + $0x68] sm:$0xff] %vm832, %v804
      %847 = vst.msk [vmem:[#allocation2 + $0x70] sm:$0xff] %vm832, %v805
      %848 = vst.msk [vmem:[#allocation2 + $0x78] sm:$0xff] %vm832, %v806
      %849 = vst.msk [vmem:[#allocation2 + $0x80] sm:$0xff] %vm832, %v807
      %850 = vst.msk [vmem:[#allocation2 + $0x88] sm:$0xff] %vm832, %v808
      %851 = vst.msk [vmem:[#allocation2 + $0x90] sm:$0xff] %vm832, %v809
      %852 = vst.msk [vmem:[#allocation2 + $0x98] sm:$0xff] %vm832, %v810
      %853 = vst.msk [vmem:[#allocation2 + $0xa0] sm:$0xff] %vm832, %v811
      %854 = vst.msk [vmem:[#allocation2 + $0xa8] sm:$0xff] %vm832, %v812
      %855 = vst.msk [vmem:[#allocation2 + $0xb0] sm:$0xff] %vm832, %v813
      %856 = vst.msk [vmem:[#allocation2 + $0xb8] sm:$0xff] %vm832, %v814
      %857 = vst.msk [vmem:[#allocation2 + $0xc0] sm:$0xff] %vm832, %v815
      %858 = vst.msk [vmem:[#allocation2 + $0xc8] sm:$0xff] %vm832, %v816
      %859 = vst.msk [vmem:[#allocation2 + $0xd0] sm:$0xff] %vm832, %v817
      %860 = vst.msk [vmem:[#allocation2 + $0xd8] sm:$0xff] %vm832, %v818
      %861 = vst.msk [vmem:[#allocation2 + $0xe0] sm:$0xff] %vm832, %v819
      %862 = vst.msk [vmem:[#allocation2 + $0xe8] sm:$0xff] %vm832, %v820
      %863 = vst.msk [vmem:[#allocation2 + $0xf0] sm:$0xff] %vm832, %v821
      %864 = vst.msk [vmem:[#allocation2 + $0xf8] sm:$0xff] %vm832, %v822
      %865 = vst.msk [vmem:[#allocation2 + $0x100] sm:$0xff] %vm832, %v823
      %866 = vst.msk [vmem:[#allocation2 + $0x108] sm:$0xff] %vm832, %v824
      %867 = vst.msk [vmem:[#allocation2 + $0x110] sm:$0xff] %vm832, %v825
      %868 = vst.msk [vmem:[#allocation2 + $0x118] sm:$0xff] %vm832, %v826
      %869 = vst.msk [vmem:[#allocation2 + $0x120] sm:$0xff] %vm832, %v827
      %870 = vst.msk [vmem:[#allocation2 + $0x128] sm:$0xff] %vm832, %v828
      %871 = vst.msk [vmem:[#allocation2 + $0x130] sm:$0xff] %vm832, %v829
      %872 = vst.msk [vmem:[#allocation2 + $0x138] sm:$0xff] %vm832, %v830
      %vm873 = vcmask 60416
      %874 = vst.msk [vmem:[#allocation2 + $0x140] sm:$0xf] %vm873, %v831
      %v875 = vld [vmem:[%s8] sm:$0x1]
      %v876 = vld [vmem:[#allocation2] sm:$0xff]
      %v877 = vld [vmem:[#allocation2 + $0x8] sm:$0xff]
      %v878 = vld [vmem:[#allocation2 + $0x10] sm:$0xff]
      %v879 = vld [vmem:[#allocation2 + $0x18] sm:$0xff]
      %v880 = vld [vmem:[#allocation2 + $0x20] sm:$0xff]
      %v881 = vld [vmem:[#allocation2 + $0x28] sm:$0xff]
      %v882 = vld [vmem:[#allocation2 + $0x30] sm:$0xff]
      %v883 = vld [vmem:[#allocation2 + $0x38] sm:$0xff]
      %v884 = vld [vmem:[#allocation2 + $0x40] sm:$0xff]
      %v885 = vld [vmem:[#allocation2 + $0x48] sm:$0xff]
      %v886 = vld [vmem:[#allocation2 + $0x50] sm:$0xff]
      %v887 = vld [vmem:[#allocation2 + $0x58] sm:$0xff]
      %v888 = vld [vmem:[#allocation2 + $0x60] sm:$0xff]
      %v889 = vld [vmem:[#allocation2 + $0x68] sm:$0xff]
      %v890 = vld [vmem:[#allocation2 + $0x70] sm:$0xff]
      %v891 = vld [vmem:[#allocation2 + $0x78] sm:$0xff]
      %v892 = vld [vmem:[#allocation2 + $0x80] sm:$0xff]
      %v893 = vld [vmem:[#allocation2 + $0x88] sm:$0xff]
      %v894 = vld [vmem:[#allocation2 + $0x90] sm:$0xff]
      %v895 = vld [vmem:[#allocation2 + $0x98] sm:$0xff]
      %v896 = vld [vmem:[#allocation2 + $0xa0] sm:$0xff]
      %v897 = vld [vmem:[#allocation2 + $0xa8] sm:$0xff]
      %v898 = vld [vmem:[#allocation2 + $0xb0] sm:$0xff]
      %v899 = vld [vmem:[#allocation2 + $0xb8] sm:$0xff]
      %v900 = vld [vmem:[#allocation2 + $0xc0] sm:$0xff]
      %v901 = vld [vmem:[#allocation2 + $0xc8] sm:$0xff]
      %v902 = vld [vmem:[#allocation2 + $0xd0] sm:$0xff]
      %v903 = vld [vmem:[#allocation2 + $0xd8] sm:$0xff]
      %v904 = vld [vmem:[#allocation2 + $0xe0] sm:$0xff]
      %v905 = vld [vmem:[#allocation2 + $0xe8] sm:$0xff]
      %v906 = vld [vmem:[#allocation2 + $0xf0] sm:$0xff]
      %v907 = vld [vmem:[#allocation2 + $0xf8] sm:$0xff]
      %v908 = vld [vmem:[#allocation2 + $0x100] sm:$0xff]
      %v909 = vld [vmem:[#allocation2 + $0x108] sm:$0xff]
      %v910 = vld [vmem:[#allocation2 + $0x110] sm:$0xff]
      %v911 = vld [vmem:[#allocation2 + $0x118] sm:$0x3f]
      %v912 = vld [vmem:[%s7] sm:$0xff]
      %v914 = vsel %vm832, %v876, 0
      %v917 = vsel %vm832, %v877, 0
      %v920 = vsel %vm832, %v878, 0
      %v923 = vsel %vm832, %v879, 0
      %v926 = vsel %vm832, %v880, 0
      %v929 = vsel %vm832, %v881, 0
      %v932 = vsel %vm832, %v882, 0
      %v935 = vsel %vm832, %v883, 0
      %v938 = vsel %vm832, %v884, 0
      %v941 = vsel %vm832, %v885, 0
      %v944 = vsel %vm832, %v886, 0
      %v947 = vsel %vm832, %v887, 0
      %v950 = vsel %vm832, %v888, 0
      %v953 = vsel %vm832, %v889, 0
      %v956 = vsel %vm832, %v890, 0
      %v959 = vsel %vm832, %v891, 0
      %v962 = vsel %vm832, %v892, 0
      %v965 = vsel %vm832, %v893, 0
      %v968 = vsel %vm832, %v894, 0
      %v971 = vsel %vm832, %v895, 0
      %v974 = vsel %vm832, %v896, 0
      %v977 = vsel %vm832, %v897, 0
      %v980 = vsel %vm832, %v898, 0
      %v983 = vsel %vm832, %v899, 0
      %v986 = vsel %vm832, %v900, 0
      %v989 = vsel %vm832, %v901, 0
      %v992 = vsel %vm832, %v902, 0
      %v995 = vsel %vm832, %v903, 0
      %v998 = vsel %vm832, %v904, 0
      %v1001 = vsel %vm832, %v905, 0
      %v1004 = vsel %vm832, %v906, 0
      %v1007 = vsel %vm832, %v907, 0
      %v1010 = vsel %vm832, %v908, 0
      %v1013 = vsel %vm832, %v909, 0
      %v1016 = vsel %vm832, %v910, 0
      %v1019 = vsel %vm832, %v911, 0
      %1021 = vmatprep.subr.mxu0 0.0
      %1022 = vmatpush1.msra.mxu0 %v912
      %1023 = vmatprep.subr.mxu0 0.0
      %1024 = vmatpush1.msra.mxu0 0.0
      %1025 = vmatprep.subr.mxu0 0.0
      %1026 = vmatpush1.msra.mxu0 0.0
      %1027 = vmatprep.subr.mxu0 0.0
      %1028 = vmatpush1.msra.mxu0 0.0
      %1029 = vmatprep.subr.mxu0 0.0
      %1030 = vmatpush1.msra.mxu0 0.0
      %1031 = vmatprep.subr.mxu0 0.0
      %1032 = vmatpush1.msra.mxu0 0.0
      %1033 = vmatprep.subr.mxu0 0.0
      %1034 = vmatpush1.msra.mxu0 0.0
      %1035 = vmatprep.subr.mxu0 0.0
      %1036 = vmatpush1.msra.mxu0 0.0
      %1037 = vmatprep.subr.mxu0 0.0
      %1038 = vmatpush1.msra.mxu0 0.0
      %1039 = vmatprep.subr.mxu0 0.0
      %1040 = vmatpush1.msra.mxu0 0.0
      %1041 = vmatprep.subr.mxu0 0.0
      %1042 = vmatpush1.msra.mxu0 0.0
      %1043 = vmatprep.subr.mxu0 0.0
      %1044 = vmatpush1.msra.mxu0 0.0
      %1045 = vmatprep.subr.mxu0 0.0
      %1046 = vmatpush1.msra.mxu0 0.0
      %1047 = vmatprep.subr.mxu0 0.0
      %1048 = vmatpush1.msra.mxu0 0.0
      %1049 = vmatprep.subr.mxu0 0.0
      %1050 = vmatpush1.msra.mxu0 0.0
      %1051 = vmatprep.subr.mxu0 0.0
      %1052 = vmatpush1.msra.mxu0 0.0
      %1053 = vmatprep.subr.mxu0 0.0
      %1054 = vmatpush1.msra.mxu0 0.0
      %1055 = vmatprep.subr.mxu0 0.0
      %1056 = vmatpush1.msra.mxu0 0.0
      %1057 = vmatprep.subr.mxu0 0.0
      %1058 = vmatpush1.msra.mxu0 0.0
      %1059 = vmatprep.subr.mxu0 0.0
      %1060 = vmatpush1.msra.mxu0 0.0
      %1061 = vmatprep.subr.mxu0 0.0
      %1062 = vmatpush1.msra.mxu0 0.0
      %1063 = vmatprep.subr.mxu0 0.0
      %1064 = vmatpush1.msra.mxu0 0.0
      %1065 = vmatprep.subr.mxu0 0.0
      %1066 = vmatpush1.msra.mxu0 0.0
      %1067 = vmatprep.subr.mxu0 0.0
      %1068 = vmatpush1.msra.mxu0 0.0
      %1069 = vmatprep.subr.mxu0 0.0
      %1070 = vmatpush1.msra.mxu0 0.0
      %1071 = vmatprep.subr.mxu0 0.0
      %1072 = vmatpush1.msra.mxu0 0.0
      %1073 = vmatprep.subr.mxu0 0.0
      %1074 = vmatpush1.msra.mxu0 0.0
      %1075 = vmatprep.subr.mxu0 0.0
      %1076 = vmatpush1.msra.mxu0 0.0
      %1077 = vmatprep.subr.mxu0 0.0
      %1078 = vmatpush1.msra.mxu0 0.0
      %1079 = vmatprep.subr.mxu0 0.0
      %1080 = vmatpush1.msra.mxu0 0.0
      %1081 = vmatprep.subr.mxu0 0.0
      %1082 = vmatpush1.msra.mxu0 0.0
      %1083 = vmatprep.subr.mxu0 0.0
      %1084 = vmatpush1.msra.mxu0 0.0
      %1085 = vmatprep.mubr.f32.mxu0 0.0
      %1086 = vmatmul.mubr.f32.gmra.mrb[0].mxu0 %v914
      %v1087 = vpop.f32.mrb[0].mxu0
      %v1088 = vadd.f32 0.0, %v1087
      %v1089 = vpop.f32.mrb[0].mxu0
      %1090 = vmatprep.mubr.f32.mxu0 0.0
      %1091 = vmatmul.mubr.f32.gmra.mrb[0].mxu0 %v917
      %v1092 = vpop.f32.mrb[0].mxu0
      %v1093 = vadd.f32 0.0, %v1092
      %v1094 = vpop.f32.mrb[0].mxu0
      %1095 = vmatprep.mubr.f32.mxu0 0.0
      %1096 = vmatmul.mubr.f32.gmra.mrb[0].mxu0 %v920
      %v1097 = vpop.f32.mrb[0].mxu0
      %v1098 = vadd.f32 0.0, %v1097
      %v1099 = vpop.f32.mrb[0].mxu0
      %1100 = vmatprep.mubr.f32.mxu0 0.0
      %1101 = vmatmul.mubr.f32.gmra.mrb[0].mxu0 %v923
      %v1102 = vpop.f32.mrb[0].mxu0
      %v1103 = vadd.f32 0.0, %v1102
      %v1104 = vpop.f32.mrb[0].mxu0
      %1105 = vmatprep.mubr.f32.mxu0 0.0
      %1106 = vmatmul.mubr.f32.gmra.mrb[0].mxu0 %v926
      %v1107 = vpop.f32.mrb[0].mxu0
      %v1108 = vadd.f32 0.0, %v1107
      %v1109 = vpop.f32.mrb[0].mxu0
      %1110 = vmatprep.mubr.f32.mxu0 0.0
      %1111 = vmatmul.mubr.f32.gmra.mrb[0].mxu0 %v929
      %v1112 = vpop.f32.mrb[0].mxu0
      %v1113 = vadd.f32 0.0, %v1112
      %v1114 = vpop.f32.mrb[0].mxu0
      %1115 = vmatprep.mubr.f32.mxu0 0.0
      %1116 = vmatmul.mubr.f32.gmra.mrb[0].mxu0 %v932
      %v1117 = vpop.f32.mrb[0].mxu0
      %v1118 = vadd.f32 0.0, %v1117
      %v1119 = vpop.f32.mrb[0].mxu0
      %1120 = vmatprep.mubr.f32.mxu0 0.0
      %1121 = vmatmul.mubr.f32.gmra.mrb[0].mxu0 %v935
      %v1122 = vpop.f32.mrb[0].mxu0
      %v1123 = vadd.f32 0.0, %v1122
      %v1124 = vpop.f32.mrb[0].mxu0
      %1125 = vmatprep.mubr.f32.mxu0 0.0
      %1126 = vmatmul.mubr.f32.gmra.mrb[0].mxu0 %v938
      %v1127 = vpop.f32.mrb[0].mxu0
      %v1128 = vadd.f32 0.0, %v1127
      %v1129 = vpop.f32.mrb[0].mxu0
      %1130 = vmatprep.mubr.f32.mxu0 0.0
      %1131 = vmatmul.mubr.f32.gmra.mrb[0].mxu0 %v941
      %v1132 = vpop.f32.mrb[0].mxu0
      %v1133 = vadd.f32 0.0, %v1132
      %v1134 = vpop.f32.mrb[0].mxu0
      %1135 = vmatprep.mubr.f32.mxu0 0.0
      %1136 = vmatmul.mubr.f32.gmra.mrb[0].mxu0 %v944
      %v1137 = vpop.f32.mrb[0].mxu0
      %v1138 = vadd.f32 0.0, %v1137
      %v1139 = vpop.f32.mrb[0].mxu0
      %1140 = vmatprep.mubr.f32.mxu0 0.0
      %1141 = vmatmul.mubr.f32.gmra.mrb[0].mxu0 %v947
      %v1142 = vpop.f32.mrb[0].mxu0
      %v1143 = vadd.f32 0.0, %v1142
      %v1144 = vpop.f32.mrb[0].mxu0
      %1145 = vmatprep.mubr.f32.mxu0 0.0
      %1146 = vmatmul.mubr.f32.gmra.mrb[0].mxu0 %v950
      %v1147 = vpop.f32.mrb[0].mxu0
      %v1148 = vadd.f32 0.0, %v1147
      %v1149 = vpop.f32.mrb[0].mxu0
      %1150 = vmatprep.mubr.f32.mxu0 0.0
      %1151 = vmatmul.mubr.f32.gmra.mrb[0].mxu0 %v953
      %v1152 = vpop.f32.mrb[0].mxu0
      %v1153 = vadd.f32 0.0, %v1152
      %v1154 = vpop.f32.mrb[0].mxu0
      %1155 = vmatprep.mubr.f32.mxu0 0.0
      %1156 = vmatmul.mubr.f32.gmra.mrb[0].mxu0 %v956
      %v1157 = vpop.f32.mrb[0].mxu0
      %v1158 = vadd.f32 0.0, %v1157
      %v1159 = vpop.f32.mrb[0].mxu0
      %1160 = vmatprep.mubr.f32.mxu0 0.0
      %1161 = vmatmul.mubr.f32.gmra.mrb[0].mxu0 %v959
      %v1162 = vpop.f32.mrb[0].mxu0
      %v1163 = vadd.f32 0.0, %v1162
      %v1164 = vpop.f32.mrb[0].mxu0
      %1165 = vmatprep.mubr.f32.mxu0 0.0
      %1166 = vmatmul.mubr.f32.gmra.mrb[0].mxu0 %v962
      %v1167 = vpop.f32.mrb[0].mxu0
      %v1168 = vadd.f32 0.0, %v1167
      %v1169 = vpop.f32.mrb[0].mxu0
      %1170 = vmatprep.mubr.f32.mxu0 0.0
      %1171 = vmatmul.mubr.f32.gmra.mrb[0].mxu0 %v965
      %v1172 = vpop.f32.mrb[0].mxu0
      %v1173 = vadd.f32 0.0, %v1172
      %v1174 = vpop.f32.mrb[0].mxu0
      %1175 = vmatprep.mubr.f32.mxu0 0.0
      %1176 = vmatmul.mubr.f32.gmra.mrb[0].mxu0 %v968
      %v1177 = vpop.f32.mrb[0].mxu0
      %v1178 = vadd.f32 0.0, %v1177
      %v1179 = vpop.f32.mrb[0].mxu0
      %1180 = vmatprep.mubr.f32.mxu0 0.0
      %1181 = vmatmul.mubr.f32.gmra.mrb[0].mxu0 %v971
      %v1182 = vpop.f32.mrb[0].mxu0
      %v1183 = vadd.f32 0.0, %v1182
      %v1184 = vpop.f32.mrb[0].mxu0
      %1185 = vmatprep.mubr.f32.mxu0 0.0
      %1186 = vmatmul.mubr.f32.gmra.mrb[0].mxu0 %v974
      %v1187 = vpop.f32.mrb[0].mxu0
      %v1188 = vadd.f32 0.0, %v1187
      %v1189 = vpop.f32.mrb[0].mxu0
      %1190 = vmatprep.mubr.f32.mxu0 0.0
      %1191 = vmatmul.mubr.f32.gmra.mrb[0].mxu0 %v977
      %v1192 = vpop.f32.mrb[0].mxu0
      %v1193 = vadd.f32 0.0, %v1192
      %v1194 = vpop.f32.mrb[0].mxu0
      %1195 = vmatprep.mubr.f32.mxu0 0.0
      %1196 = vmatmul.mubr.f32.gmra.mrb[0].mxu0 %v980
      %v1197 = vpop.f32.mrb[0].mxu0
      %v1198 = vadd.f32 0.0, %v1197
      %v1199 = vpop.f32.mrb[0].mxu0
      %1200 = vmatprep.mubr.f32.mxu0 0.0
      %1201 = vmatmul.mubr.f32.gmra.mrb[0].mxu0 %v983
      %v1202 = vpop.f32.mrb[0].mxu0
      %v1203 = vadd.f32 0.0, %v1202
      %v1204 = vpop.f32.mrb[0].mxu0
      %1205 = vmatprep.mubr.f32.mxu0 0.0
      %1206 = vmatmul.mubr.f32.gmra.mrb[0].mxu0 %v986
      %v1207 = vpop.f32.mrb[0].mxu0
      %v1208 = vadd.f32 0.0, %v1207
      %v1209 = vpop.f32.mrb[0].mxu0
      %1210 = vmatprep.mubr.f32.mxu0 0.0
      %1211 = vmatmul.mubr.f32.gmra.mrb[0].mxu0 %v989
      %v1212 = vpop.f32.mrb[0].mxu0
      %v1213 = vadd.f32 0.0, %v1212
      %v1214 = vpop.f32.mrb[0].mxu0
      %1215 = vmatprep.mubr.f32.mxu0 0.0
      %1216 = vmatmul.mubr.f32.gmra.mrb[0].mxu0 %v992
      %v1217 = vpop.f32.mrb[0].mxu0
      %v1218 = vadd.f32 0.0, %v1217
      %v1219 = vpop.f32.mrb[0].mxu0
      %1220 = vmatprep.mubr.f32.mxu0 0.0
      %1221 = vmatmul.mubr.f32.gmra.mrb[0].mxu0 %v995
      %v1222 = vpop.f32.mrb[0].mxu0
      %v1223 = vadd.f32 0.0, %v1222
      %v1224 = vpop.f32.mrb[0].mxu0
      %1225 = vmatprep.mubr.f32.mxu0 0.0
      %1226 = vmatmul.mubr.f32.gmra.mrb[0].mxu0 %v998
      %v1227 = vpop.f32.mrb[0].mxu0
      %v1228 = vadd.f32 0.0, %v1227
      %v1229 = vpop.f32.mrb[0].mxu0
      %1230 = vmatprep.mubr.f32.mxu0 0.0
      %1231 = vmatmul.mubr.f32.gmra.mrb[0].mxu0 %v1001
      %v1232 = vpop.f32.mrb[0].mxu0
      %v1233 = vadd.f32 0.0, %v1232
      %v1234 = vpop.f32.mrb[0].mxu0
      %1235 = vmatprep.mubr.f32.mxu0 0.0
      %1236 = vmatmul.mubr.f32.gmra.mrb[0].mxu0 %v1004
      %v1237 = vpop.f32.mrb[0].mxu0
      %v1238 = vadd.f32 0.0, %v1237
      %v1239 = vpop.f32.mrb[0].mxu0
      %1240 = vmatprep.mubr.f32.mxu0 0.0
      %1241 = vmatmul.mubr.f32.gmra.mrb[0].mxu0 %v1007
      %v1242 = vpop.f32.mrb[0].mxu0
      %v1243 = vadd.f32 0.0, %v1242
      %v1244 = vpop.f32.mrb[0].mxu0
      %1245 = vmatprep.mubr.f32.mxu0 0.0
      %1246 = vmatmul.mubr.f32.gmra.mrb[0].mxu0 %v1010
      %v1247 = vpop.f32.mrb[0].mxu0
      %v1248 = vadd.f32 0.0, %v1247
      %v1249 = vpop.f32.mrb[0].mxu0
      %1250 = vmatprep.mubr.f32.mxu0 0.0
      %1251 = vmatmul.mubr.f32.gmra.mrb[0].mxu0 %v1013
      %v1252 = vpop.f32.mrb[0].mxu0
      %v1253 = vadd.f32 0.0, %v1252
      %v1254 = vpop.f32.mrb[0].mxu0
      %1255 = vmatprep.mubr.f32.mxu0 0.0
      %1256 = vmatmul.mubr.f32.gmra.mrb[0].mxu0 %v1016
      %v1257 = vpop.f32.mrb[0].mxu0
      %v1258 = vadd.f32 0.0, %v1257
      %v1259 = vpop.f32.mrb[0].mxu0
      %1260 = vmatprep.mubr.f32.mxu0 0.0
      %1261 = vmatmul.mubr.f32.gmra.mrb[0].mxu0 %v1019
      %v1262 = vpop.f32.mrb[0].mxu0
      %v1263 = vadd.f32 0.0, %v1262
      %v1264 = vpop.f32.mrb[0].mxu0
      %1265 = vdwg.mxu0
      %v1267 = vlaneseq
      %v1268 = vshrl.u32 %v1267, 7
      %v1269 = vsub.s32 0, %v1268
      %v1270 = vrot.slane %v875, %v1269
      %v1272 = vadd.f32 %v1270, %v1088
      %v1273 = vadd.f32 %v1270, %v1093
      %v1274 = vadd.f32 %v1270, %v1098
      %v1275 = vadd.f32 %v1270, %v1103
      %v1276 = vadd.f32 %v1270, %v1108
      %v1277 = vadd.f32 %v1270, %v1113
      %v1278 = vadd.f32 %v1270, %v1118
      %v1279 = vadd.f32 %v1270, %v1123
      %v1280 = vadd.f32 %v1270, %v1128
      %v1281 = vadd.f32 %v1270, %v1133
      %v1282 = vadd.f32 %v1270, %v1138
      %v1283 = vadd.f32 %v1270, %v1143
      %v1284 = vadd.f32 %v1270, %v1148
      %v1285 = vadd.f32 %v1270, %v1153
      %v1286 = vadd.f32 %v1270, %v1158
      %v1287 = vadd.f32 %v1270, %v1163
      %v1288 = vadd.f32 %v1270, %v1168
      %v1289 = vadd.f32 %v1270, %v1173
      %v1290 = vadd.f32 %v1270, %v1178
      %v1291 = vadd.f32 %v1270, %v1183
      %v1292 = vadd.f32 %v1270, %v1188
      %v1293 = vadd.f32 %v1270, %v1193
      %v1294 = vadd.f32 %v1270, %v1198
      %v1295 = vadd.f32 %v1270, %v1203
      %v1296 = vadd.f32 %v1270, %v1208
      %v1297 = vadd.f32 %v1270, %v1213
      %v1298 = vadd.f32 %v1270, %v1218
      %v1299 = vadd.f32 %v1270, %v1223
      %v1300 = vadd.f32 %v1270, %v1228
      %v1301 = vadd.f32 %v1270, %v1233
      %v1302 = vadd.f32 %v1270, %v1238
      %v1303 = vadd.f32 %v1270, %v1243
      %v1304 = vadd.f32 %v1270, %v1248
      %v1305 = vadd.f32 %v1270, %v1253
      %v1306 = vadd.f32 %v1270, %v1258
      %v1307 = vadd.f32 %v1270, %v1263
      %v1308 = vld [vmem:[#allocation2 + $0x1] sm:$0xff]
      %v1309 = vld [vmem:[#allocation2 + $0x9] sm:$0xff]
      %v1310 = vld [vmem:[#allocation2 + $0x11] sm:$0xff]
      %v1311 = vld [vmem:[#allocation2 + $0x19] sm:$0xff]
      %v1312 = vld [vmem:[#allocation2 + $0x21] sm:$0xff]
      %v1313 = vld [vmem:[#allocation2 + $0x29] sm:$0xff]
      %v1314 = vld [vmem:[#allocation2 + $0x31] sm:$0xff]
      %v1315 = vld [vmem:[#allocation2 + $0x39] sm:$0xff]
      %v1316 = vld [vmem:[#allocation2 + $0x41] sm:$0xff]
      %v1317 = vld [vmem:[#allocation2 + $0x49] sm:$0xff]
      %v1318 = vld [vmem:[#allocation2 + $0x51] sm:$0xff]
      %v1319 = vld [vmem:[#allocation2 + $0x59] sm:$0xff]
      %v1320 = vld [vmem:[#allocation2 + $0x61] sm:$0xff]
      %v1321 = vld [vmem:[#allocation2 + $0x69] sm:$0xff]
      %v1322 = vld [vmem:[#allocation2 + $0x71] sm:$0xff]
      %v1323 = vld [vmem:[#allocation2 + $0x79] sm:$0xff]
      %v1324 = vld [vmem:[#allocation2 + $0x81] sm:$0xff]
      %v1325 = vld [vmem:[#allocation2 + $0x89] sm:$0xff]
      %v1326 = vld [vmem:[#allocation2 + $0x91] sm:$0xff]
      %v1327 = vld [vmem:[#allocation2 + $0x99] sm:$0xff]
      %v1328 = vld [vmem:[#allocation2 + $0xa1] sm:$0xff]
      %v1329 = vld [vmem:[#allocation2 + $0xa9] sm:$0xff]
      %v1330 = vld [vmem:[#allocation2 + $0xb1] sm:$0xff]
      %v1331 = vld [vmem:[#allocation2 + $0xb9] sm:$0xff]
      %v1332 = vld [vmem:[#allocation2 + $0xc1] sm:$0xff]
      %v1333 = vld [vmem:[#allocation2 + $0xc9] sm:$0xff]
      %v1334 = vld [vmem:[#allocation2 + $0xd1] sm:$0xff]
      %v1335 = vld [vmem:[#allocation2 + $0xd9] sm:$0xff]
      %v1336 = vld [vmem:[#allocation2 + $0xe1] sm:$0xff]
      %v1337 = vld [vmem:[#allocation2 + $0xe9] sm:$0xff]
      %v1338 = vld [vmem:[#allocation2 + $0xf1] sm:$0xff]
      %v1339 = vld [vmem:[#allocation2 + $0xf9] sm:$0xff]
      %v1340 = vld [vmem:[#allocation2 + $0x101] sm:$0xff]
      %v1341 = vld [vmem:[#allocation2 + $0x109] sm:$0xff]
      %v1342 = vld [vmem:[#allocation2 + $0x111] sm:$0xff]
      %v1343 = vld [vmem:[#allocation2 + $0x119] sm:$0x3f]
      %v1344 = vld [vmem:[%s7 + $0x8] sm:$0xff]
      %v1346 = vsel %vm832, %v1308, 0
      %v1349 = vsel %vm832, %v1309, 0
      %v1352 = vsel %vm832, %v1310, 0
      %v1355 = vsel %vm832, %v1311, 0
      %v1358 = vsel %vm832, %v1312, 0
      %v1361 = vsel %vm832, %v1313, 0
      %v1364 = vsel %vm832, %v1314, 0
      %v1367 = vsel %vm832, %v1315, 0
      %v1370 = vsel %vm832, %v1316, 0
      %v1373 = vsel %vm832, %v1317, 0
      %v1376 = vsel %vm832, %v1318, 0
      %v1379 = vsel %vm832, %v1319, 0
      %v1382 = vsel %vm832, %v1320, 0
      %v1385 = vsel %vm832, %v1321, 0
      %v1388 = vsel %vm832, %v1322, 0
      %v1391 = vsel %vm832, %v1323, 0
      %v1394 = vsel %vm832, %v1324, 0
      %v1397 = vsel %vm832, %v1325, 0
      %v1400 = vsel %vm832, %v1326, 0
      %v1403 = vsel %vm832, %v1327, 0
      %v1406 = vsel %vm832, %v1328, 0
      %v1409 = vsel %vm832, %v1329, 0
      %v1412 = vsel %vm832, %v1330, 0
      %v1415 = vsel %vm832, %v1331, 0
      %v1418 = vsel %vm832, %v1332, 0
      %v1421 = vsel %vm832, %v1333, 0
      %v1424 = vsel %vm832, %v1334, 0
      %v1427 = vsel %vm832, %v1335, 0
      %v1430 = vsel %vm832, %v1336, 0
      %v1433 = vsel %vm832, %v1337, 0
      %v1436 = vsel %vm832, %v1338, 0
      %v1439 = vsel %vm832, %v1339, 0
      %v1442 = vsel %vm832, %v1340, 0
      %v1445 = vsel %vm832, %v1341, 0
      %v1448 = vsel %vm832, %v1342, 0
      %v1451 = vsel %vm832, %v1343, 0
      %1453 = vmatprep.subr.mxu0 0.0
      %1454 = vmatpush1.msra.mxu0 %v1344
      %1455 = vmatprep.subr.mxu0 0.0
      %1456 = vmatpush1.msra.mxu0 0.0
      %1457 = vmatprep.subr.mxu0 0.0
      %1458 = vmatpush1.msra.mxu0 0.0
      %1459 = vmatprep.subr.mxu0 0.0
      %1460 = vmatpush1.msra.mxu0 0.0
      %1461 = vmatprep.subr.mxu0 0.0
      %1462 = vmatpush1.msra.mxu0 0.0
      %1463 = vmatprep.subr.mxu0 0.0
      %1464 = vmatpush1.msra.mxu0 0.0
      %1465 = vmatprep.subr.mxu0 0.0
      %1466 = vmatpush1.msra.mxu0 0.0
      %1467 = vmatprep.subr.mxu0 0.0
      %1468 = vmatpush1.msra.mxu0 0.0
      %1469 = vmatprep.subr.mxu0 0.0
      %1470 = vmatpush1.msra.mxu0 0.0
      %1471 = vmatprep.subr.mxu0 0.0
      %1472 = vmatpush1.msra.mxu0 0.0
      %1473 = vmatprep.subr.mxu0 0.0
      %1474 = vmatpush1.msra.mxu0 0.0
      %1475 = vmatprep.subr.mxu0 0.0
      %1476 = vmatpush1.msra.mxu0 0.0
      %1477 = vmatprep.subr.mxu0 0.0
      %1478 = vmatpush1.msra.mxu0 0.0
      %1479 = vmatprep.subr.mxu0 0.0
      %1480 = vmatpush1.msra.mxu0 0.0
      %1481 = vmatprep.subr.mxu0 0.0
      %1482 = vmatpush1.msra.mxu0 0.0
      %1483 = vmatprep.subr.mxu0 0.0
      %1484 = vmatpush1.msra.mxu0 0.0
      %1485 = vmatprep.subr.mxu0 0.0
      %1486 = vmatpush1.msra.mxu0 0.0
      %1487 = vmatprep.subr.mxu0 0.0
      %1488 = vmatpush1.msra.mxu0 0.0
      %1489 = vmatprep.subr.mxu0 0.0
      %1490 = vmatpush1.msra.mxu0 0.0
      %1491 = vmatprep.subr.mxu0 0.0
      %1492 = vmatpush1.msra.mxu0 0.0
      %1493 = vmatprep.subr.mxu0 0.0
      %1494 = vmatpush1.msra.mxu0 0.0
      %1495 = vmatprep.subr.mxu0 0.0
      %1496 = vmatpush1.msra.mxu0 0.0
      %1497 = vmatprep.subr.mxu0 0.0
      %1498 = vmatpush1.msra.mxu0 0.0
      %1499 = vmatprep.subr.mxu0 0.0
      %1500 = vmatpush1.msra.mxu0 0.0
      %1501 = vmatprep.subr.mxu0 0.0
      %1502 = vmatpush1.msra.mxu0 0.0
      %1503 = vmatprep.subr.mxu0 0.0
      %1504 = vmatpush1.msra.mxu0 0.0
      %1505 = vmatprep.subr.mxu0 0.0
      %1506 = vmatpush1.msra.mxu0 0.0
      %1507 = vmatprep.subr.mxu0 0.0
      %1508 = vmatpush1.msra.mxu0 0.0
      %1509 = vmatprep.subr.mxu0 0.0
      %1510 = vmatpush1.msra.mxu0 0.0
      %1511 = vmatprep.subr.mxu0 0.0
      %1512 = vmatpush1.msra.mxu0 0.0
      %1513 = vmatprep.subr.mxu0 0.0
      %1514 = vmatpush1.msra.mxu0 0.0
      %1515 = vmatprep.subr.mxu0 0.0
      %1516 = vmatpush1.msra.mxu0 0.0
      %1517 = vmatprep.mubr.f32.mxu0 0.0
      %1518 = vmatmul.mubr.f32.gmra.mrb[0].mxu0 %v1346
      %v1519 = vpop.f32.mrb[0].mxu0
      %v1520 = vadd.f32 0.0, %v1519
      %v1521 = vpop.f32.mrb[0].mxu0
      %1522 = vmatprep.mubr.f32.mxu0 0.0
      %1523 = vmatmul.mubr.f32.gmra.mrb[0].mxu0 %v1349
      %v1524 = vpop.f32.mrb[0].mxu0
      %v1525 = vadd.f32 0.0, %v1524
      %v1526 = vpop.f32.mrb[0].mxu0
      %1527 = vmatprep.mubr.f32.mxu0 0.0
      %1528 = vmatmul.mubr.f32.gmra.mrb[0].mxu0 %v1352
      %v1529 = vpop.f32.mrb[0].mxu0
      %v1530 = vadd.f32 0.0, %v1529
      %v1531 = vpop.f32.mrb[0].mxu0
      %1532 = vmatprep.mubr.f32.mxu0 0.0
      %1533 = vmatmul.mubr.f32.gmra.mrb[0].mxu0 %v1355
      %v1534 = vpop.f32.mrb[0].mxu0
      %v1535 = vadd.f32 0.0, %v1534
      %v1536 = vpop.f32.mrb[0].mxu0
      %1537 = vmatprep.mubr.f32.mxu0 0.0
      %1538 = vmatmul.mubr.f32.gmra.mrb[0].mxu0 %v1358
      %v1539 = vpop.f32.mrb[0].mxu0
      %v1540 = vadd.f32 0.0, %v1539
      %v1541 = vpop.f32.mrb[0].mxu0
      %1542 = vmatprep.mubr.f32.mxu0 0.0
      %1543 = vmatmul.mubr.f32.gmra.mrb[0].mxu0 %v1361
      %v1544 = vpop.f32.mrb[0].mxu0
      %v1545 = vadd.f32 0.0, %v1544
      %v1546 = vpop.f32.mrb[0].mxu0
      %1547 = vmatprep.mubr.f32.mxu0 0.0
      %1548 = vmatmul.mubr.f32.gmra.mrb[0].mxu0 %v1364
      %v1549 = vpop.f32.mrb[0].mxu0
      %v1550 = vadd.f32 0.0, %v1549
      %v1551 = vpop.f32.mrb[0].mxu0
      %1552 = vmatprep.mubr.f32.mxu0 0.0
      %1553 = vmatmul.mubr.f32.gmra.mrb[0].mxu0 %v1367
      %v1554 = vpop.f32.mrb[0].mxu0
      %v1555 = vadd.f32 0.0, %v1554
      %v1556 = vpop.f32.mrb[0].mxu0
      %1557 = vmatprep.mubr.f32.mxu0 0.0
      %1558 = vmatmul.mubr.f32.gmra.mrb[0].mxu0 %v1370
      %v1559 = vpop.f32.mrb[0].mxu0
      %v1560 = vadd.f32 0.0, %v1559
      %v1561 = vpop.f32.mrb[0].mxu0
      %1562 = vmatprep.mubr.f32.mxu0 0.0
      %1563 = vmatmul.mubr.f32.gmra.mrb[0].mxu0 %v1373
      %v1564 = vpop.f32.mrb[0].mxu0
      %v1565 = vadd.f32 0.0, %v1564
      %v1566 = vpop.f32.mrb[0].mxu0
      %1567 = vmatprep.mubr.f32.mxu0 0.0
      %1568 = vmatmul.mubr.f32.gmra.mrb[0].mxu0 %v1376
      %v1569 = vpop.f32.mrb[0].mxu0
      %v1570 = vadd.f32 0.0, %v1569
      %v1571 = vpop.f32.mrb[0].mxu0
      %1572 = vmatprep.mubr.f32.mxu0 0.0
      %1573 = vmatmul.mubr.f32.gmra.mrb[0].mxu0 %v1379
      %v1574 = vpop.f32.mrb[0].mxu0
      %v1575 = vadd.f32 0.0, %v1574
      %v1576 = vpop.f32.mrb[0].mxu0
      %1577 = vmatprep.mubr.f32.mxu0 0.0
      %1578 = vmatmul.mubr.f32.gmra.mrb[0].mxu0 %v1382
      %v1579 = vpop.f32.mrb[0].mxu0
      %v1580 = vadd.f32 0.0, %v1579
      %v1581 = vpop.f32.mrb[0].mxu0
      %1582 = vmatprep.mubr.f32.mxu0 0.0
      %1583 = vmatmul.mubr.f32.gmra.mrb[0].mxu0 %v1385
      %v1584 = vpop.f32.mrb[0].mxu0
      %v1585 = vadd.f32 0.0, %v1584
      %v1586 = vpop.f32.mrb[0].mxu0
      %1587 = vmatprep.mubr.f32.mxu0 0.0
      %1588 = vmatmul.mubr.f32.gmra.mrb[0].mxu0 %v1388
      %v1589 = vpop.f32.mrb[0].mxu0
      %v1590 = vadd.f32 0.0, %v1589
      %v1591 = vpop.f32.mrb[0].mxu0
      %1592 = vmatprep.mubr.f32.mxu0 0.0
      %1593 = vmatmul.mubr.f32.gmra.mrb[0].mxu0 %v1391
      %v1594 = vpop.f32.mrb[0].mxu0
      %v1595 = vadd.f32 0.0, %v1594
      %v1596 = vpop.f32.mrb[0].mxu0
      %1597 = vmatprep.mubr.f32.mxu0 0.0
      %1598 = vmatmul.mubr.f32.gmra.mrb[0].mxu0 %v1394
      %v1599 = vpop.f32.mrb[0].mxu0
      %v1600 = vadd.f32 0.0, %v1599
      %v1601 = vpop.f32.mrb[0].mxu0
      %1602 = vmatprep.mubr.f32.mxu0 0.0
      %1603 = vmatmul.mubr.f32.gmra.mrb[0].mxu0 %v1397
      %v1604 = vpop.f32.mrb[0].mxu0
      %v1605 = vadd.f32 0.0, %v1604
      %v1606 = vpop.f32.mrb[0].mxu0
      %1607 = vmatprep.mubr.f32.mxu0 0.0
      %1608 = vmatmul.mubr.f32.gmra.mrb[0].mxu0 %v1400
      %v1609 = vpop.f32.mrb[0].mxu0
      %v1610 = vadd.f32 0.0, %v1609
      %v1611 = vpop.f32.mrb[0].mxu0
      %1612 = vmatprep.mubr.f32.mxu0 0.0
      %1613 = vmatmul.mubr.f32.gmra.mrb[0].mxu0 %v1403
      %v1614 = vpop.f32.mrb[0].mxu0
      %v1615 = vadd.f32 0.0, %v1614
      %v1616 = vpop.f32.mrb[0].mxu0
      %1617 = vmatprep.mubr.f32.mxu0 0.0
      %1618 = vmatmul.mubr.f32.gmra.mrb[0].mxu0 %v1406
      %v1619 = vpop.f32.mrb[0].mxu0
      %v1620 = vadd.f32 0.0, %v1619
      %v1621 = vpop.f32.mrb[0].mxu0
      %1622 = vmatprep.mubr.f32.mxu0 0.0
      %1623 = vmatmul.mubr.f32.gmra.mrb[0].mxu0 %v1409
      %v1624 = vpop.f32.mrb[0].mxu0
      %v1625 = vadd.f32 0.0, %v1624
      %v1626 = vpop.f32.mrb[0].mxu0
      %1627 = vmatprep.mubr.f32.mxu0 0.0
      %1628 = vmatmul.mubr.f32.gmra.mrb[0].mxu0 %v1412
      %v1629 = vpop.f32.mrb[0].mxu0
      %v1630 = vadd.f32 0.0, %v1629
      %v1631 = vpop.f32.mrb[0].mxu0
      %1632 = vmatprep.mubr.f32.mxu0 0.0
      %1633 = vmatmul.mubr.f32.gmra.mrb[0].mxu0 %v1415
      %v1634 = vpop.f32.mrb[0].mxu0
      %v1635 = vadd.f32 0.0, %v1634
      %v1636 = vpop.f32.mrb[0].mxu0
      %1637 = vmatprep.mubr.f32.mxu0 0.0
      %1638 = vmatmul.mubr.f32.gmra.mrb[0].mxu0 %v1418
      %v1639 = vpop.f32.mrb[0].mxu0
      %v1640 = vadd.f32 0.0, %v1639
      %v1641 = vpop.f32.mrb[0].mxu0
      %1642 = vmatprep.mubr.f32.mxu0 0.0
      %1643 = vmatmul.mubr.f32.gmra.mrb[0].mxu0 %v1421
      %v1644 = vpop.f32.mrb[0].mxu0
      %v1645 = vadd.f32 0.0, %v1644
      %v1646 = vpop.f32.mrb[0].mxu0
      %1647 = vmatprep.mubr.f32.mxu0 0.0
      %1648 = vmatmul.mubr.f32.gmra.mrb[0].mxu0 %v1424
      %v1649 = vpop.f32.mrb[0].mxu0
      %v1650 = vadd.f32 0.0, %v1649
      %v1651 = vpop.f32.mrb[0].mxu0
      %1652 = vmatprep.mubr.f32.mxu0 0.0
      %1653 = vmatmul.mubr.f32.gmra.mrb[0].mxu0 %v1427
      %v1654 = vpop.f32.mrb[0].mxu0
      %v1655 = vadd.f32 0.0, %v1654
      %v1656 = vpop.f32.mrb[0].mxu0
      %1657 = vmatprep.mubr.f32.mxu0 0.0
      %1658 = vmatmul.mubr.f32.gmra.mrb[0].mxu0 %v1430
      %v1659 = vpop.f32.mrb[0].mxu0
      %v1660 = vadd.f32 0.0, %v1659
      %v1661 = vpop.f32.mrb[0].mxu0
      %1662 = vmatprep.mubr.f32.mxu0 0.0
      %1663 = vmatmul.mubr.f32.gmra.mrb[0].mxu0 %v1433
      %v1664 = vpop.f32.mrb[0].mxu0
      %v1665 = vadd.f32 0.0, %v1664
      %v1666 = vpop.f32.mrb[0].mxu0
      %1667 = vmatprep.mubr.f32.mxu0 0.0
      %1668 = vmatmul.mubr.f32.gmra.mrb[0].mxu0 %v1436
      %v1669 = vpop.f32.mrb[0].mxu0
      %v1670 = vadd.f32 0.0, %v1669
      %v1671 = vpop.f32.mrb[0].mxu0
      %1672 = vmatprep.mubr.f32.mxu0 0.0
      %1673 = vmatmul.mubr.f32.gmra.mrb[0].mxu0 %v1439
      %v1674 = vpop.f32.mrb[0].mxu0
      %v1675 = vadd.f32 0.0, %v1674
      %v1676 = vpop.f32.mrb[0].mxu0
      %1677 = vmatprep.mubr.f32.mxu0 0.0
      %1678 = vmatmul.mubr.f32.gmra.mrb[0].mxu0 %v1442
      %v1679 = vpop.f32.mrb[0].mxu0
      %v1680 = vadd.f32 0.0, %v1679
      %v1681 = vpop.f32.mrb[0].mxu0
      %1682 = vmatprep.mubr.f32.mxu0 0.0
      %1683 = vmatmul.mubr.f32.gmra.mrb[0].mxu0 %v1445
      %v1684 = vpop.f32.mrb[0].mxu0
      %v1685 = vadd.f32 0.0, %v1684
      %v1686 = vpop.f32.mrb[0].mxu0
      %1687 = vmatprep.mubr.f32.mxu0 0.0
      %1688 = vmatmul.mubr.f32.gmra.mrb[0].mxu0 %v1448
      %v1689 = vpop.f32.mrb[0].mxu0
      %v1690 = vadd.f32 0.0, %v1689
      %v1691 = vpop.f32.mrb[0].mxu0
      %1692 = vmatprep.mubr.f32.mxu0 0.0
      %1693 = vmatmul.mubr.f32.gmra.mrb[0].mxu0 %v1451
      %v1694 = vpop.f32.mrb[0].mxu0
      %v1695 = vadd.f32 0.0, %v1694
      %v1696 = vpop.f32.mrb[0].mxu0
      %1697 = vdwg.mxu0
      %v1698 = vadd.f32 %v1272, %v1520
      %v1699 = vadd.f32 %v1273, %v1525
      %v1700 = vadd.f32 %v1274, %v1530
      %v1701 = vadd.f32 %v1275, %v1535
      %v1702 = vadd.f32 %v1276, %v1540
      %v1703 = vadd.f32 %v1277, %v1545
      %v1704 = vadd.f32 %v1278, %v1550
      %v1705 = vadd.f32 %v1279, %v1555
      %v1706 = vadd.f32 %v1280, %v1560
      %v1707 = vadd.f32 %v1281, %v1565
      %v1708 = vadd.f32 %v1282, %v1570
      %v1709 = vadd.f32 %v1283, %v1575
      %v1710 = vadd.f32 %v1284, %v1580
      %v1711 = vadd.f32 %v1285, %v1585
      %v1712 = vadd.f32 %v1286, %v1590
      %v1713 = vadd.f32 %v1287, %v1595
      %v1714 = vadd.f32 %v1288, %v1600
      %v1715 = vadd.f32 %v1289, %v1605
      %v1716 = vadd.f32 %v1290, %v1610
      %v1717 = vadd.f32 %v1291, %v1615
      %v1718 = vadd.f32 %v1292, %v1620
      %v1719 = vadd.f32 %v1293, %v1625
      %v1720 = vadd.f32 %v1294, %v1630
      %v1721 = vadd.f32 %v1295, %v1635
      %v1722 = vadd.f32 %v1296, %v1640
      %v1723 = vadd.f32 %v1297, %v1645
      %v1724 = vadd.f32 %v1298, %v1650
      %v1725 = vadd.f32 %v1299, %v1655
      %v1726 = vadd.f32 %v1300, %v1660
      %v1727 = vadd.f32 %v1301, %v1665
      %v1728 = vadd.f32 %v1302, %v1670
      %v1729 = vadd.f32 %v1303, %v1675
      %v1730 = vadd.f32 %v1304, %v1680
      %v1731 = vadd.f32 %v1305, %v1685
      %v1732 = vadd.f32 %v1306, %v1690
      %v1733 = vadd.f32 %v1307, %v1695
      %v1734 = vld [vmem:[#allocation2 + $0x2] sm:$0xff]
      %v1735 = vld [vmem:[#allocation2 + $0xa] sm:$0xff]
      %v1736 = vld [vmem:[#allocation2 + $0x12] sm:$0xff]
      %v1737 = vld [vmem:[#allocation2 + $0x1a] sm:$0xff]
      %v1738 = vld [vmem:[#allocation2 + $0x22] sm:$0xff]
      %v1739 = vld [vmem:[#allocation2 + $0x2a] sm:$0xff]
      %v1740 = vld [vmem:[#allocation2 + $0x32] sm:$0xff]
      %v1741 = vld [vmem:[#allocation2 + $0x3a] sm:$0xff]
      %v1742 = vld [vmem:[#allocation2 + $0x42] sm:$0xff]
      %v1743 = vld [vmem:[#allocation2 + $0x4a] sm:$0xff]
      %v1744 = vld [vmem:[#allocation2 + $0x52] sm:$0xff]
      %v1745 = vld [vmem:[#allocation2 + $0x5a] sm:$0xff]
      %v1746 = vld [vmem:[#allocation2 + $0x62] sm:$0xff]
      %v1747 = vld [vmem:[#allocation2 + $0x6a] sm:$0xff]
      %v1748 = vld [vmem:[#allocation2 + $0x72] sm:$0xff]
      %v1749 = vld [vmem:[#allocation2 + $0x7a] sm:$0xff]
      %v1750 = vld [vmem:[#allocation2 + $0x82] sm:$0xff]
      %v1751 = vld [vmem:[#allocation2 + $0x8a] sm:$0xff]
      %v1752 = vld [vmem:[#allocation2 + $0x92] sm:$0xff]
      %v1753 = vld [vmem:[#allocation2 + $0x9a] sm:$0xff]
      %v1754 = vld [vmem:[#allocation2 + $0xa2] sm:$0xff]
      %v1755 = vld [vmem:[#allocation2 + $0xaa] sm:$0xff]
      %v1756 = vld [vmem:[#allocation2 + $0xb2] sm:$0xff]
      %v1757 = vld [vmem:[#allocation2 + $0xba] sm:$0xff]
      %v1758 = vld [vmem:[#allocation2 + $0xc2] sm:$0xff]
      %v1759 = vld [vmem:[#allocation2 + $0xca] sm:$0xff]
      %v1760 = vld [vmem:[#allocation2 + $0xd2] sm:$0xff]
      %v1761 = vld [vmem:[#allocation2 + $0xda] sm:$0xff]
      %v1762 = vld [vmem:[#allocation2 + $0xe2] sm:$0xff]
      %v1763 = vld [vmem:[#allocation2 + $0xea] sm:$0xff]
      %v1764 = vld [vmem:[#allocation2 + $0xf2] sm:$0xff]
      %v1765 = vld [vmem:[#allocation2 + $0xfa] sm:$0xff]
      %v1766 = vld [vmem:[#allocation2 + $0x102] sm:$0xff]
      %v1767 = vld [vmem:[#allocation2 + $0x10a] sm:$0xff]
      %v1768 = vld [vmem:[#allocation2 + $0x112] sm:$0xff]
      %v1769 = vld [vmem:[#allocation2 + $0x11a] sm:$0x3f]
      %v1770 = vld [vmem:[%s7 + $0x10] sm:$0xff]
      %v1772 = vsel %vm832, %v1734, 0
      %v1775 = vsel %vm832, %v1735, 0
      %v1778 = vsel %vm832, %v1736, 0
      %v1781 = vsel %vm832, %v1737, 0
      %v1784 = vsel %vm832, %v1738, 0
      %v1787 = vsel %vm832, %v1739, 0
      %v1790 = vsel %vm832, %v1740, 0
      %v1793 = vsel %vm832, %v1741, 0
      %v1796 = vsel %vm832, %v1742, 0
      %v1799 = vsel %vm832, %v1743, 0
      %v1802 = vsel %vm832, %v1744, 0
      %v1805 = vsel %vm832, %v1745, 0
      %v1808 = vsel %vm832, %v1746, 0
      %v1811 = vsel %vm832, %v1747, 0
      %v1814 = vsel %vm832, %v1748, 0
      %v1817 = vsel %vm832, %v1749, 0
      %v1820 = vsel %vm832, %v1750, 0
      %v1823 = vsel %vm832, %v1751, 0
      %v1826 = vsel %vm832, %v1752, 0
      %v1829 = vsel %vm832, %v1753, 0
      %v1832 = vsel %vm832, %v1754, 0
      %v1835 = vsel %vm832, %v1755, 0
      %v1838 = vsel %vm832, %v1756, 0
      %v1841 = vsel %vm832, %v1757, 0
      %v1844 = vsel %vm832, %v1758, 0
      %v1847 = vsel %vm832, %v1759, 0
      %v1850 = vsel %vm832, %v1760, 0
      %v1853 = vsel %vm832, %v1761, 0
      %v1856 = vsel %vm832, %v1762, 0
      %v1859 = vsel %vm832, %v1763, 0
      %v1862 = vsel %vm832, %v1764, 0
      %v1865 = vsel %vm832, %v1765, 0
      %v1868 = vsel %vm832, %v1766, 0
      %v1871 = vsel %vm832, %v1767, 0
      %v1874 = vsel %vm832, %v1768, 0
      %v1877 = vsel %vm832, %v1769, 0
      %1879 = vmatprep.subr.mxu0 0.0
      %1880 = vmatpush1.msra.mxu0 %v1770
      %1881 = vmatprep.subr.mxu0 0.0
      %1882 = vmatpush1.msra.mxu0 0.0
      %1883 = vmatprep.subr.mxu0 0.0
      %1884 = vmatpush1.msra.mxu0 0.0
      %1885 = vmatprep.subr.mxu0 0.0
      %1886 = vmatpush1.msra.mxu0 0.0
      %1887 = vmatprep.subr.mxu0 0.0
      %1888 = vmatpush1.msra.mxu0 0.0
      %1889 = vmatprep.subr.mxu0 0.0
      %1890 = vmatpush1.msra.mxu0 0.0
      %1891 = vmatprep.subr.mxu0 0.0
      %1892 = vmatpush1.msra.mxu0 0.0
      %1893 = vmatprep.subr.mxu0 0.0
      %1894 = vmatpush1.msra.mxu0 0.0
      %1895 = vmatprep.subr.mxu0 0.0
      %1896 = vmatpush1.msra.mxu0 0.0
      %1897 = vmatprep.subr.mxu0 0.0
      %1898 = vmatpush1.msra.mxu0 0.0
      %1899 = vmatprep.subr.mxu0 0.0
      %1900 = vmatpush1.msra.mxu0 0.0
      %1901 = vmatprep.subr.mxu0 0.0
      %1902 = vmatpush1.msra.mxu0 0.0
      %1903 = vmatprep.subr.mxu0 0.0
      %1904 = vmatpush1.msra.mxu0 0.0
      %1905 = vmatprep.subr.mxu0 0.0
      %1906 = vmatpush1.msra.mxu0 0.0
      %1907 = vmatprep.subr.mxu0 0.0
      %1908 = vmatpush1.msra.mxu0 0.0
      %1909 = vmatprep.subr.mxu0 0.0
      %1910 = vmatpush1.msra.mxu0 0.0
      %1911 = vmatprep.subr.mxu0 0.0
      %1912 = vmatpush1.msra.mxu0 0.0
      %1913 = vmatprep.subr.mxu0 0.0
      %1914 = vmatpush1.msra.mxu0 0.0
      %1915 = vmatprep.subr.mxu0 0.0
      %1916 = vmatpush1.msra.mxu0 0.0
      %1917 = vmatprep.subr.mxu0 0.0
      %1918 = vmatpush1.msra.mxu0 0.0
      %1919 = vmatprep.subr.mxu0 0.0
      %1920 = vmatpush1.msra.mxu0 0.0
      %1921 = vmatprep.subr.mxu0 0.0
      %1922 = vmatpush1.msra.mxu0 0.0
      %1923 = vmatprep.subr.mxu0 0.0
      %1924 = vmatpush1.msra.mxu0 0.0
      %1925 = vmatprep.subr.mxu0 0.0
      %1926 = vmatpush1.msra.mxu0 0.0
      %1927 = vmatprep.subr.mxu0 0.0
      %1928 = vmatpush1.msra.mxu0 0.0
      %1929 = vmatprep.subr.mxu0 0.0
      %1930 = vmatpush1.msra.mxu0 0.0
      %1931 = vmatprep.subr.mxu0 0.0
      %1932 = vmatpush1.msra.mxu0 0.0
      %1933 = vmatprep.subr.mxu0 0.0
      %1934 = vmatpush1.msra.mxu0 0.0
      %1935 = vmatprep.subr.mxu0 0.0
      %1936 = vmatpush1.msra.mxu0 0.0
      %1937 = vmatprep.subr.mxu0 0.0
      %1938 = vmatpush1.msra.mxu0 0.0
      %1939 = vmatprep.subr.mxu0 0.0
      %1940 = vmatpush1.msra.mxu0 0.0
      %1941 = vmatprep.subr.mxu0 0.0
      %1942 = vmatpush1.msra.mxu0 0.0
      %1943 = vmatprep.mubr.f32.mxu0 0.0
      %1944 = vmatmul.mubr.f32.gmra.mrb[0].mxu0 %v1772
      %v1945 = vpop.f32.mrb[0].mxu0
      %v1946 = vadd.f32 0.0, %v1945
      %v1947 = vpop.f32.mrb[0].mxu0
      %1948 = vmatprep.mubr.f32.mxu0 0.0
      %1949 = vmatmul.mubr.f32.gmra.mrb[0].mxu0 %v1775
      %v1950 = vpop.f32.mrb[0].mxu0
      %v1951 = vadd.f32 0.0, %v1950
      %v1952 = vpop.f32.mrb[0].mxu0
      %1953 = vmatprep.mubr.f32.mxu0 0.0
      %1954 = vmatmul.mubr.f32.gmra.mrb[0].mxu0 %v1778
      %v1955 = vpop.f32.mrb[0].mxu0
      %v1956 = vadd.f32 0.0, %v1955
      %v1957 = vpop.f32.mrb[0].mxu0
      %1958 = vmatprep.mubr.f32.mxu0 0.0
      %1959 = vmatmul.mubr.f32.gmra.mrb[0].mxu0 %v1781
      %v1960 = vpop.f32.mrb[0].mxu0
      %v1961 = vadd.f32 0.0, %v1960
      %v1962 = vpop.f32.mrb[0].mxu0
      %1963 = vmatprep.mubr.f32.mxu0 0.0
      %1964 = vmatmul.mubr.f32.gmra.mrb[0].mxu0 %v1784
      %v1965 = vpop.f32.mrb[0].mxu0
      %v1966 = vadd.f32 0.0, %v1965
      %v1967 = vpop.f32.mrb[0].mxu0
      %1968 = vmatprep.mubr.f32.mxu0 0.0
      %1969 = vmatmul.mubr.f32.gmra.mrb[0].mxu0 %v1787
      %v1970 = vpop.f32.mrb[0].mxu0
      %v1971 = vadd.f32 0.0, %v1970
      %v1972 = vpop.f32.mrb[0].mxu0
      %1973 = vmatprep.mubr.f32.mxu0 0.0
      %1974 = vmatmul.mubr.f32.gmra.mrb[0].mxu0 %v1790
      %v1975 = vpop.f32.mrb[0].mxu0
      %v1976 = vadd.f32 0.0, %v1975
      %v1977 = vpop.f32.mrb[0].mxu0
      %1978 = vmatprep.mubr.f32.mxu0 0.0
      %1979 = vmatmul.mubr.f32.gmra.mrb[0].mxu0 %v1793
      %v1980 = vpop.f32.mrb[0].mxu0
      %v1981 = vadd.f32 0.0, %v1980
      %v1982 = vpop.f32.mrb[0].mxu0
      %1983 = vmatprep.mubr.f32.mxu0 0.0
      %1984 = vmatmul.mubr.f32.gmra.mrb[0].mxu0 %v1796
      %v1985 = vpop.f32.mrb[0].mxu0
      %v1986 = vadd.f32 0.0, %v1985
      %v1987 = vpop.f32.mrb[0].mxu0
      %1988 = vmatprep.mubr.f32.mxu0 0.0
      %1989 = vmatmul.mubr.f32.gmra.mrb[0].mxu0 %v1799
      %v1990 = vpop.f32.mrb[0].mxu0
      %v1991 = vadd.f32 0.0, %v1990
      %v1992 = vpop.f32.mrb[0].mxu0
      %1993 = vmatprep.mubr.f32.mxu0 0.0
      %1994 = vmatmul.mubr.f32.gmra.mrb[0].mxu0 %v1802
      %v1995 = vpop.f32.mrb[0].mxu0
      %v1996 = vadd.f32 0.0, %v1995
      %v1997 = vpop.f32.mrb[0].mxu0
      %1998 = vmatprep.mubr.f32.mxu0 0.0
      %1999 = vmatmul.mubr.f32.gmra.mrb[0].mxu0 %v1805
      %v2000 = vpop.f32.mrb[0].mxu0
      %v2001 = vadd.f32 0.0, %v2000
      %v2002 = vpop.f32.mrb[0].mxu0
      %2003 = vmatprep.mubr.f32.mxu0 0.0
      %2004 = vmatmul.mubr.f32.gmra.mrb[0].mxu0 %v1808
      %v2005 = vpop.f32.mrb[0].mxu0
      %v2006 = vadd.f32 0.0, %v2005
      %v2007 = vpop.f32.mrb[0].mxu0
      %2008 = vmatprep.mubr.f32.mxu0 0.0
      %2009 = vmatmul.mubr.f32.gmra.mrb[0].mxu0 %v1811
      %v2010 = vpop.f32.mrb[0].mxu0
      %v2011 = vadd.f32 0.0, %v2010
      %v2012 = vpop.f32.mrb[0].mxu0
      %2013 = vmatprep.mubr.f32.mxu0 0.0
      %2014 = vmatmul.mubr.f32.gmra.mrb[0].mxu0 %v1814
      %v2015 = vpop.f32.mrb[0].mxu0
      %v2016 = vadd.f32 0.0, %v2015
      %v2017 = vpop.f32.mrb[0].mxu0
      %2018 = vmatprep.mubr.f32.mxu0 0.0
      %2019 = vmatmul.mubr.f32.gmra.mrb[0].mxu0 %v1817
      %v2020 = vpop.f32.mrb[0].mxu0
      %v2021 = vadd.f32 0.0, %v2020
      %v2022 = vpop.f32.mrb[0].mxu0
      %2023 = vmatprep.mubr.f32.mxu0 0.0
      %2024 = vmatmul.mubr.f32.gmra.mrb[0].mxu0 %v1820
      %v2025 = vpop.f32.mrb[0].mxu0
      %v2026 = vadd.f32 0.0, %v2025
      %v2027 = vpop.f32.mrb[0].mxu0
      %2028 = vmatprep.mubr.f32.mxu0 0.0
      %2029 = vmatmul.mubr.f32.gmra.mrb[0].mxu0 %v1823
      %v2030 = vpop.f32.mrb[0].mxu0
      %v2031 = vadd.f32 0.0, %v2030
      %v2032 = vpop.f32.mrb[0].mxu0
      %2033 = vmatprep.mubr.f32.mxu0 0.0
      %2034 = vmatmul.mubr.f32.gmra.mrb[0].mxu0 %v1826
      %v2035 = vpop.f32.mrb[0].mxu0
      %v2036 = vadd.f32 0.0, %v2035
      %v2037 = vpop.f32.mrb[0].mxu0
      %2038 = vmatprep.mubr.f32.mxu0 0.0
      %2039 = vmatmul.mubr.f32.gmra.mrb[0].mxu0 %v1829
      %v2040 = vpop.f32.mrb[0].mxu0
      %v2041 = vadd.f32 0.0, %v2040
      %v2042 = vpop.f32.mrb[0].mxu0
      %2043 = vmatprep.mubr.f32.mxu0 0.0
      %2044 = vmatmul.mubr.f32.gmra.mrb[0].mxu0 %v1832
      %v2045 = vpop.f32.mrb[0].mxu0
      %v2046 = vadd.f32 0.0, %v2045
      %v2047 = vpop.f32.mrb[0].mxu0
      %2048 = vmatprep.mubr.f32.mxu0 0.0
      %2049 = vmatmul.mubr.f32.gmra.mrb[0].mxu0 %v1835
      %v2050 = vpop.f32.mrb[0].mxu0
      %v2051 = vadd.f32 0.0, %v2050
      %v2052 = vpop.f32.mrb[0].mxu0
      %2053 = vmatprep.mubr.f32.mxu0 0.0
      %2054 = vmatmul.mubr.f32.gmra.mrb[0].mxu0 %v1838
      %v2055 = vpop.f32.mrb[0].mxu0
      %v2056 = vadd.f32 0.0, %v2055
      %v2057 = vpop.f32.mrb[0].mxu0
      %2058 = vmatprep.mubr.f32.mxu0 0.0
      %2059 = vmatmul.mubr.f32.gmra.mrb[0].mxu0 %v1841
      %v2060 = vpop.f32.mrb[0].mxu0
      %v2061 = vadd.f32 0.0, %v2060
      %v2062 = vpop.f32.mrb[0].mxu0
      %2063 = vmatprep.mubr.f32.mxu0 0.0
      %2064 = vmatmul.mubr.f32.gmra.mrb[0].mxu0 %v1844
      %v2065 = vpop.f32.mrb[0].mxu0
      %v2066 = vadd.f32 0.0, %v2065
      %v2067 = vpop.f32.mrb[0].mxu0
      %2068 = vmatprep.mubr.f32.mxu0 0.0
      %2069 = vmatmul.mubr.f32.gmra.mrb[0].mxu0 %v1847
      %v2070 = vpop.f32.mrb[0].mxu0
      %v2071 = vadd.f32 0.0, %v2070
      %v2072 = vpop.f32.mrb[0].mxu0
      %2073 = vmatprep.mubr.f32.mxu0 0.0
      %2074 = vmatmul.mubr.f32.gmra.mrb[0].mxu0 %v1850
      %v2075 = vpop.f32.mrb[0].mxu0
      %v2076 = vadd.f32 0.0, %v2075
      %v2077 = vpop.f32.mrb[0].mxu0
      %2078 = vmatprep.mubr.f32.mxu0 0.0
      %2079 = vmatmul.mubr.f32.gmra.mrb[0].mxu0 %v1853
      %v2080 = vpop.f32.mrb[0].mxu0
      %v2081 = vadd.f32 0.0, %v2080
      %v2082 = vpop.f32.mrb[0].mxu0
      %2083 = vmatprep.mubr.f32.mxu0 0.0
      %2084 = vmatmul.mubr.f32.gmra.mrb[0].mxu0 %v1856
      %v2085 = vpop.f32.mrb[0].mxu0
      %v2086 = vadd.f32 0.0, %v2085
      %v2087 = vpop.f32.mrb[0].mxu0
      %2088 = vmatprep.mubr.f32.mxu0 0.0
      %2089 = vmatmul.mubr.f32.gmra.mrb[0].mxu0 %v1859
      %v2090 = vpop.f32.mrb[0].mxu0
      %v2091 = vadd.f32 0.0, %v2090
      %v2092 = vpop.f32.mrb[0].mxu0
      %2093 = vmatprep.mubr.f32.mxu0 0.0
      %2094 = vmatmul.mubr.f32.gmra.mrb[0].mxu0 %v1862
      %v2095 = vpop.f32.mrb[0].mxu0
      %v2096 = vadd.f32 0.0, %v2095
      %v2097 = vpop.f32.mrb[0].mxu0
      %2098 = vmatprep.mubr.f32.mxu0 0.0
      %2099 = vmatmul.mubr.f32.gmra.mrb[0].mxu0 %v1865
      %v2100 = vpop.f32.mrb[0].mxu0
      %v2101 = vadd.f32 0.0, %v2100
      %v2102 = vpop.f32.mrb[0].mxu0
      %2103 = vmatprep.mubr.f32.mxu0 0.0
      %2104 = vmatmul.mubr.f32.gmra.mrb[0].mxu0 %v1868
      %v2105 = vpop.f32.mrb[0].mxu0
      %v2106 = vadd.f32 0.0, %v2105
      %v2107 = vpop.f32.mrb[0].mxu0
      %2108 = vmatprep.mubr.f32.mxu0 0.0
      %2109 = vmatmul.mubr.f32.gmra.mrb[0].mxu0 %v1871
      %v2110 = vpop.f32.mrb[0].mxu0
      %v2111 = vadd.f32 0.0, %v2110
      %v2112 = vpop.f32.mrb[0].mxu0
      %2113 = vmatprep.mubr.f32.mxu0 0.0
      %2114 = vmatmul.mubr.f32.gmra.mrb[0].mxu0 %v1874
      %v2115 = vpop.f32.mrb[0].mxu0
      %v2116 = vadd.f32 0.0, %v2115
      %v2117 = vpop.f32.mrb[0].mxu0
      %2118 = vmatprep.mubr.f32.mxu0 0.0
      %2119 = vmatmul.mubr.f32.gmra.mrb[0].mxu0 %v1877
      %v2120 = vpop.f32.mrb[0].mxu0
      %v2121 = vadd.f32 0.0, %v2120
      %v2122 = vpop.f32.mrb[0].mxu0
      %2123 = vdwg.mxu0
      %v2124 = vadd.f32 %v1698, %v1946
      %v2125 = vadd.f32 %v1699, %v1951
      %v2126 = vadd.f32 %v1700, %v1956
      %v2127 = vadd.f32 %v1701, %v1961
      %v2128 = vadd.f32 %v1702, %v1966
      %v2129 = vadd.f32 %v1703, %v1971
      %v2130 = vadd.f32 %v1704, %v1976
      %v2131 = vadd.f32 %v1705, %v1981
      %v2132 = vadd.f32 %v1706, %v1986
      %v2133 = vadd.f32 %v1707, %v1991
      %v2134 = vadd.f32 %v1708, %v1996
      %v2135 = vadd.f32 %v1709, %v2001
      %v2136 = vadd.f32 %v1710, %v2006
      %v2137 = vadd.f32 %v1711, %v2011
      %v2138 = vadd.f32 %v1712, %v2016
      %v2139 = vadd.f32 %v1713, %v2021
      %v2140 = vadd.f32 %v1714, %v2026
      %v2141 = vadd.f32 %v1715, %v2031
      %v2142 = vadd.f32 %v1716, %v2036
      %v2143 = vadd.f32 %v1717, %v2041
      %v2144 = vadd.f32 %v1718, %v2046
      %v2145 = vadd.f32 %v1719, %v2051
      %v2146 = vadd.f32 %v1720, %v2056
      %v2147 = vadd.f32 %v1721, %v2061
      %v2148 = vadd.f32 %v1722, %v2066
      %v2149 = vadd.f32 %v1723, %v2071
      %v2150 = vadd.f32 %v1724, %v2076
      %v2151 = vadd.f32 %v1725, %v2081
      %v2152 = vadd.f32 %v1726, %v2086
      %v2153 = vadd.f32 %v1727, %v2091
      %v2154 = vadd.f32 %v1728, %v2096
      %v2155 = vadd.f32 %v1729, %v2101
      %v2156 = vadd.f32 %v1730, %v2106
      %v2157 = vadd.f32 %v1731, %v2111
      %v2158 = vadd.f32 %v1732, %v2116
      %v2159 = vadd.f32 %v1733, %v2121
      %v2160 = vld [vmem:[#allocation2 + $0x12] sm:$0xff]
      %v2161 = vld [vmem:[#allocation2 + $0x1a] sm:$0xff]
      %v2162 = vld [vmem:[#allocation2 + $0x22] sm:$0xff]
      %v2163 = vld [vmem:[#allocation2 + $0x2a] sm:$0xff]
      %v2164 = vld [vmem:[#allocation2 + $0x32] sm:$0xff]
      %v2165 = vld [vmem:[#allocation2 + $0x3a] sm:$0xff]
      %v2166 = vld [vmem:[#allocation2 + $0x42] sm:$0xff]
      %v2167 = vld [vmem:[#allocation2 + $0x4a] sm:$0xff]
      %v2168 = vld [vmem:[#allocation2 + $0x52] sm:$0xff]
      %v2169 = vld [vmem:[#allocation2 + $0x5a] sm:$0xff]
      %v2170 = vld [vmem:[#allocation2 + $0x62] sm:$0xff]
      %v2171 = vld [vmem:[#allocation2 + $0x6a] sm:$0xff]
      %v2172 = vld [vmem:[#allocation2 + $0x72] sm:$0xff]
      %v2173 = vld [vmem:[#allocation2 + $0x7a] sm:$0xff]
      %v2174 = vld [vmem:[#allocation2 + $0x82] sm:$0xff]
      %v2175 = vld [vmem:[#allocation2 + $0x8a] sm:$0xff]
      %v2176 = vld [vmem:[#allocation2 + $0x92] sm:$0xff]
      %v2177 = vld [vmem:[#allocation2 + $0x9a] sm:$0xff]
      %v2178 = vld [vmem:[#allocation2 + $0xa2] sm:$0xff]
      %v2179 = vld [vmem:[#allocation2 + $0xaa] sm:$0xff]
      %v2180 = vld [vmem:[#allocation2 + $0xb2] sm:$0xff]
      %v2181 = vld [vmem:[#allocation2 + $0xba] sm:$0xff]
      %v2182 = vld [vmem:[#allocation2 + $0xc2] sm:$0xff]
      %v2183 = vld [vmem:[#allocation2 + $0xca] sm:$0xff]
      %v2184 = vld [vmem:[#allocation2 + $0xd2] sm:$0xff]
      %v2185 = vld [vmem:[#allocation2 + $0xda] sm:$0xff]
      %v2186 = vld [vmem:[#allocation2 + $0xe2] sm:$0xff]
      %v2187 = vld [vmem:[#allocation2 + $0xea] sm:$0xff]
      %v2188 = vld [vmem:[#allocation2 + $0xf2] sm:$0xff]
      %v2189 = vld [vmem:[#allocation2 + $0xfa] sm:$0xff]
      %v2190 = vld [vmem:[#allocation2 + $0x102] sm:$0xff]
      %v2191 = vld [vmem:[#allocation2 + $0x10a] sm:$0xff]
      %v2192 = vld [vmem:[#allocation2 + $0x112] sm:$0xff]
      %v2193 = vld [vmem:[#allocation2 + $0x11a] sm:$0xff]
      %v2194 = vld [vmem:[#allocation2 + $0x122] sm:$0xff]
      %v2195 = vld [vmem:[#allocation2 + $0x12a] sm:$0x3f]
      %v2196 = vld [vmem:[%s7 + $0x18] sm:$0xff]
      %v2198 = vsel %vm832, %v2160, 0
      %v2201 = vsel %vm832, %v2161, 0
      %v2204 = vsel %vm832, %v2162, 0
      %v2207 = vsel %vm832, %v2163, 0
      %v2210 = vsel %vm832, %v2164, 0
      %v2213 = vsel %vm832, %v2165, 0
      %v2216 = vsel %vm832, %v2166, 0
      %v2219 = vsel %vm832, %v2167, 0
      %v2222 = vsel %vm832, %v2168, 0
      %v2225 = vsel %vm832, %v2169, 0
      %v2228 = vsel %vm832, %v2170, 0
      %v2231 = vsel %vm832, %v2171, 0
      %v2234 = vsel %vm832, %v2172, 0
      %v2237 = vsel %vm832, %v2173, 0
      %v2240 = vsel %vm832, %v2174, 0
      %v2243 = vsel %vm832, %v2175, 0
      %v2246 = vsel %vm832, %v2176, 0
      %v2249 = vsel %vm832, %v2177, 0
      %v2252 = vsel %vm832, %v2178, 0
      %v2255 = vsel %vm832, %v2179, 0
      %v2258 = vsel %vm832, %v2180, 0
      %v2261 = vsel %vm832, %v2181, 0
      %v2264 = vsel %vm832, %v2182, 0
      %v2267 = vsel %vm832, %v2183, 0
      %v2270 = vsel %vm832, %v2184, 0
      %v2273 = vsel %vm832, %v2185, 0
      %v2276 = vsel %vm832, %v2186, 0
      %v2279 = vsel %vm832, %v2187, 0
      %v2282 = vsel %vm832, %v2188, 0
      %v2285 = vsel %vm832, %v2189, 0
      %v2288 = vsel %vm832, %v2190, 0
      %v2291 = vsel %vm832, %v2191, 0
      %v2294 = vsel %vm832, %v2192, 0
      %v2297 = vsel %vm832, %v2193, 0
      %v2300 = vsel %vm832, %v2194, 0
      %v2303 = vsel %vm832, %v2195, 0
      %2305 = vmatprep.subr.mxu0 0.0
      %2306 = vmatpush1.msra.mxu0 %v2196
      %2307 = vmatprep.subr.mxu0 0.0
      %2308 = vmatpush1.msra.mxu0 0.0
      %2309 = vmatprep.subr.mxu0 0.0
      %2310 = vmatpush1.msra.mxu0 0.0
      %2311 = vmatprep.subr.mxu0 0.0
      %2312 = vmatpush1.msra.mxu0 0.0
      %2313 = vmatprep.subr.mxu0 0.0
      %2314 = vmatpush1.msra.mxu0 0.0
      %2315 = vmatprep.subr.mxu0 0.0
      %2316 = vmatpush1.msra.mxu0 0.0
      %2317 = vmatprep.subr.mxu0 0.0
      %2318 = vmatpush1.msra.mxu0 0.0
      %2319 = vmatprep.subr.mxu0 0.0
      %2320 = vmatpush1.msra.mxu0 0.0
      %2321 = vmatprep.subr.mxu0 0.0
      %2322 = vmatpush1.msra.mxu0 0.0
      %2323 = vmatprep.subr.mxu0 0.0
      %2324 = vmatpush1.msra.mxu0 0.0
      %2325 = vmatprep.subr.mxu0 0.0
      %2326 = vmatpush1.msra.mxu0 0.0
      %2327 = vmatprep.subr.mxu0 0.0
      %2328 = vmatpush1.msra.mxu0 0.0
      %2329 = vmatprep.subr.mxu0 0.0
      %2330 = vmatpush1.msra.mxu0 0.0
      %2331 = vmatprep.subr.mxu0 0.0
      %2332 = vmatpush1.msra.mxu0 0.0
      %2333 = vmatprep.subr.mxu0 0.0
      %2334 = vmatpush1.msra.mxu0 0.0
      %2335 = vmatprep.subr.mxu0 0.0
      %2336 = vmatpush1.msra.mxu0 0.0
      %2337 = vmatprep.subr.mxu0 0.0
      %2338 = vmatpush1.msra.mxu0 0.0
      %2339 = vmatprep.subr.mxu0 0.0
      %2340 = vmatpush1.msra.mxu0 0.0
      %2341 = vmatprep.subr.mxu0 0.0
      %2342 = vmatpush1.msra.mxu0 0.0
      %2343 = vmatprep.subr.mxu0 0.0
      %2344 = vmatpush1.msra.mxu0 0.0
      %2345 = vmatprep.subr.mxu0 0.0
      %2346 = vmatpush1.msra.mxu0 0.0
      %2347 = vmatprep.subr.mxu0 0.0
      %2348 = vmatpush1.msra.mxu0 0.0
      %2349 = vmatprep.subr.mxu0 0.0
      %2350 = vmatpush1.msra.mxu0 0.0
      %2351 = vmatprep.subr.mxu0 0.0
      %2352 = vmatpush1.msra.mxu0 0.0
      %2353 = vmatprep.subr.mxu0 0.0
      %2354 = vmatpush1.msra.mxu0 0.0
      %2355 = vmatprep.subr.mxu0 0.0
      %2356 = vmatpush1.msra.mxu0 0.0
      %2357 = vmatprep.subr.mxu0 0.0
      %2358 = vmatpush1.msra.mxu0 0.0
      %2359 = vmatprep.subr.mxu0 0.0
      %2360 = vmatpush1.msra.mxu0 0.0
      %2361 = vmatprep.subr.mxu0 0.0
      %2362 = vmatpush1.msra.mxu0 0.0
      %2363 = vmatprep.subr.mxu0 0.0
      %2364 = vmatpush1.msra.mxu0 0.0
      %2365 = vmatprep.subr.mxu0 0.0
      %2366 = vmatpush1.msra.mxu0 0.0
      %2367 = vmatprep.subr.mxu0 0.0
      %2368 = vmatpush1.msra.mxu0 0.0
      %2369 = vmatprep.mubr.f32.mxu0 0.0
      %2370 = vmatmul.mubr.f32.gmra.mrb[0].mxu0 %v2198
      %v2371 = vpop.f32.mrb[0].mxu0
      %v2372 = vadd.f32 0.0, %v2371
      %v2373 = vpop.f32.mrb[0].mxu0
      %2374 = vmatprep.mubr.f32.mxu0 0.0
      %2375 = vmatmul.mubr.f32.gmra.mrb[0].mxu0 %v2201
      %v2376 = vpop.f32.mrb[0].mxu0
      %v2377 = vadd.f32 0.0, %v2376
      %v2378 = vpop.f32.mrb[0].mxu0
      %2379 = vmatprep.mubr.f32.mxu0 0.0
      %2380 = vmatmul.mubr.f32.gmra.mrb[0].mxu0 %v2204
      %v2381 = vpop.f32.mrb[0].mxu0
      %v2382 = vadd.f32 0.0, %v2381
      %v2383 = vpop.f32.mrb[0].mxu0
      %2384 = vmatprep.mubr.f32.mxu0 0.0
      %2385 = vmatmul.mubr.f32.gmra.mrb[0].mxu0 %v2207
      %v2386 = vpop.f32.mrb[0].mxu0
      %v2387 = vadd.f32 0.0, %v2386
      %v2388 = vpop.f32.mrb[0].mxu0
      %2389 = vmatprep.mubr.f32.mxu0 0.0
      %2390 = vmatmul.mubr.f32.gmra.mrb[0].mxu0 %v2210
      %v2391 = vpop.f32.mrb[0].mxu0
      %v2392 = vadd.f32 0.0, %v2391
      %v2393 = vpop.f32.mrb[0].mxu0
      %2394 = vmatprep.mubr.f32.mxu0 0.0
      %2395 = vmatmul.mubr.f32.gmra.mrb[0].mxu0 %v2213
      %v2396 = vpop.f32.mrb[0].mxu0
      %v2397 = vadd.f32 0.0, %v2396
      %v2398 = vpop.f32.mrb[0].mxu0
      %2399 = vmatprep.mubr.f32.mxu0 0.0
      %2400 = vmatmul.mubr.f32.gmra.mrb[0].mxu0 %v2216
      %v2401 = vpop.f32.mrb[0].mxu0
      %v2402 = vadd.f32 0.0, %v2401
      %v2403 = vpop.f32.mrb[0].mxu0
      %2404 = vmatprep.mubr.f32.mxu0 0.0
      %2405 = vmatmul.mubr.f32.gmra.mrb[0].mxu0 %v2219
      %v2406 = vpop.f32.mrb[0].mxu0
      %v2407 = vadd.f32 0.0, %v2406
      %v2408 = vpop.f32.mrb[0].mxu0
      %2409 = vmatprep.mubr.f32.mxu0 0.0
      %2410 = vmatmul.mubr.f32.gmra.mrb[0].mxu0 %v2222
      %v2411 = vpop.f32.mrb[0].mxu0
      %v2412 = vadd.f32 0.0, %v2411
      %v2413 = vpop.f32.mrb[0].mxu0
      %2414 = vmatprep.mubr.f32.mxu0 0.0
      %2415 = vmatmul.mubr.f32.gmra.mrb[0].mxu0 %v2225
      %v2416 = vpop.f32.mrb[0].mxu0
      %v2417 = vadd.f32 0.0, %v2416
      %v2418 = vpop.f32.mrb[0].mxu0
      %2419 = vmatprep.mubr.f32.mxu0 0.0
      %2420 = vmatmul.mubr.f32.gmra.mrb[0].mxu0 %v2228
      %v2421 = vpop.f32.mrb[0].mxu0
      %v2422 = vadd.f32 0.0, %v2421
      %v2423 = vpop.f32.mrb[0].mxu0
      %2424 = vmatprep.mubr.f32.mxu0 0.0
      %2425 = vmatmul.mubr.f32.gmra.mrb[0].mxu0 %v2231
      %v2426 = vpop.f32.mrb[0].mxu0
      %v2427 = vadd.f32 0.0, %v2426
      %v2428 = vpop.f32.mrb[0].mxu0
      %2429 = vmatprep.mubr.f32.mxu0 0.0
      %2430 = vmatmul.mubr.f32.gmra.mrb[0].mxu0 %v2234
      %v2431 = vpop.f32.mrb[0].mxu0
      %v2432 = vadd.f32 0.0, %v2431
      %v2433 = vpop.f32.mrb[0].mxu0
      %2434 = vmatprep.mubr.f32.mxu0 0.0
      %2435 = vmatmul.mubr.f32.gmra.mrb[0].mxu0 %v2237
      %v2436 = vpop.f32.mrb[0].mxu0
      %v2437 = vadd.f32 0.0, %v2436
      %v2438 = vpop.f32.mrb[0].mxu0
      %2439 = vmatprep.mubr.f32.mxu0 0.0
      %2440 = vmatmul.mubr.f32.gmra.mrb[0].mxu0 %v2240
      %v2441 = vpop.f32.mrb[0].mxu0
      %v2442 = vadd.f32 0.0, %v2441
      %v2443 = vpop.f32.mrb[0].mxu0
      %2444 = vmatprep.mubr.f32.mxu0 0.0
      %2445 = vmatmul.mubr.f32.gmra.mrb[0].mxu0 %v2243
      %v2446 = vpop.f32.mrb[0].mxu0
      %v2447 = vadd.f32 0.0, %v2446
      %v2448 = vpop.f32.mrb[0].mxu0
      %2449 = vmatprep.mubr.f32.mxu0 0.0
      %2450 = vmatmul.mubr.f32.gmra.mrb[0].mxu0 %v2246
      %v2451 = vpop.f32.mrb[0].mxu0
      %v2452 = vadd.f32 0.0, %v2451
      %v2453 = vpop.f32.mrb[0].mxu0
      %2454 = vmatprep.mubr.f32.mxu0 0.0
      %2455 = vmatmul.mubr.f32.gmra.mrb[0].mxu0 %v2249
      %v2456 = vpop.f32.mrb[0].mxu0
      %v2457 = vadd.f32 0.0, %v2456
      %v2458 = vpop.f32.mrb[0].mxu0
      %2459 = vmatprep.mubr.f32.mxu0 0.0
      %2460 = vmatmul.mubr.f32.gmra.mrb[0].mxu0 %v2252
      %v2461 = vpop.f32.mrb[0].mxu0
      %v2462 = vadd.f32 0.0, %v2461
      %v2463 = vpop.f32.mrb[0].mxu0
      %2464 = vmatprep.mubr.f32.mxu0 0.0
      %2465 = vmatmul.mubr.f32.gmra.mrb[0].mxu0 %v2255
      %v2466 = vpop.f32.mrb[0].mxu0
      %v2467 = vadd.f32 0.0, %v2466
      %v2468 = vpop.f32.mrb[0].mxu0
      %2469 = vmatprep.mubr.f32.mxu0 0.0
      %2470 = vmatmul.mubr.f32.gmra.mrb[0].mxu0 %v2258
      %v2471 = vpop.f32.mrb[0].mxu0
      %v2472 = vadd.f32 0.0, %v2471
      %v2473 = vpop.f32.mrb[0].mxu0
      %2474 = vmatprep.mubr.f32.mxu0 0.0
      %2475 = vmatmul.mubr.f32.gmra.mrb[0].mxu0 %v2261
      %v2476 = vpop.f32.mrb[0].mxu0
      %v2477 = vadd.f32 0.0, %v2476
      %v2478 = vpop.f32.mrb[0].mxu0
      %2479 = vmatprep.mubr.f32.mxu0 0.0
      %2480 = vmatmul.mubr.f32.gmra.mrb[0].mxu0 %v2264
      %v2481 = vpop.f32.mrb[0].mxu0
      %v2482 = vadd.f32 0.0, %v2481
      %v2483 = vpop.f32.mrb[0].mxu0
      %2484 = vmatprep.mubr.f32.mxu0 0.0
      %2485 = vmatmul.mubr.f32.gmra.mrb[0].mxu0 %v2267
      %v2486 = vpop.f32.mrb[0].mxu0
      %v2487 = vadd.f32 0.0, %v2486
      %v2488 = vpop.f32.mrb[0].mxu0
      %2489 = vmatprep.mubr.f32.mxu0 0.0
      %2490 = vmatmul.mubr.f32.gmra.mrb[0].mxu0 %v2270
      %v2491 = vpop.f32.mrb[0].mxu0
      %v2492 = vadd.f32 0.0, %v2491
      %v2493 = vpop.f32.mrb[0].mxu0
      %2494 = vmatprep.mubr.f32.mxu0 0.0
      %2495 = vmatmul.mubr.f32.gmra.mrb[0].mxu0 %v2273
      %v2496 = vpop.f32.mrb[0].mxu0
      %v2497 = vadd.f32 0.0, %v2496
      %v2498 = vpop.f32.mrb[0].mxu0
      %2499 = vmatprep.mubr.f32.mxu0 0.0
      %2500 = vmatmul.mubr.f32.gmra.mrb[0].mxu0 %v2276
      %v2501 = vpop.f32.mrb[0].mxu0
      %v2502 = vadd.f32 0.0, %v2501
      %v2503 = vpop.f32.mrb[0].mxu0
      %2504 = vmatprep.mubr.f32.mxu0 0.0
      %2505 = vmatmul.mubr.f32.gmra.mrb[0].mxu0 %v2279
      %v2506 = vpop.f32.mrb[0].mxu0
      %v2507 = vadd.f32 0.0, %v2506
      %v2508 = vpop.f32.mrb[0].mxu0
      %2509 = vmatprep.mubr.f32.mxu0 0.0
      %2510 = vmatmul.mubr.f32.gmra.mrb[0].mxu0 %v2282
      %v2511 = vpop.f32.mrb[0].mxu0
      %v2512 = vadd.f32 0.0, %v2511
      %v2513 = vpop.f32.mrb[0].mxu0
      %2514 = vmatprep.mubr.f32.mxu0 0.0
      %2515 = vmatmul.mubr.f32.gmra.mrb[0].mxu0 %v2285
      %v2516 = vpop.f32.mrb[0].mxu0
      %v2517 = vadd.f32 0.0, %v2516
      %v2518 = vpop.f32.mrb[0].mxu0
      %2519 = vmatprep.mubr.f32.mxu0 0.0
      %2520 = vmatmul.mubr.f32.gmra.mrb[0].mxu0 %v2288
      %v2521 = vpop.f32.mrb[0].mxu0
      %v2522 = vadd.f32 0.0, %v2521
      %v2523 = vpop.f32.mrb[0].mxu0
      %2524 = vmatprep.mubr.f32.mxu0 0.0
      %2525 = vmatmul.mubr.f32.gmra.mrb[0].mxu0 %v2291
      %v2526 = vpop.f32.mrb[0].mxu0
      %v2527 = vadd.f32 0.0, %v2526
      %v2528 = vpop.f32.mrb[0].mxu0
      %2529 = vmatprep.mubr.f32.mxu0 0.0
      %2530 = vmatmul.mubr.f32.gmra.mrb[0].mxu0 %v2294
      %v2531 = vpop.f32.mrb[0].mxu0
      %v2532 = vadd.f32 0.0, %v2531
      %v2533 = vpop.f32.mrb[0].mxu0
      %2534 = vmatprep.mubr.f32.mxu0 0.0
      %2535 = vmatmul.mubr.f32.gmra.mrb[0].mxu0 %v2297
      %v2536 = vpop.f32.mrb[0].mxu0
      %v2537 = vadd.f32 0.0, %v2536
      %v2538 = vpop.f32.mrb[0].mxu0
      %2539 = vmatprep.mubr.f32.mxu0 0.0
      %2540 = vmatmul.mubr.f32.gmra.mrb[0].mxu0 %v2300
      %v2541 = vpop.f32.mrb[0].mxu0
      %v2542 = vadd.f32 0.0, %v2541
      %v2543 = vpop.f32.mrb[0].mxu0
      %2544 = vmatprep.mubr.f32.mxu0 0.0
      %2545 = vmatmul.mubr.f32.gmra.mrb[0].mxu0 %v2303
      %v2546 = vpop.f32.mrb[0].mxu0
      %v2547 = vadd.f32 0.0, %v2546
      %v2548 = vpop.f32.mrb[0].mxu0
      %2549 = vdwg.mxu0
      %v2550 = vadd.f32 %v2124, %v2372
      %v2551 = vadd.f32 %v2125, %v2377
      %v2552 = vadd.f32 %v2126, %v2382
      %v2553 = vadd.f32 %v2127, %v2387
      %v2554 = vadd.f32 %v2128, %v2392
      %v2555 = vadd.f32 %v2129, %v2397
      %v2556 = vadd.f32 %v2130, %v2402
      %v2557 = vadd.f32 %v2131, %v2407
      %v2558 = vadd.f32 %v2132, %v2412
      %v2559 = vadd.f32 %v2133, %v2417
      %v2560 = vadd.f32 %v2134, %v2422
      %v2561 = vadd.f32 %v2135, %v2427
      %v2562 = vadd.f32 %v2136, %v2432
      %v2563 = vadd.f32 %v2137, %v2437
      %v2564 = vadd.f32 %v2138, %v2442
      %v2565 = vadd.f32 %v2139, %v2447
      %v2566 = vadd.f32 %v2140, %v2452
      %v2567 = vadd.f32 %v2141, %v2457
      %v2568 = vadd.f32 %v2142, %v2462
      %v2569 = vadd.f32 %v2143, %v2467
      %v2570 = vadd.f32 %v2144, %v2472
      %v2571 = vadd.f32 %v2145, %v2477
      %v2572 = vadd.f32 %v2146, %v2482
      %v2573 = vadd.f32 %v2147, %v2487
      %v2574 = vadd.f32 %v2148, %v2492
      %v2575 = vadd.f32 %v2149, %v2497
      %v2576 = vadd.f32 %v2150, %v2502
      %v2577 = vadd.f32 %v2151, %v2507
      %v2578 = vadd.f32 %v2152, %v2512
      %v2579 = vadd.f32 %v2153, %v2517
      %v2580 = vadd.f32 %v2154, %v2522
      %v2581 = vadd.f32 %v2155, %v2527
      %v2582 = vadd.f32 %v2156, %v2532
      %v2583 = vadd.f32 %v2157, %v2537
      %v2584 = vadd.f32 %v2158, %v2542
      %v2585 = vadd.f32 %v2159, %v2547
      %v2586 = vld [vmem:[#allocation2 + $0x13] sm:$0xff]
      %v2587 = vld [vmem:[#allocation2 + $0x1b] sm:$0xff]
      %v2588 = vld [vmem:[#allocation2 + $0x23] sm:$0xff]
      %v2589 = vld [vmem:[#allocation2 + $0x2b] sm:$0xff]
      %v2590 = vld [vmem:[#allocation2 + $0x33] sm:$0xff]
      %v2591 = vld [vmem:[#allocation2 + $0x3b] sm:$0xff]
      %v2592 = vld [vmem:[#allocation2 + $0x43] sm:$0xff]
      %v2593 = vld [vmem:[#allocation2 + $0x4b] sm:$0xff]
      %v2594 = vld [vmem:[#allocation2 + $0x53] sm:$0xff]
      %v2595 = vld [vmem:[#allocation2 + $0x5b] sm:$0xff]
      %v2596 = vld [vmem:[#allocation2 + $0x63] sm:$0xff]
      %v2597 = vld [vmem:[#allocation2 + $0x6b] sm:$0xff]
      %v2598 = vld [vmem:[#allocation2 + $0x73] sm:$0xff]
      %v2599 = vld [vmem:[#allocation2 + $0x7b] sm:$0xff]
      %v2600 = vld [vmem:[#allocation2 + $0x83] sm:$0xff]
      %v2601 = vld [vmem:[#allocation2 + $0x8b] sm:$0xff]
      %v2602 = vld [vmem:[#allocation2 + $0x93] sm:$0xff]
      %v2603 = vld [vmem:[#allocation2 + $0x9b] sm:$0xff]
      %v2604 = vld [vmem:[#allocation2 + $0xa3] sm:$0xff]
      %v2605 = vld [vmem:[#allocation2 + $0xab] sm:$0xff]
      %v2606 = vld [vmem:[#allocation2 + $0xb3] sm:$0xff]
      %v2607 = vld [vmem:[#allocation2 + $0xbb] sm:$0xff]
      %v2608 = vld [vmem:[#allocation2 + $0xc3] sm:$0xff]
      %v2609 = vld [vmem:[#allocation2 + $0xcb] sm:$0xff]
      %v2610 = vld [vmem:[#allocation2 + $0xd3] sm:$0xff]
      %v2611 = vld [vmem:[#allocation2 + $0xdb] sm:$0xff]
      %v2612 = vld [vmem:[#allocation2 + $0xe3] sm:$0xff]
      %v2613 = vld [vmem:[#allocation2 + $0xeb] sm:$0xff]
      %v2614 = vld [vmem:[#allocation2 + $0xf3] sm:$0xff]
      %v2615 = vld [vmem:[#allocation2 + $0xfb] sm:$0xff]
      %v2616 = vld [vmem:[#allocation2 + $0x103] sm:$0xff]
      %v2617 = vld [vmem:[#allocation2 + $0x10b] sm:$0xff]
      %v2618 = vld [vmem:[#allocation2 + $0x113] sm:$0xff]
      %v2619 = vld [vmem:[#allocation2 + $0x11b] sm:$0xff]
      %v2620 = vld [vmem:[#allocation2 + $0x123] sm:$0xff]
      %v2621 = vld [vmem:[#allocation2 + $0x12b] sm:$0x3f]
      %v2622 = vld [vmem:[%s7 + $0x20] sm:$0xff]
      %v2624 = vsel %vm832, %v2586, 0
      %v2627 = vsel %vm832, %v2587, 0
      %v2630 = vsel %vm832, %v2588, 0
      %v2633 = vsel %vm832, %v2589, 0
      %v2636 = vsel %vm832, %v2590, 0
      %v2639 = vsel %vm832, %v2591, 0
      %v2642 = vsel %vm832, %v2592, 0
      %v2645 = vsel %vm832, %v2593, 0
      %v2648 = vsel %vm832, %v2594, 0
      %v2651 = vsel %vm832, %v2595, 0
      %v2654 = vsel %vm832, %v2596, 0
      %v2657 = vsel %vm832, %v2597, 0
      %v2660 = vsel %vm832, %v2598, 0
      %v2663 = vsel %vm832, %v2599, 0
      %v2666 = vsel %vm832, %v2600, 0
      %v2669 = vsel %vm832, %v2601, 0
      %v2672 = vsel %vm832, %v2602, 0
      %v2675 = vsel %vm832, %v2603, 0
      %v2678 = vsel %vm832, %v2604, 0
      %v2681 = vsel %vm832, %v2605, 0
      %v2684 = vsel %vm832, %v2606, 0
      %v2687 = vsel %vm832, %v2607, 0
      %v2690 = vsel %vm832, %v2608, 0
      %v2693 = vsel %vm832, %v2609, 0
      %v2696 = vsel %vm832, %v2610, 0
      %v2699 = vsel %vm832, %v2611, 0
      %v2702 = vsel %vm832, %v2612, 0
      %v2705 = vsel %vm832, %v2613, 0
      %v2708 = vsel %vm832, %v2614, 0
      %v2711 = vsel %vm832, %v2615, 0
      %v2714 = vsel %vm832, %v2616, 0
      %v2717 = vsel %vm832, %v2617, 0
      %v2720 = vsel %vm832, %v2618, 0
      %v2723 = vsel %vm832, %v2619, 0
      %v2726 = vsel %vm832, %v2620, 0
      %v2729 = vsel %vm832, %v2621, 0
      %2731 = vmatprep.subr.mxu0 0.0
      %2732 = vmatpush1.msra.mxu0 %v2622
      %2733 = vmatprep.subr.mxu0 0.0
      %2734 = vmatpush1.msra.mxu0 0.0
      %2735 = vmatprep.subr.mxu0 0.0
      %2736 = vmatpush1.msra.mxu0 0.0
      %2737 = vmatprep.subr.mxu0 0.0
      %2738 = vmatpush1.msra.mxu0 0.0
      %2739 = vmatprep.subr.mxu0 0.0
      %2740 = vmatpush1.msra.mxu0 0.0
      %2741 = vmatprep.subr.mxu0 0.0
      %2742 = vmatpush1.msra.mxu0 0.0
      %2743 = vmatprep.subr.mxu0 0.0
      %2744 = vmatpush1.msra.mxu0 0.0
      %2745 = vmatprep.subr.mxu0 0.0
      %2746 = vmatpush1.msra.mxu0 0.0
      %2747 = vmatprep.subr.mxu0 0.0
      %2748 = vmatpush1.msra.mxu0 0.0
      %2749 = vmatprep.subr.mxu0 0.0
      %2750 = vmatpush1.msra.mxu0 0.0
      %2751 = vmatprep.subr.mxu0 0.0
      %2752 = vmatpush1.msra.mxu0 0.0
      %2753 = vmatprep.subr.mxu0 0.0
      %2754 = vmatpush1.msra.mxu0 0.0
      %2755 = vmatprep.subr.mxu0 0.0
      %2756 = vmatpush1.msra.mxu0 0.0
      %2757 = vmatprep.subr.mxu0 0.0
      %2758 = vmatpush1.msra.mxu0 0.0
      %2759 = vmatprep.subr.mxu0 0.0
      %2760 = vmatpush1.msra.mxu0 0.0
      %2761 = vmatprep.subr.mxu0 0.0
      %2762 = vmatpush1.msra.mxu0 0.0
      %2763 = vmatprep.subr.mxu0 0.0
      %2764 = vmatpush1.msra.mxu0 0.0
      %2765 = vmatprep.subr.mxu0 0.0
      %2766 = vmatpush1.msra.mxu0 0.0
      %2767 = vmatprep.subr.mxu0 0.0
      %2768 = vmatpush1.msra.mxu0 0.0
      %2769 = vmatprep.subr.mxu0 0.0
      %2770 = vmatpush1.msra.mxu0 0.0
      %2771 = vmatprep.subr.mxu0 0.0
      %2772 = vmatpush1.msra.mxu0 0.0
      %2773 = vmatprep.subr.mxu0 0.0
      %2774 = vmatpush1.msra.mxu0 0.0
      %2775 = vmatprep.subr.mxu0 0.0
      %2776 = vmatpush1.msra.mxu0 0.0
      %2777 = vmatprep.subr.mxu0 0.0
      %2778 = vmatpush1.msra.mxu0 0.0
      %2779 = vmatprep.subr.mxu0 0.0
      %2780 = vmatpush1.msra.mxu0 0.0
      %2781 = vmatprep.subr.mxu0 0.0
      %2782 = vmatpush1.msra.mxu0 0.0
      %2783 = vmatprep.subr.mxu0 0.0
      %2784 = vmatpush1.msra.mxu0 0.0
      %2785 = vmatprep.subr.mxu0 0.0
      %2786 = vmatpush1.msra.mxu0 0.0
      %2787 = vmatprep.subr.mxu0 0.0
      %2788 = vmatpush1.msra.mxu0 0.0
      %2789 = vmatprep.subr.mxu0 0.0
      %2790 = vmatpush1.msra.mxu0 0.0
      %2791 = vmatprep.subr.mxu0 0.0
      %2792 = vmatpush1.msra.mxu0 0.0
      %2793 = vmatprep.subr.mxu0 0.0
      %2794 = vmatpush1.msra.mxu0 0.0
      %2795 = vmatprep.mubr.f32.mxu0 0.0
      %2796 = vmatmul.mubr.f32.gmra.mrb[0].mxu0 %v2624
      %v2797 = vpop.f32.mrb[0].mxu0
      %v2798 = vadd.f32 0.0, %v2797
      %v2799 = vpop.f32.mrb[0].mxu0
      %2800 = vmatprep.mubr.f32.mxu0 0.0
      %2801 = vmatmul.mubr.f32.gmra.mrb[0].mxu0 %v2627
      %v2802 = vpop.f32.mrb[0].mxu0
      %v2803 = vadd.f32 0.0, %v2802
      %v2804 = vpop.f32.mrb[0].mxu0
      %2805 = vmatprep.mubr.f32.mxu0 0.0
      %2806 = vmatmul.mubr.f32.gmra.mrb[0].mxu0 %v2630
      %v2807 = vpop.f32.mrb[0].mxu0
      %v2808 = vadd.f32 0.0, %v2807
      %v2809 = vpop.f32.mrb[0].mxu0
      %2810 = vmatprep.mubr.f32.mxu0 0.0
      %2811 = vmatmul.mubr.f32.gmra.mrb[0].mxu0 %v2633
      %v2812 = vpop.f32.mrb[0].mxu0
      %v2813 = vadd.f32 0.0, %v2812
      %v2814 = vpop.f32.mrb[0].mxu0
      %2815 = vmatprep.mubr.f32.mxu0 0.0
      %2816 = vmatmul.mubr.f32.gmra.mrb[0].mxu0 %v2636
      %v2817 = vpop.f32.mrb[0].mxu0
      %v2818 = vadd.f32 0.0, %v2817
      %v2819 = vpop.f32.mrb[0].mxu0
      %2820 = vmatprep.mubr.f32.mxu0 0.0
      %2821 = vmatmul.mubr.f32.gmra.mrb[0].mxu0 %v2639
      %v2822 = vpop.f32.mrb[0].mxu0
      %v2823 = vadd.f32 0.0, %v2822
      %v2824 = vpop.f32.mrb[0].mxu0
      %2825 = vmatprep.mubr.f32.mxu0 0.0
      %2826 = vmatmul.mubr.f32.gmra.mrb[0].mxu0 %v2642
      %v2827 = vpop.f32.mrb[0].mxu0
      %v2828 = vadd.f32 0.0, %v2827
      %v2829 = vpop.f32.mrb[0].mxu0
      %2830 = vmatprep.mubr.f32.mxu0 0.0
      %2831 = vmatmul.mubr.f32.gmra.mrb[0].mxu0 %v2645
      %v2832 = vpop.f32.mrb[0].mxu0
      %v2833 = vadd.f32 0.0, %v2832
      %v2834 = vpop.f32.mrb[0].mxu0
      %2835 = vmatprep.mubr.f32.mxu0 0.0
      %2836 = vmatmul.mubr.f32.gmra.mrb[0].mxu0 %v2648
      %v2837 = vpop.f32.mrb[0].mxu0
      %v2838 = vadd.f32 0.0, %v2837
      %v2839 = vpop.f32.mrb[0].mxu0
      %2840 = vmatprep.mubr.f32.mxu0 0.0
      %2841 = vmatmul.mubr.f32.gmra.mrb[0].mxu0 %v2651
      %v2842 = vpop.f32.mrb[0].mxu0
      %v2843 = vadd.f32 0.0, %v2842
      %v2844 = vpop.f32.mrb[0].mxu0
      %2845 = vmatprep.mubr.f32.mxu0 0.0
      %2846 = vmatmul.mubr.f32.gmra.mrb[0].mxu0 %v2654
      %v2847 = vpop.f32.mrb[0].mxu0
      %v2848 = vadd.f32 0.0, %v2847
      %v2849 = vpop.f32.mrb[0].mxu0
      %2850 = vmatprep.mubr.f32.mxu0 0.0
      %2851 = vmatmul.mubr.f32.gmra.mrb[0].mxu0 %v2657
      %v2852 = vpop.f32.mrb[0].mxu0
      %v2853 = vadd.f32 0.0, %v2852
      %v2854 = vpop.f32.mrb[0].mxu0
      %2855 = vmatprep.mubr.f32.mxu0 0.0
      %2856 = vmatmul.mubr.f32.gmra.mrb[0].mxu0 %v2660
      %v2857 = vpop.f32.mrb[0].mxu0
      %v2858 = vadd.f32 0.0, %v2857
      %v2859 = vpop.f32.mrb[0].mxu0
      %2860 = vmatprep.mubr.f32.mxu0 0.0
      %2861 = vmatmul.mubr.f32.gmra.mrb[0].mxu0 %v2663
      %v2862 = vpop.f32.mrb[0].mxu0
      %v2863 = vadd.f32 0.0, %v2862
      %v2864 = vpop.f32.mrb[0].mxu0
      %2865 = vmatprep.mubr.f32.mxu0 0.0
      %2866 = vmatmul.mubr.f32.gmra.mrb[0].mxu0 %v2666
      %v2867 = vpop.f32.mrb[0].mxu0
      %v2868 = vadd.f32 0.0, %v2867
      %v2869 = vpop.f32.mrb[0].mxu0
      %2870 = vmatprep.mubr.f32.mxu0 0.0
      %2871 = vmatmul.mubr.f32.gmra.mrb[0].mxu0 %v2669
      %v2872 = vpop.f32.mrb[0].mxu0
      %v2873 = vadd.f32 0.0, %v2872
      %v2874 = vpop.f32.mrb[0].mxu0
      %2875 = vmatprep.mubr.f32.mxu0 0.0
      %2876 = vmatmul.mubr.f32.gmra.mrb[0].mxu0 %v2672
      %v2877 = vpop.f32.mrb[0].mxu0
      %v2878 = vadd.f32 0.0, %v2877
      %v2879 = vpop.f32.mrb[0].mxu0
      %2880 = vmatprep.mubr.f32.mxu0 0.0
      %2881 = vmatmul.mubr.f32.gmra.mrb[0].mxu0 %v2675
      %v2882 = vpop.f32.mrb[0].mxu0
      %v2883 = vadd.f32 0.0, %v2882
      %v2884 = vpop.f32.mrb[0].mxu0
      %2885 = vmatprep.mubr.f32.mxu0 0.0
      %2886 = vmatmul.mubr.f32.gmra.mrb[0].mxu0 %v2678
      %v2887 = vpop.f32.mrb[0].mxu0
      %v2888 = vadd.f32 0.0, %v2887
      %v2889 = vpop.f32.mrb[0].mxu0
      %2890 = vmatprep.mubr.f32.mxu0 0.0
      %2891 = vmatmul.mubr.f32.gmra.mrb[0].mxu0 %v2681
      %v2892 = vpop.f32.mrb[0].mxu0
      %v2893 = vadd.f32 0.0, %v2892
      %v2894 = vpop.f32.mrb[0].mxu0
      %2895 = vmatprep.mubr.f32.mxu0 0.0
      %2896 = vmatmul.mubr.f32.gmra.mrb[0].mxu0 %v2684
      %v2897 = vpop.f32.mrb[0].mxu0
      %v2898 = vadd.f32 0.0, %v2897
      %v2899 = vpop.f32.mrb[0].mxu0
      %2900 = vmatprep.mubr.f32.mxu0 0.0
      %2901 = vmatmul.mubr.f32.gmra.mrb[0].mxu0 %v2687
      %v2902 = vpop.f32.mrb[0].mxu0
      %v2903 = vadd.f32 0.0, %v2902
      %v2904 = vpop.f32.mrb[0].mxu0
      %2905 = vmatprep.mubr.f32.mxu0 0.0
      %2906 = vmatmul.mubr.f32.gmra.mrb[0].mxu0 %v2690
      %v2907 = vpop.f32.mrb[0].mxu0
      %v2908 = vadd.f32 0.0, %v2907
      %v2909 = vpop.f32.mrb[0].mxu0
      %2910 = vmatprep.mubr.f32.mxu0 0.0
      %2911 = vmatmul.mubr.f32.gmra.mrb[0].mxu0 %v2693
      %v2912 = vpop.f32.mrb[0].mxu0
      %v2913 = vadd.f32 0.0, %v2912
      %v2914 = vpop.f32.mrb[0].mxu0
      %2915 = vmatprep.mubr.f32.mxu0 0.0
      %2916 = vmatmul.mubr.f32.gmra.mrb[0].mxu0 %v2696
      %v2917 = vpop.f32.mrb[0].mxu0
      %v2918 = vadd.f32 0.0, %v2917
      %v2919 = vpop.f32.mrb[0].mxu0
      %2920 = vmatprep.mubr.f32.mxu0 0.0
      %2921 = vmatmul.mubr.f32.gmra.mrb[0].mxu0 %v2699
      %v2922 = vpop.f32.mrb[0].mxu0
      %v2923 = vadd.f32 0.0, %v2922
      %v2924 = vpop.f32.mrb[0].mxu0
      %2925 = vmatprep.mubr.f32.mxu0 0.0
      %2926 = vmatmul.mubr.f32.gmra.mrb[0].mxu0 %v2702
      %v2927 = vpop.f32.mrb[0].mxu0
      %v2928 = vadd.f32 0.0, %v2927
      %v2929 = vpop.f32.mrb[0].mxu0
      %2930 = vmatprep.mubr.f32.mxu0 0.0
      %2931 = vmatmul.mubr.f32.gmra.mrb[0].mxu0 %v2705
      %v2932 = vpop.f32.mrb[0].mxu0
      %v2933 = vadd.f32 0.0, %v2932
      %v2934 = vpop.f32.mrb[0].mxu0
      %2935 = vmatprep.mubr.f32.mxu0 0.0
      %2936 = vmatmul.mubr.f32.gmra.mrb[0].mxu0 %v2708
      %v2937 = vpop.f32.mrb[0].mxu0
      %v2938 = vadd.f32 0.0, %v2937
      %v2939 = vpop.f32.mrb[0].mxu0
      %2940 = vmatprep.mubr.f32.mxu0 0.0
      %2941 = vmatmul.mubr.f32.gmra.mrb[0].mxu0 %v2711
      %v2942 = vpop.f32.mrb[0].mxu0
      %v2943 = vadd.f32 0.0, %v2942
      %v2944 = vpop.f32.mrb[0].mxu0
      %2945 = vmatprep.mubr.f32.mxu0 0.0
      %2946 = vmatmul.mubr.f32.gmra.mrb[0].mxu0 %v2714
      %v2947 = vpop.f32.mrb[0].mxu0
      %v2948 = vadd.f32 0.0, %v2947
      %v2949 = vpop.f32.mrb[0].mxu0
      %2950 = vmatprep.mubr.f32.mxu0 0.0
      %2951 = vmatmul.mubr.f32.gmra.mrb[0].mxu0 %v2717
      %v2952 = vpop.f32.mrb[0].mxu0
      %v2953 = vadd.f32 0.0, %v2952
      %v2954 = vpop.f32.mrb[0].mxu0
      %2955 = vmatprep.mubr.f32.mxu0 0.0
      %2956 = vmatmul.mubr.f32.gmra.mrb[0].mxu0 %v2720
      %v2957 = vpop.f32.mrb[0].mxu0
      %v2958 = vadd.f32 0.0, %v2957
      %v2959 = vpop.f32.mrb[0].mxu0
      %2960 = vmatprep.mubr.f32.mxu0 0.0
      %2961 = vmatmul.mubr.f32.gmra.mrb[0].mxu0 %v2723
      %v2962 = vpop.f32.mrb[0].mxu0
      %v2963 = vadd.f32 0.0, %v2962
      %v2964 = vpop.f32.mrb[0].mxu0
      %2965 = vmatprep.mubr.f32.mxu0 0.0
      %2966 = vmatmul.mubr.f32.gmra.mrb[0].mxu0 %v2726
      %v2967 = vpop.f32.mrb[0].mxu0
      %v2968 = vadd.f32 0.0, %v2967
      %v2969 = vpop.f32.mrb[0].mxu0
      %2970 = vmatprep.mubr.f32.mxu0 0.0
      %2971 = vmatmul.mubr.f32.gmra.mrb[0].mxu0 %v2729
      %v2972 = vpop.f32.mrb[0].mxu0
      %v2973 = vadd.f32 0.0, %v2972
      %v2974 = vpop.f32.mrb[0].mxu0
      %2975 = vdwg.mxu0
      %v2976 = vadd.f32 %v2550, %v2798
      %v2977 = vadd.f32 %v2551, %v2803
      %v2978 = vadd.f32 %v2552, %v2808
      %v2979 = vadd.f32 %v2553, %v2813
      %v2980 = vadd.f32 %v2554, %v2818
      %v2981 = vadd.f32 %v2555, %v2823
      %v2982 = vadd.f32 %v2556, %v2828
      %v2983 = vadd.f32 %v2557, %v2833
      %v2984 = vadd.f32 %v2558, %v2838
      %v2985 = vadd.f32 %v2559, %v2843
      %v2986 = vadd.f32 %v2560, %v2848
      %v2987 = vadd.f32 %v2561, %v2853
      %v2988 = vadd.f32 %v2562, %v2858
      %v2989 = vadd.f32 %v2563, %v2863
      %v2990 = vadd.f32 %v2564, %v2868
      %v2991 = vadd.f32 %v2565, %v2873
      %v2992 = vadd.f32 %v2566, %v2878
      %v2993 = vadd.f32 %v2567, %v2883
      %v2994 = vadd.f32 %v2568, %v2888
      %v2995 = vadd.f32 %v2569, %v2893
      %v2996 = vadd.f32 %v2570, %v2898
      %v2997 = vadd.f32 %v2571, %v2903
      %v2998 = vadd.f32 %v2572, %v2908
      %v2999 = vadd.f32 %v2573, %v2913
      %v3000 = vadd.f32 %v2574, %v2918
      %v3001 = vadd.f32 %v2575, %v2923
      %v3002 = vadd.f32 %v2576, %v2928
      %v3003 = vadd.f32 %v2577, %v2933
      %v3004 = vadd.f32 %v2578, %v2938
      %v3005 = vadd.f32 %v2579, %v2943
      %v3006 = vadd.f32 %v2580, %v2948
      %v3007 = vadd.f32 %v2581, %v2953
      %v3008 = vadd.f32 %v2582, %v2958
      %v3009 = vadd.f32 %v2583, %v2963
      %v3010 = vadd.f32 %v2584, %v2968
      %v3011 = vadd.f32 %v2585, %v2973
      %v3012 = vld [vmem:[#allocation2 + $0x14] sm:$0xff]
      %v3013 = vld [vmem:[#allocation2 + $0x1c] sm:$0xff]
      %v3014 = vld [vmem:[#allocation2 + $0x24] sm:$0xff]
      %v3015 = vld [vmem:[#allocation2 + $0x2c] sm:$0xff]
      %v3016 = vld [vmem:[#allocation2 + $0x34] sm:$0xff]
      %v3017 = vld [vmem:[#allocation2 + $0x3c] sm:$0xff]
      %v3018 = vld [vmem:[#allocation2 + $0x44] sm:$0xff]
      %v3019 = vld [vmem:[#allocation2 + $0x4c] sm:$0xff]
      %v3020 = vld [vmem:[#allocation2 + $0x54] sm:$0xff]
      %v3021 = vld [vmem:[#allocation2 + $0x5c] sm:$0xff]
      %v3022 = vld [vmem:[#allocation2 + $0x64] sm:$0xff]
      %v3023 = vld [vmem:[#allocation2 + $0x6c] sm:$0xff]
      %v3024 = vld [vmem:[#allocation2 + $0x74] sm:$0xff]
      %v3025 = vld [vmem:[#allocation2 + $0x7c] sm:$0xff]
      %v3026 = vld [vmem:[#allocation2 + $0x84] sm:$0xff]
      %v3027 = vld [vmem:[#allocation2 + $0x8c] sm:$0xff]
      %v3028 = vld [vmem:[#allocation2 + $0x94] sm:$0xff]
      %v3029 = vld [vmem:[#allocation2 + $0x9c] sm:$0xff]
      %v3030 = vld [vmem:[#allocation2 + $0xa4] sm:$0xff]
      %v3031 = vld [vmem:[#allocation2 + $0xac] sm:$0xff]
      %v3032 = vld [vmem:[#allocation2 + $0xb4] sm:$0xff]
      %v3033 = vld [vmem:[#allocation2 + $0xbc] sm:$0xff]
      %v3034 = vld [vmem:[#allocation2 + $0xc4] sm:$0xff]
      %v3035 = vld [vmem:[#allocation2 + $0xcc] sm:$0xff]
      %v3036 = vld [vmem:[#allocation2 + $0xd4] sm:$0xff]
      %v3037 = vld [vmem:[#allocation2 + $0xdc] sm:$0xff]
      %v3038 = vld [vmem:[#allocation2 + $0xe4] sm:$0xff]
      %v3039 = vld [vmem:[#allocation2 + $0xec] sm:$0xff]
      %v3040 = vld [vmem:[#allocation2 + $0xf4] sm:$0xff]
      %v3041 = vld [vmem:[#allocation2 + $0xfc] sm:$0xff]
      %v3042 = vld [vmem:[#allocation2 + $0x104] sm:$0xff]
      %v3043 = vld [vmem:[#allocation2 + $0x10c] sm:$0xff]
      %v3044 = vld [vmem:[#allocation2 + $0x114] sm:$0xff]
      %v3045 = vld [vmem:[#allocation2 + $0x11c] sm:$0xff]
      %v3046 = vld [vmem:[#allocation2 + $0x124] sm:$0xff]
      %v3047 = vld [vmem:[#allocation2 + $0x12c] sm:$0x3f]
      %v3048 = vld [vmem:[%s7 + $0x28] sm:$0xff]
      %v3050 = vsel %vm832, %v3012, 0
      %v3053 = vsel %vm832, %v3013, 0
      %v3056 = vsel %vm832, %v3014, 0
      %v3059 = vsel %vm832, %v3015, 0
      %v3062 = vsel %vm832, %v3016, 0
      %v3065 = vsel %vm832, %v3017, 0
      %v3068 = vsel %vm832, %v3018, 0
      %v3071 = vsel %vm832, %v3019, 0
      %v3074 = vsel %vm832, %v3020, 0
      %v3077 = vsel %vm832, %v3021, 0
      %v3080 = vsel %vm832, %v3022, 0
      %v3083 = vsel %vm832, %v3023, 0
      %v3086 = vsel %vm832, %v3024, 0
      %v3089 = vsel %vm832, %v3025, 0
      %v3092 = vsel %vm832, %v3026, 0
      %v3095 = vsel %vm832, %v3027, 0
      %v3098 = vsel %vm832, %v3028, 0
      %v3101 = vsel %vm832, %v3029, 0
      %v3104 = vsel %vm832, %v3030, 0
      %v3107 = vsel %vm832, %v3031, 0
      %v3110 = vsel %vm832, %v3032, 0
      %v3113 = vsel %vm832, %v3033, 0
      %v3116 = vsel %vm832, %v3034, 0
      %v3119 = vsel %vm832, %v3035, 0
      %v3122 = vsel %vm832, %v3036, 0
      %v3125 = vsel %vm832, %v3037, 0
      %v3128 = vsel %vm832, %v3038, 0
      %v3131 = vsel %vm832, %v3039, 0
      %v3134 = vsel %vm832, %v3040, 0
      %v3137 = vsel %vm832, %v3041, 0
      %v3140 = vsel %vm832, %v3042, 0
      %v3143 = vsel %vm832, %v3043, 0
      %v3146 = vsel %vm832, %v3044, 0
      %v3149 = vsel %vm832, %v3045, 0
      %v3152 = vsel %vm832, %v3046, 0
      %v3155 = vsel %vm832, %v3047, 0
      %3157 = vmatprep.subr.mxu0 0.0
      %3158 = vmatpush1.msra.mxu0 %v3048
      %3159 = vmatprep.subr.mxu0 0.0
      %3160 = vmatpush1.msra.mxu0 0.0
      %3161 = vmatprep.subr.mxu0 0.0
      %3162 = vmatpush1.msra.mxu0 0.0
      %3163 = vmatprep.subr.mxu0 0.0
      %3164 = vmatpush1.msra.mxu0 0.0
      %3165 = vmatprep.subr.mxu0 0.0
      %3166 = vmatpush1.msra.mxu0 0.0
      %3167 = vmatprep.subr.mxu0 0.0
      %3168 = vmatpush1.msra.mxu0 0.0
      %3169 = vmatprep.subr.mxu0 0.0
      %3170 = vmatpush1.msra.mxu0 0.0
      %3171 = vmatprep.subr.mxu0 0.0
      %3172 = vmatpush1.msra.mxu0 0.0
      %3173 = vmatprep.subr.mxu0 0.0
      %3174 = vmatpush1.msra.mxu0 0.0
      %3175 = vmatprep.subr.mxu0 0.0
      %3176 = vmatpush1.msra.mxu0 0.0
      %3177 = vmatprep.subr.mxu0 0.0
      %3178 = vmatpush1.msra.mxu0 0.0
      %3179 = vmatprep.subr.mxu0 0.0
      %3180 = vmatpush1.msra.mxu0 0.0
      %3181 = vmatprep.subr.mxu0 0.0
      %3182 = vmatpush1.msra.mxu0 0.0
      %3183 = vmatprep.subr.mxu0 0.0
      %3184 = vmatpush1.msra.mxu0 0.0
      %3185 = vmatprep.subr.mxu0 0.0
      %3186 = vmatpush1.msra.mxu0 0.0
      %3187 = vmatprep.subr.mxu0 0.0
      %3188 = vmatpush1.msra.mxu0 0.0
      %3189 = vmatprep.subr.mxu0 0.0
      %3190 = vmatpush1.msra.mxu0 0.0
      %3191 = vmatprep.subr.mxu0 0.0
      %3192 = vmatpush1.msra.mxu0 0.0
      %3193 = vmatprep.subr.mxu0 0.0
      %3194 = vmatpush1.msra.mxu0 0.0
      %3195 = vmatprep.subr.mxu0 0.0
      %3196 = vmatpush1.msra.mxu0 0.0
      %3197 = vmatprep.subr.mxu0 0.0
      %3198 = vmatpush1.msra.mxu0 0.0
      %3199 = vmatprep.subr.mxu0 0.0
      %3200 = vmatpush1.msra.mxu0 0.0
      %3201 = vmatprep.subr.mxu0 0.0
      %3202 = vmatpush1.msra.mxu0 0.0
      %3203 = vmatprep.subr.mxu0 0.0
      %3204 = vmatpush1.msra.mxu0 0.0
      %3205 = vmatprep.subr.mxu0 0.0
      %3206 = vmatpush1.msra.mxu0 0.0
      %3207 = vmatprep.subr.mxu0 0.0
      %3208 = vmatpush1.msra.mxu0 0.0
      %3209 = vmatprep.subr.mxu0 0.0
      %3210 = vmatpush1.msra.mxu0 0.0
      %3211 = vmatprep.subr.mxu0 0.0
      %3212 = vmatpush1.msra.mxu0 0.0
      %3213 = vmatprep.subr.mxu0 0.0
      %3214 = vmatpush1.msra.mxu0 0.0
      %3215 = vmatprep.subr.mxu0 0.0
      %3216 = vmatpush1.msra.mxu0 0.0
      %3217 = vmatprep.subr.mxu0 0.0
      %3218 = vmatpush1.msra.mxu0 0.0
      %3219 = vmatprep.subr.mxu0 0.0
      %3220 = vmatpush1.msra.mxu0 0.0
      %3221 = vmatprep.mubr.f32.mxu0 0.0
      %3222 = vmatmul.mubr.f32.gmra.mrb[0].mxu0 %v3050
      %v3223 = vpop.f32.mrb[0].mxu0
      %v3224 = vadd.f32 0.0, %v3223
      %v3225 = vpop.f32.mrb[0].mxu0
      %3226 = vmatprep.mubr.f32.mxu0 0.0
      %3227 = vmatmul.mubr.f32.gmra.mrb[0].mxu0 %v3053
      %v3228 = vpop.f32.mrb[0].mxu0
      %v3229 = vadd.f32 0.0, %v3228
      %v3230 = vpop.f32.mrb[0].mxu0
      %3231 = vmatprep.mubr.f32.mxu0 0.0
      %3232 = vmatmul.mubr.f32.gmra.mrb[0].mxu0 %v3056
      %v3233 = vpop.f32.mrb[0].mxu0
      %v3234 = vadd.f32 0.0, %v3233
      %v3235 = vpop.f32.mrb[0].mxu0
      %3236 = vmatprep.mubr.f32.mxu0 0.0
      %3237 = vmatmul.mubr.f32.gmra.mrb[0].mxu0 %v3059
      %v3238 = vpop.f32.mrb[0].mxu0
      %v3239 = vadd.f32 0.0, %v3238
      %v3240 = vpop.f32.mrb[0].mxu0
      %3241 = vmatprep.mubr.f32.mxu0 0.0
      %3242 = vmatmul.mubr.f32.gmra.mrb[0].mxu0 %v3062
      %v3243 = vpop.f32.mrb[0].mxu0
      %v3244 = vadd.f32 0.0, %v3243
      %v3245 = vpop.f32.mrb[0].mxu0
      %3246 = vmatprep.mubr.f32.mxu0 0.0
      %3247 = vmatmul.mubr.f32.gmra.mrb[0].mxu0 %v3065
      %v3248 = vpop.f32.mrb[0].mxu0
      %v3249 = vadd.f32 0.0, %v3248
      %v3250 = vpop.f32.mrb[0].mxu0
      %3251 = vmatprep.mubr.f32.mxu0 0.0
      %3252 = vmatmul.mubr.f32.gmra.mrb[0].mxu0 %v3068
      %v3253 = vpop.f32.mrb[0].mxu0
      %v3254 = vadd.f32 0.0, %v3253
      %v3255 = vpop.f32.mrb[0].mxu0
      %3256 = vmatprep.mubr.f32.mxu0 0.0
      %3257 = vmatmul.mubr.f32.gmra.mrb[0].mxu0 %v3071
      %v3258 = vpop.f32.mrb[0].mxu0
      %v3259 = vadd.f32 0.0, %v3258
      %v3260 = vpop.f32.mrb[0].mxu0
      %3261 = vmatprep.mubr.f32.mxu0 0.0
      %3262 = vmatmul.mubr.f32.gmra.mrb[0].mxu0 %v3074
      %v3263 = vpop.f32.mrb[0].mxu0
      %v3264 = vadd.f32 0.0, %v3263
      %v3265 = vpop.f32.mrb[0].mxu0
      %3266 = vmatprep.mubr.f32.mxu0 0.0
      %3267 = vmatmul.mubr.f32.gmra.mrb[0].mxu0 %v3077
      %v3268 = vpop.f32.mrb[0].mxu0
      %v3269 = vadd.f32 0.0, %v3268
      %v3270 = vpop.f32.mrb[0].mxu0
      %3271 = vmatprep.mubr.f32.mxu0 0.0
      %3272 = vmatmul.mubr.f32.gmra.mrb[0].mxu0 %v3080
      %v3273 = vpop.f32.mrb[0].mxu0
      %v3274 = vadd.f32 0.0, %v3273
      %v3275 = vpop.f32.mrb[0].mxu0
      %3276 = vmatprep.mubr.f32.mxu0 0.0
      %3277 = vmatmul.mubr.f32.gmra.mrb[0].mxu0 %v3083
      %v3278 = vpop.f32.mrb[0].mxu0
      %v3279 = vadd.f32 0.0, %v3278
      %v3280 = vpop.f32.mrb[0].mxu0
      %3281 = vmatprep.mubr.f32.mxu0 0.0
      %3282 = vmatmul.mubr.f32.gmra.mrb[0].mxu0 %v3086
      %v3283 = vpop.f32.mrb[0].mxu0
      %v3284 = vadd.f32 0.0, %v3283
      %v3285 = vpop.f32.mrb[0].mxu0
      %3286 = vmatprep.mubr.f32.mxu0 0.0
      %3287 = vmatmul.mubr.f32.gmra.mrb[0].mxu0 %v3089
      %v3288 = vpop.f32.mrb[0].mxu0
      %v3289 = vadd.f32 0.0, %v3288
      %v3290 = vpop.f32.mrb[0].mxu0
      %3291 = vmatprep.mubr.f32.mxu0 0.0
      %3292 = vmatmul.mubr.f32.gmra.mrb[0].mxu0 %v3092
      %v3293 = vpop.f32.mrb[0].mxu0
      %v3294 = vadd.f32 0.0, %v3293
      %v3295 = vpop.f32.mrb[0].mxu0
      %3296 = vmatprep.mubr.f32.mxu0 0.0
      %3297 = vmatmul.mubr.f32.gmra.mrb[0].mxu0 %v3095
      %v3298 = vpop.f32.mrb[0].mxu0
      %v3299 = vadd.f32 0.0, %v3298
      %v3300 = vpop.f32.mrb[0].mxu0
      %3301 = vmatprep.mubr.f32.mxu0 0.0
      %3302 = vmatmul.mubr.f32.gmra.mrb[0].mxu0 %v3098
      %v3303 = vpop.f32.mrb[0].mxu0
      %v3304 = vadd.f32 0.0, %v3303
      %v3305 = vpop.f32.mrb[0].mxu0
      %3306 = vmatprep.mubr.f32.mxu0 0.0
      %3307 = vmatmul.mubr.f32.gmra.mrb[0].mxu0 %v3101
      %v3308 = vpop.f32.mrb[0].mxu0
      %v3309 = vadd.f32 0.0, %v3308
      %v3310 = vpop.f32.mrb[0].mxu0
      %3311 = vmatprep.mubr.f32.mxu0 0.0
      %3312 = vmatmul.mubr.f32.gmra.mrb[0].mxu0 %v3104
      %v3313 = vpop.f32.mrb[0].mxu0
      %v3314 = vadd.f32 0.0, %v3313
      %v3315 = vpop.f32.mrb[0].mxu0
      %3316 = vmatprep.mubr.f32.mxu0 0.0
      %3317 = vmatmul.mubr.f32.gmra.mrb[0].mxu0 %v3107
      %v3318 = vpop.f32.mrb[0].mxu0
      %v3319 = vadd.f32 0.0, %v3318
      %v3320 = vpop.f32.mrb[0].mxu0
      %3321 = vmatprep.mubr.f32.mxu0 0.0
      %3322 = vmatmul.mubr.f32.gmra.mrb[0].mxu0 %v3110
      %v3323 = vpop.f32.mrb[0].mxu0
      %v3324 = vadd.f32 0.0, %v3323
      %v3325 = vpop.f32.mrb[0].mxu0
      %3326 = vmatprep.mubr.f32.mxu0 0.0
      %3327 = vmatmul.mubr.f32.gmra.mrb[0].mxu0 %v3113
      %v3328 = vpop.f32.mrb[0].mxu0
      %v3329 = vadd.f32 0.0, %v3328
      %v3330 = vpop.f32.mrb[0].mxu0
      %3331 = vmatprep.mubr.f32.mxu0 0.0
      %3332 = vmatmul.mubr.f32.gmra.mrb[0].mxu0 %v3116
      %v3333 = vpop.f32.mrb[0].mxu0
      %v3334 = vadd.f32 0.0, %v3333
      %v3335 = vpop.f32.mrb[0].mxu0
      %3336 = vmatprep.mubr.f32.mxu0 0.0
      %3337 = vmatmul.mubr.f32.gmra.mrb[0].mxu0 %v3119
      %v3338 = vpop.f32.mrb[0].mxu0
      %v3339 = vadd.f32 0.0, %v3338
      %v3340 = vpop.f32.mrb[0].mxu0
      %3341 = vmatprep.mubr.f32.mxu0 0.0
      %3342 = vmatmul.mubr.f32.gmra.mrb[0].mxu0 %v3122
      %v3343 = vpop.f32.mrb[0].mxu0
      %v3344 = vadd.f32 0.0, %v3343
      %v3345 = vpop.f32.mrb[0].mxu0
      %3346 = vmatprep.mubr.f32.mxu0 0.0
      %3347 = vmatmul.mubr.f32.gmra.mrb[0].mxu0 %v3125
      %v3348 = vpop.f32.mrb[0].mxu0
      %v3349 = vadd.f32 0.0, %v3348
      %v3350 = vpop.f32.mrb[0].mxu0
      %3351 = vmatprep.mubr.f32.mxu0 0.0
      %3352 = vmatmul.mubr.f32.gmra.mrb[0].mxu0 %v3128
      %v3353 = vpop.f32.mrb[0].mxu0
      %v3354 = vadd.f32 0.0, %v3353
      %v3355 = vpop.f32.mrb[0].mxu0
      %3356 = vmatprep.mubr.f32.mxu0 0.0
      %3357 = vmatmul.mubr.f32.gmra.mrb[0].mxu0 %v3131
      %v3358 = vpop.f32.mrb[0].mxu0
      %v3359 = vadd.f32 0.0, %v3358
      %v3360 = vpop.f32.mrb[0].mxu0
      %3361 = vmatprep.mubr.f32.mxu0 0.0
      %3362 = vmatmul.mubr.f32.gmra.mrb[0].mxu0 %v3134
      %v3363 = vpop.f32.mrb[0].mxu0
      %v3364 = vadd.f32 0.0, %v3363
      %v3365 = vpop.f32.mrb[0].mxu0
      %3366 = vmatprep.mubr.f32.mxu0 0.0
      %3367 = vmatmul.mubr.f32.gmra.mrb[0].mxu0 %v3137
      %v3368 = vpop.f32.mrb[0].mxu0
      %v3369 = vadd.f32 0.0, %v3368
      %v3370 = vpop.f32.mrb[0].mxu0
      %3371 = vmatprep.mubr.f32.mxu0 0.0
      %3372 = vmatmul.mubr.f32.gmra.mrb[0].mxu0 %v3140
      %v3373 = vpop.f32.mrb[0].mxu0
      %v3374 = vadd.f32 0.0, %v3373
      %v3375 = vpop.f32.mrb[0].mxu0
      %3376 = vmatprep.mubr.f32.mxu0 0.0
      %3377 = vmatmul.mubr.f32.gmra.mrb[0].mxu0 %v3143
      %v3378 = vpop.f32.mrb[0].mxu0
      %v3379 = vadd.f32 0.0, %v3378
      %v3380 = vpop.f32.mrb[0].mxu0
      %3381 = vmatprep.mubr.f32.mxu0 0.0
      %3382 = vmatmul.mubr.f32.gmra.mrb[0].mxu0 %v3146
      %v3383 = vpop.f32.mrb[0].mxu0
      %v3384 = vadd.f32 0.0, %v3383
      %v3385 = vpop.f32.mrb[0].mxu0
      %3386 = vmatprep.mubr.f32.mxu0 0.0
      %3387 = vmatmul.mubr.f32.gmra.mrb[0].mxu0 %v3149
      %v3388 = vpop.f32.mrb[0].mxu0
      %v3389 = vadd.f32 0.0, %v3388
      %v3390 = vpop.f32.mrb[0].mxu0
      %3391 = vmatprep.mubr.f32.mxu0 0.0
      %3392 = vmatmul.mubr.f32.gmra.mrb[0].mxu0 %v3152
      %v3393 = vpop.f32.mrb[0].mxu0
      %v3394 = vadd.f32 0.0, %v3393
      %v3395 = vpop.f32.mrb[0].mxu0
      %3396 = vmatprep.mubr.f32.mxu0 0.0
      %3397 = vmatmul.mubr.f32.gmra.mrb[0].mxu0 %v3155
      %v3398 = vpop.f32.mrb[0].mxu0
      %v3399 = vadd.f32 0.0, %v3398
      %v3400 = vpop.f32.mrb[0].mxu0
      %3401 = vdwg.mxu0
      %v3402 = vadd.f32 %v2976, %v3224
      %v3403 = vadd.f32 %v2977, %v3229
      %v3404 = vadd.f32 %v2978, %v3234
      %v3405 = vadd.f32 %v2979, %v3239
      %v3406 = vadd.f32 %v2980, %v3244
      %v3407 = vadd.f32 %v2981, %v3249
      %v3408 = vadd.f32 %v2982, %v3254
      %v3409 = vadd.f32 %v2983, %v3259
      %v3410 = vadd.f32 %v2984, %v3264
      %v3411 = vadd.f32 %v2985, %v3269
      %v3412 = vadd.f32 %v2986, %v3274
      %v3413 = vadd.f32 %v2987, %v3279
      %v3414 = vadd.f32 %v2988, %v3284
      %v3415 = vadd.f32 %v2989, %v3289
      %v3416 = vadd.f32 %v2990, %v3294
      %v3417 = vadd.f32 %v2991, %v3299
      %v3418 = vadd.f32 %v2992, %v3304
      %v3419 = vadd.f32 %v2993, %v3309
      %v3420 = vadd.f32 %v2994, %v3314
      %v3421 = vadd.f32 %v2995, %v3319
      %v3422 = vadd.f32 %v2996, %v3324
      %v3423 = vadd.f32 %v2997, %v3329
      %v3424 = vadd.f32 %v2998, %v3334
      %v3425 = vadd.f32 %v2999, %v3339
      %v3426 = vadd.f32 %v3000, %v3344
      %v3427 = vadd.f32 %v3001, %v3349
      %v3428 = vadd.f32 %v3002, %v3354
      %v3429 = vadd.f32 %v3003, %v3359
      %v3430 = vadd.f32 %v3004, %v3364
      %v3431 = vadd.f32 %v3005, %v3369
      %v3432 = vadd.f32 %v3006, %v3374
      %v3433 = vadd.f32 %v3007, %v3379
      %v3434 = vadd.f32 %v3008, %v3384
      %v3435 = vadd.f32 %v3009, %v3389
      %v3436 = vadd.f32 %v3010, %v3394
      %v3437 = vadd.f32 %v3011, %v3399
      %v3438 = vld [vmem:[#allocation2 + $0x24] sm:$0xff]
      %v3439 = vld [vmem:[#allocation2 + $0x2c] sm:$0xff]
      %v3440 = vld [vmem:[#allocation2 + $0x34] sm:$0xff]
      %v3441 = vld [vmem:[#allocation2 + $0x3c] sm:$0xff]
      %v3442 = vld [vmem:[#allocation2 + $0x44] sm:$0xff]
      %v3443 = vld [vmem:[#allocation2 + $0x4c] sm:$0xff]
      %v3444 = vld [vmem:[#allocation2 + $0x54] sm:$0xff]
      %v3445 = vld [vmem:[#allocation2 + $0x5c] sm:$0xff]
      %v3446 = vld [vmem:[#allocation2 + $0x64] sm:$0xff]
      %v3447 = vld [vmem:[#allocation2 + $0x6c] sm:$0xff]
      %v3448 = vld [vmem:[#allocation2 + $0x74] sm:$0xff]
      %v3449 = vld [vmem:[#allocation2 + $0x7c] sm:$0xff]
      %v3450 = vld [vmem:[#allocation2 + $0x84] sm:$0xff]
      %v3451 = vld [vmem:[#allocation2 + $0x8c] sm:$0xff]
      %v3452 = vld [vmem:[#allocation2 + $0x94] sm:$0xff]
      %v3453 = vld [vmem:[#allocation2 + $0x9c] sm:$0xff]
      %v3454 = vld [vmem:[#allocation2 + $0xa4] sm:$0xff]
      %v3455 = vld [vmem:[#allocation2 + $0xac] sm:$0xff]
      %v3456 = vld [vmem:[#allocation2 + $0xb4] sm:$0xff]
      %v3457 = vld [vmem:[#allocation2 + $0xbc] sm:$0xff]
      %v3458 = vld [vmem:[#allocation2 + $0xc4] sm:$0xff]
      %v3459 = vld [vmem:[#allocation2 + $0xcc] sm:$0xff]
      %v3460 = vld [vmem:[#allocation2 + $0xd4] sm:$0xff]
      %v3461 = vld [vmem:[#allocation2 + $0xdc] sm:$0xff]
      %v3462 = vld [vmem:[#allocation2 + $0xe4] sm:$0xff]
      %v3463 = vld [vmem:[#allocation2 + $0xec] sm:$0xff]
      %v3464 = vld [vmem:[#allocation2 + $0xf4] sm:$0xff]
      %v3465 = vld [vmem:[#allocation2 + $0xfc] sm:$0xff]
      %v3466 = vld [vmem:[#allocation2 + $0x104] sm:$0xff]
      %v3467 = vld [vmem:[#allocation2 + $0x10c] sm:$0xff]
      %v3468 = vld [vmem:[#allocation2 + $0x114] sm:$0xff]
      %v3469 = vld [vmem:[#allocation2 + $0x11c] sm:$0xff]
      %v3470 = vld [vmem:[#allocation2 + $0x124] sm:$0xff]
      %v3471 = vld [vmem:[#allocation2 + $0x12c] sm:$0xff]
      %v3472 = vld [vmem:[#allocation2 + $0x134] sm:$0xff]
      %v3473 = vld [vmem:[#allocation2 + $0x13c] sm:$0x3f]
      %v3474 = vld [vmem:[%s7 + $0x30] sm:$0xff]
      %v3476 = vsel %vm832, %v3438, 0
      %v3479 = vsel %vm832, %v3439, 0
      %v3482 = vsel %vm832, %v3440, 0
      %v3485 = vsel %vm832, %v3441, 0
      %v3488 = vsel %vm832, %v3442, 0
      %v3491 = vsel %vm832, %v3443, 0
      %v3494 = vsel %vm832, %v3444, 0
      %v3497 = vsel %vm832, %v3445, 0
      %v3500 = vsel %vm832, %v3446, 0
      %v3503 = vsel %vm832, %v3447, 0
      %v3506 = vsel %vm832, %v3448, 0
      %v3509 = vsel %vm832, %v3449, 0
      %v3512 = vsel %vm832, %v3450, 0
      %v3515 = vsel %vm832, %v3451, 0
      %v3518 = vsel %vm832, %v3452, 0
      %v3521 = vsel %vm832, %v3453, 0
      %v3524 = vsel %vm832, %v3454, 0
      %v3527 = vsel %vm832, %v3455, 0
      %v3530 = vsel %vm832, %v3456, 0
      %v3533 = vsel %vm832, %v3457, 0
      %v3536 = vsel %vm832, %v3458, 0
      %v3539 = vsel %vm832, %v3459, 0
      %v3542 = vsel %vm832, %v3460, 0
      %v3545 = vsel %vm832, %v3461, 0
      %v3548 = vsel %vm832, %v3462, 0
      %v3551 = vsel %vm832, %v3463, 0
      %v3554 = vsel %vm832, %v3464, 0
      %v3557 = vsel %vm832, %v3465, 0
      %v3560 = vsel %vm832, %v3466, 0
      %v3563 = vsel %vm832, %v3467, 0
      %v3566 = vsel %vm832, %v3468, 0
      %v3569 = vsel %vm832, %v3469, 0
      %v3572 = vsel %vm832, %v3470, 0
      %v3575 = vsel %vm832, %v3471, 0
      %v3578 = vsel %vm832, %v3472, 0
      %v3581 = vsel %vm832, %v3473, 0
      %3583 = vmatprep.subr.mxu0 0.0
      %3584 = vmatpush1.msra.mxu0 %v3474
      %3585 = vmatprep.subr.mxu0 0.0
      %3586 = vmatpush1.msra.mxu0 0.0
      %3587 = vmatprep.subr.mxu0 0.0
      %3588 = vmatpush1.msra.mxu0 0.0
      %3589 = vmatprep.subr.mxu0 0.0
      %3590 = vmatpush1.msra.mxu0 0.0
      %3591 = vmatprep.subr.mxu0 0.0
      %3592 = vmatpush1.msra.mxu0 0.0
      %3593 = vmatprep.subr.mxu0 0.0
      %3594 = vmatpush1.msra.mxu0 0.0
      %3595 = vmatprep.subr.mxu0 0.0
      %3596 = vmatpush1.msra.mxu0 0.0
      %3597 = vmatprep.subr.mxu0 0.0
      %3598 = vmatpush1.msra.mxu0 0.0
      %3599 = vmatprep.subr.mxu0 0.0
      %3600 = vmatpush1.msra.mxu0 0.0
      %3601 = vmatprep.subr.mxu0 0.0
      %3602 = vmatpush1.msra.mxu0 0.0
      %3603 = vmatprep.subr.mxu0 0.0
      %3604 = vmatpush1.msra.mxu0 0.0
      %3605 = vmatprep.subr.mxu0 0.0
      %3606 = vmatpush1.msra.mxu0 0.0
      %3607 = vmatprep.subr.mxu0 0.0
      %3608 = vmatpush1.msra.mxu0 0.0
      %3609 = vmatprep.subr.mxu0 0.0
      %3610 = vmatpush1.msra.mxu0 0.0
      %3611 = vmatprep.subr.mxu0 0.0
      %3612 = vmatpush1.msra.mxu0 0.0
      %3613 = vmatprep.subr.mxu0 0.0
      %3614 = vmatpush1.msra.mxu0 0.0
      %3615 = vmatprep.subr.mxu0 0.0
      %3616 = vmatpush1.msra.mxu0 0.0
      %3617 = vmatprep.subr.mxu0 0.0
      %3618 = vmatpush1.msra.mxu0 0.0
      %3619 = vmatprep.subr.mxu0 0.0
      %3620 = vmatpush1.msra.mxu0 0.0
      %3621 = vmatprep.subr.mxu0 0.0
      %3622 = vmatpush1.msra.mxu0 0.0
      %3623 = vmatprep.subr.mxu0 0.0
      %3624 = vmatpush1.msra.mxu0 0.0
      %3625 = vmatprep.subr.mxu0 0.0
      %3626 = vmatpush1.msra.mxu0 0.0
      %3627 = vmatprep.subr.mxu0 0.0
      %3628 = vmatpush1.msra.mxu0 0.0
      %3629 = vmatprep.subr.mxu0 0.0
      %3630 = vmatpush1.msra.mxu0 0.0
      %3631 = vmatprep.subr.mxu0 0.0
      %3632 = vmatpush1.msra.mxu0 0.0
      %3633 = vmatprep.subr.mxu0 0.0
      %3634 = vmatpush1.msra.mxu0 0.0
      %3635 = vmatprep.subr.mxu0 0.0
      %3636 = vmatpush1.msra.mxu0 0.0
      %3637 = vmatprep.subr.mxu0 0.0
      %3638 = vmatpush1.msra.mxu0 0.0
      %3639 = vmatprep.subr.mxu0 0.0
      %3640 = vmatpush1.msra.mxu0 0.0
      %3641 = vmatprep.subr.mxu0 0.0
      %3642 = vmatpush1.msra.mxu0 0.0
      %3643 = vmatprep.subr.mxu0 0.0
      %3644 = vmatpush1.msra.mxu0 0.0
      %3645 = vmatprep.subr.mxu0 0.0
      %3646 = vmatpush1.msra.mxu0 0.0
      %3647 = vmatprep.mubr.f32.mxu0 0.0
      %3648 = vmatmul.mubr.f32.gmra.mrb[0].mxu0 %v3476
      %v3649 = vpop.f32.mrb[0].mxu0
      %v3650 = vadd.f32 0.0, %v3649
      %v3651 = vpop.f32.mrb[0].mxu0
      %3652 = vmatprep.mubr.f32.mxu0 0.0
      %3653 = vmatmul.mubr.f32.gmra.mrb[0].mxu0 %v3479
      %v3654 = vpop.f32.mrb[0].mxu0
      %v3655 = vadd.f32 0.0, %v3654
      %v3656 = vpop.f32.mrb[0].mxu0
      %3657 = vmatprep.mubr.f32.mxu0 0.0
      %3658 = vmatmul.mubr.f32.gmra.mrb[0].mxu0 %v3482
      %v3659 = vpop.f32.mrb[0].mxu0
      %v3660 = vadd.f32 0.0, %v3659
      %v3661 = vpop.f32.mrb[0].mxu0
      %3662 = vmatprep.mubr.f32.mxu0 0.0
      %3663 = vmatmul.mubr.f32.gmra.mrb[0].mxu0 %v3485
      %v3664 = vpop.f32.mrb[0].mxu0
      %v3665 = vadd.f32 0.0, %v3664
      %v3666 = vpop.f32.mrb[0].mxu0
      %3667 = vmatprep.mubr.f32.mxu0 0.0
      %3668 = vmatmul.mubr.f32.gmra.mrb[0].mxu0 %v3488
      %v3669 = vpop.f32.mrb[0].mxu0
      %v3670 = vadd.f32 0.0, %v3669
      %v3671 = vpop.f32.mrb[0].mxu0
      %3672 = vmatprep.mubr.f32.mxu0 0.0
      %3673 = vmatmul.mubr.f32.gmra.mrb[0].mxu0 %v3491
      %v3674 = vpop.f32.mrb[0].mxu0
      %v3675 = vadd.f32 0.0, %v3674
      %v3676 = vpop.f32.mrb[0].mxu0
      %3677 = vmatprep.mubr.f32.mxu0 0.0
      %3678 = vmatmul.mubr.f32.gmra.mrb[0].mxu0 %v3494
      %v3679 = vpop.f32.mrb[0].mxu0
      %v3680 = vadd.f32 0.0, %v3679
      %v3681 = vpop.f32.mrb[0].mxu0
      %3682 = vmatprep.mubr.f32.mxu0 0.0
      %3683 = vmatmul.mubr.f32.gmra.mrb[0].mxu0 %v3497
      %v3684 = vpop.f32.mrb[0].mxu0
      %v3685 = vadd.f32 0.0, %v3684
      %v3686 = vpop.f32.mrb[0].mxu0
      %3687 = vmatprep.mubr.f32.mxu0 0.0
      %3688 = vmatmul.mubr.f32.gmra.mrb[0].mxu0 %v3500
      %v3689 = vpop.f32.mrb[0].mxu0
      %v3690 = vadd.f32 0.0, %v3689
      %v3691 = vpop.f32.mrb[0].mxu0
      %3692 = vmatprep.mubr.f32.mxu0 0.0
      %3693 = vmatmul.mubr.f32.gmra.mrb[0].mxu0 %v3503
      %v3694 = vpop.f32.mrb[0].mxu0
      %v3695 = vadd.f32 0.0, %v3694
      %v3696 = vpop.f32.mrb[0].mxu0
      %3697 = vmatprep.mubr.f32.mxu0 0.0
      %3698 = vmatmul.mubr.f32.gmra.mrb[0].mxu0 %v3506
      %v3699 = vpop.f32.mrb[0].mxu0
      %v3700 = vadd.f32 0.0, %v3699
      %v3701 = vpop.f32.mrb[0].mxu0
      %3702 = vmatprep.mubr.f32.mxu0 0.0
      %3703 = vmatmul.mubr.f32.gmra.mrb[0].mxu0 %v3509
      %v3704 = vpop.f32.mrb[0].mxu0
      %v3705 = vadd.f32 0.0, %v3704
      %v3706 = vpop.f32.mrb[0].mxu0
      %3707 = vmatprep.mubr.f32.mxu0 0.0
      %3708 = vmatmul.mubr.f32.gmra.mrb[0].mxu0 %v3512
      %v3709 = vpop.f32.mrb[0].mxu0
      %v3710 = vadd.f32 0.0, %v3709
      %v3711 = vpop.f32.mrb[0].mxu0
      %3712 = vmatprep.mubr.f32.mxu0 0.0
      %3713 = vmatmul.mubr.f32.gmra.mrb[0].mxu0 %v3515
      %v3714 = vpop.f32.mrb[0].mxu0
      %v3715 = vadd.f32 0.0, %v3714
      %v3716 = vpop.f32.mrb[0].mxu0
      %3717 = vmatprep.mubr.f32.mxu0 0.0
      %3718 = vmatmul.mubr.f32.gmra.mrb[0].mxu0 %v3518
      %v3719 = vpop.f32.mrb[0].mxu0
      %v3720 = vadd.f32 0.0, %v3719
      %v3721 = vpop.f32.mrb[0].mxu0
      %3722 = vmatprep.mubr.f32.mxu0 0.0
      %3723 = vmatmul.mubr.f32.gmra.mrb[0].mxu0 %v3521
      %v3724 = vpop.f32.mrb[0].mxu0
      %v3725 = vadd.f32 0.0, %v3724
      %v3726 = vpop.f32.mrb[0].mxu0
      %3727 = vmatprep.mubr.f32.mxu0 0.0
      %3728 = vmatmul.mubr.f32.gmra.mrb[0].mxu0 %v3524
      %v3729 = vpop.f32.mrb[0].mxu0
      %v3730 = vadd.f32 0.0, %v3729
      %v3731 = vpop.f32.mrb[0].mxu0
      %3732 = vmatprep.mubr.f32.mxu0 0.0
      %3733 = vmatmul.mubr.f32.gmra.mrb[0].mxu0 %v3527
      %v3734 = vpop.f32.mrb[0].mxu0
      %v3735 = vadd.f32 0.0, %v3734
      %v3736 = vpop.f32.mrb[0].mxu0
      %3737 = vmatprep.mubr.f32.mxu0 0.0
      %3738 = vmatmul.mubr.f32.gmra.mrb[0].mxu0 %v3530
      %v3739 = vpop.f32.mrb[0].mxu0
      %v3740 = vadd.f32 0.0, %v3739
      %v3741 = vpop.f32.mrb[0].mxu0
      %3742 = vmatprep.mubr.f32.mxu0 0.0
      %3743 = vmatmul.mubr.f32.gmra.mrb[0].mxu0 %v3533
      %v3744 = vpop.f32.mrb[0].mxu0
      %v3745 = vadd.f32 0.0, %v3744
      %v3746 = vpop.f32.mrb[0].mxu0
      %3747 = vmatprep.mubr.f32.mxu0 0.0
      %3748 = vmatmul.mubr.f32.gmra.mrb[0].mxu0 %v3536
      %v3749 = vpop.f32.mrb[0].mxu0
      %v3750 = vadd.f32 0.0, %v3749
      %v3751 = vpop.f32.mrb[0].mxu0
      %3752 = vmatprep.mubr.f32.mxu0 0.0
      %3753 = vmatmul.mubr.f32.gmra.mrb[0].mxu0 %v3539
      %v3754 = vpop.f32.mrb[0].mxu0
      %v3755 = vadd.f32 0.0, %v3754
      %v3756 = vpop.f32.mrb[0].mxu0
      %3757 = vmatprep.mubr.f32.mxu0 0.0
      %3758 = vmatmul.mubr.f32.gmra.mrb[0].mxu0 %v3542
      %v3759 = vpop.f32.mrb[0].mxu0
      %v3760 = vadd.f32 0.0, %v3759
      %v3761 = vpop.f32.mrb[0].mxu0
      %3762 = vmatprep.mubr.f32.mxu0 0.0
      %3763 = vmatmul.mubr.f32.gmra.mrb[0].mxu0 %v3545
      %v3764 = vpop.f32.mrb[0].mxu0
      %v3765 = vadd.f32 0.0, %v3764
      %v3766 = vpop.f32.mrb[0].mxu0
      %3767 = vmatprep.mubr.f32.mxu0 0.0
      %3768 = vmatmul.mubr.f32.gmra.mrb[0].mxu0 %v3548
      %v3769 = vpop.f32.mrb[0].mxu0
      %v3770 = vadd.f32 0.0, %v3769
      %v3771 = vpop.f32.mrb[0].mxu0
      %3772 = vmatprep.mubr.f32.mxu0 0.0
      %3773 = vmatmul.mubr.f32.gmra.mrb[0].mxu0 %v3551
      %v3774 = vpop.f32.mrb[0].mxu0
      %v3775 = vadd.f32 0.0, %v3774
      %v3776 = vpop.f32.mrb[0].mxu0
      %3777 = vmatprep.mubr.f32.mxu0 0.0
      %3778 = vmatmul.mubr.f32.gmra.mrb[0].mxu0 %v3554
      %v3779 = vpop.f32.mrb[0].mxu0
      %v3780 = vadd.f32 0.0, %v3779
      %v3781 = vpop.f32.mrb[0].mxu0
      %3782 = vmatprep.mubr.f32.mxu0 0.0
      %3783 = vmatmul.mubr.f32.gmra.mrb[0].mxu0 %v3557
      %v3784 = vpop.f32.mrb[0].mxu0
      %v3785 = vadd.f32 0.0, %v3784
      %v3786 = vpop.f32.mrb[0].mxu0
      %3787 = vmatprep.mubr.f32.mxu0 0.0
      %3788 = vmatmul.mubr.f32.gmra.mrb[0].mxu0 %v3560
      %v3789 = vpop.f32.mrb[0].mxu0
      %v3790 = vadd.f32 0.0, %v3789
      %v3791 = vpop.f32.mrb[0].mxu0
      %3792 = vmatprep.mubr.f32.mxu0 0.0
      %3793 = vmatmul.mubr.f32.gmra.mrb[0].mxu0 %v3563
      %v3794 = vpop.f32.mrb[0].mxu0
      %v3795 = vadd.f32 0.0, %v3794
      %v3796 = vpop.f32.mrb[0].mxu0
      %3797 = vmatprep.mubr.f32.mxu0 0.0
      %3798 = vmatmul.mubr.f32.gmra.mrb[0].mxu0 %v3566
      %v3799 = vpop.f32.mrb[0].mxu0
      %v3800 = vadd.f32 0.0, %v3799
      %v3801 = vpop.f32.mrb[0].mxu0
      %3802 = vmatprep.mubr.f32.mxu0 0.0
      %3803 = vmatmul.mubr.f32.gmra.mrb[0].mxu0 %v3569
      %v3804 = vpop.f32.mrb[0].mxu0
      %v3805 = vadd.f32 0.0, %v3804
      %v3806 = vpop.f32.mrb[0].mxu0
      %3807 = vmatprep.mubr.f32.mxu0 0.0
      %3808 = vmatmul.mubr.f32.gmra.mrb[0].mxu0 %v3572
      %v3809 = vpop.f32.mrb[0].mxu0
      %v3810 = vadd.f32 0.0, %v3809
      %v3811 = vpop.f32.mrb[0].mxu0
      %3812 = vmatprep.mubr.f32.mxu0 0.0
      %3813 = vmatmul.mubr.f32.gmra.mrb[0].mxu0 %v3575
      %v3814 = vpop.f32.mrb[0].mxu0
      %v3815 = vadd.f32 0.0, %v3814
      %v3816 = vpop.f32.mrb[0].mxu0
      %3817 = vmatprep.mubr.f32.mxu0 0.0
      %3818 = vmatmul.mubr.f32.gmra.mrb[0].mxu0 %v3578
      %v3819 = vpop.f32.mrb[0].mxu0
      %v3820 = vadd.f32 0.0, %v3819
      %v3821 = vpop.f32.mrb[0].mxu0
      %3822 = vmatprep.mubr.f32.mxu0 0.0
      %3823 = vmatmul.mubr.f32.gmra.mrb[0].mxu0 %v3581
      %v3824 = vpop.f32.mrb[0].mxu0
      %v3825 = vadd.f32 0.0, %v3824
      %v3826 = vpop.f32.mrb[0].mxu0
      %3827 = vdwg.mxu0
      %v3828 = vadd.f32 %v3402, %v3650
      %v3829 = vadd.f32 %v3403, %v3655
      %v3830 = vadd.f32 %v3404, %v3660
      %v3831 = vadd.f32 %v3405, %v3665
      %v3832 = vadd.f32 %v3406, %v3670
      %v3833 = vadd.f32 %v3407, %v3675
      %v3834 = vadd.f32 %v3408, %v3680
      %v3835 = vadd.f32 %v3409, %v3685
      %v3836 = vadd.f32 %v3410, %v3690
      %v3837 = vadd.f32 %v3411, %v3695
      %v3838 = vadd.f32 %v3412, %v3700
      %v3839 = vadd.f32 %v3413, %v3705
      %v3840 = vadd.f32 %v3414, %v3710
      %v3841 = vadd.f32 %v3415, %v3715
      %v3842 = vadd.f32 %v3416, %v3720
      %v3843 = vadd.f32 %v3417, %v3725
      %v3844 = vadd.f32 %v3418, %v3730
      %v3845 = vadd.f32 %v3419, %v3735
      %v3846 = vadd.f32 %v3420, %v3740
      %v3847 = vadd.f32 %v3421, %v3745
      %v3848 = vadd.f32 %v3422, %v3750
      %v3849 = vadd.f32 %v3423, %v3755
      %v3850 = vadd.f32 %v3424, %v3760
      %v3851 = vadd.f32 %v3425, %v3765
      %v3852 = vadd.f32 %v3426, %v3770
      %v3853 = vadd.f32 %v3427, %v3775
      %v3854 = vadd.f32 %v3428, %v3780
      %v3855 = vadd.f32 %v3429, %v3785
      %v3856 = vadd.f32 %v3430, %v3790
      %v3857 = vadd.f32 %v3431, %v3795
      %v3858 = vadd.f32 %v3432, %v3800
      %v3859 = vadd.f32 %v3433, %v3805
      %v3860 = vadd.f32 %v3434, %v3810
      %v3861 = vadd.f32 %v3435, %v3815
      %v3862 = vadd.f32 %v3436, %v3820
      %v3863 = vadd.f32 %v3437, %v3825
      %v3864 = vld [vmem:[#allocation2 + $0x25] sm:$0xff]
      %v3865 = vld [vmem:[#allocation2 + $0x2d] sm:$0xff]
      %v3866 = vld [vmem:[#allocation2 + $0x35] sm:$0xff]
      %v3867 = vld [vmem:[#allocation2 + $0x3d] sm:$0xff]
      %v3868 = vld [vmem:[#allocation2 + $0x45] sm:$0xff]
      %v3869 = vld [vmem:[#allocation2 + $0x4d] sm:$0xff]
      %v3870 = vld [vmem:[#allocation2 + $0x55] sm:$0xff]
      %v3871 = vld [vmem:[#allocation2 + $0x5d] sm:$0xff]
      %v3872 = vld [vmem:[#allocation2 + $0x65] sm:$0xff]
      %v3873 = vld [vmem:[#allocation2 + $0x6d] sm:$0xff]
      %v3874 = vld [vmem:[#allocation2 + $0x75] sm:$0xff]
      %v3875 = vld [vmem:[#allocation2 + $0x7d] sm:$0xff]
      %v3876 = vld [vmem:[#allocation2 + $0x85] sm:$0xff]
      %v3877 = vld [vmem:[#allocation2 + $0x8d] sm:$0xff]
      %v3878 = vld [vmem:[#allocation2 + $0x95] sm:$0xff]
      %v3879 = vld [vmem:[#allocation2 + $0x9d] sm:$0xff]
      %v3880 = vld [vmem:[#allocation2 + $0xa5] sm:$0xff]
      %v3881 = vld [vmem:[#allocation2 + $0xad] sm:$0xff]
      %v3882 = vld [vmem:[#allocation2 + $0xb5] sm:$0xff]
      %v3883 = vld [vmem:[#allocation2 + $0xbd] sm:$0xff]
      %v3884 = vld [vmem:[#allocation2 + $0xc5] sm:$0xff]
      %v3885 = vld [vmem:[#allocation2 + $0xcd] sm:$0xff]
      %v3886 = vld [vmem:[#allocation2 + $0xd5] sm:$0xff]
      %v3887 = vld [vmem:[#allocation2 + $0xdd] sm:$0xff]
      %v3888 = vld [vmem:[#allocation2 + $0xe5] sm:$0xff]
      %v3889 = vld [vmem:[#allocation2 + $0xed] sm:$0xff]
      %v3890 = vld [vmem:[#allocation2 + $0xf5] sm:$0xff]
      %v3891 = vld [vmem:[#allocation2 + $0xfd] sm:$0xff]
      %v3892 = vld [vmem:[#allocation2 + $0x105] sm:$0xff]
      %v3893 = vld [vmem:[#allocation2 + $0x10d] sm:$0xff]
      %v3894 = vld [vmem:[#allocation2 + $0x115] sm:$0xff]
      %v3895 = vld [vmem:[#allocation2 + $0x11d] sm:$0xff]
      %v3896 = vld [vmem:[#allocation2 + $0x125] sm:$0xff]
      %v3897 = vld [vmem:[#allocation2 + $0x12d] sm:$0xff]
      %v3898 = vld [vmem:[#allocation2 + $0x135] sm:$0xff]
      %v3899 = vld [vmem:[#allocation2 + $0x13d] sm:$0x3f]
      %v3900 = vld [vmem:[%s7 + $0x38] sm:$0xff]
      %v3902 = vsel %vm832, %v3864, 0
      %v3905 = vsel %vm832, %v3865, 0
      %v3908 = vsel %vm832, %v3866, 0
      %v3911 = vsel %vm832, %v3867, 0
      %v3914 = vsel %vm832, %v3868, 0
      %v3917 = vsel %vm832, %v3869, 0
      %v3920 = vsel %vm832, %v3870, 0
      %v3923 = vsel %vm832, %v3871, 0
      %v3926 = vsel %vm832, %v3872, 0
      %v3929 = vsel %vm832, %v3873, 0
      %v3932 = vsel %vm832, %v3874, 0
      %v3935 = vsel %vm832, %v3875, 0
      %v3938 = vsel %vm832, %v3876, 0
      %v3941 = vsel %vm832, %v3877, 0
      %v3944 = vsel %vm832, %v3878, 0
      %v3947 = vsel %vm832, %v3879, 0
      %v3950 = vsel %vm832, %v3880, 0
      %v3953 = vsel %vm832, %v3881, 0
      %v3956 = vsel %vm832, %v3882, 0
      %v3959 = vsel %vm832, %v3883, 0
      %v3962 = vsel %vm832, %v3884, 0
      %v3965 = vsel %vm832, %v3885, 0
      %v3968 = vsel %vm832, %v3886, 0
      %v3971 = vsel %vm832, %v3887, 0
      %v3974 = vsel %vm832, %v3888, 0
      %v3977 = vsel %vm832, %v3889, 0
      %v3980 = vsel %vm832, %v3890, 0
      %v3983 = vsel %vm832, %v3891, 0
      %v3986 = vsel %vm832, %v3892, 0
      %v3989 = vsel %vm832, %v3893, 0
      %v3992 = vsel %vm832, %v3894, 0
      %v3995 = vsel %vm832, %v3895, 0
      %v3998 = vsel %vm832, %v3896, 0
      %v4001 = vsel %vm832, %v3897, 0
      %v4004 = vsel %vm832, %v3898, 0
      %v4007 = vsel %vm832, %v3899, 0
      %4009 = vmatprep.subr.mxu0 0.0
      %4010 = vmatpush1.msra.mxu0 %v3900
      %4011 = vmatprep.subr.mxu0 0.0
      %4012 = vmatpush1.msra.mxu0 0.0
      %4013 = vmatprep.subr.mxu0 0.0
      %4014 = vmatpush1.msra.mxu0 0.0
      %4015 = vmatprep.subr.mxu0 0.0
      %4016 = vmatpush1.msra.mxu0 0.0
      %4017 = vmatprep.subr.mxu0 0.0
      %4018 = vmatpush1.msra.mxu0 0.0
      %4019 = vmatprep.subr.mxu0 0.0
      %4020 = vmatpush1.msra.mxu0 0.0
      %4021 = vmatprep.subr.mxu0 0.0
      %4022 = vmatpush1.msra.mxu0 0.0
      %4023 = vmatprep.subr.mxu0 0.0
      %4024 = vmatpush1.msra.mxu0 0.0
      %4025 = vmatprep.subr.mxu0 0.0
      %4026 = vmatpush1.msra.mxu0 0.0
      %4027 = vmatprep.subr.mxu0 0.0
      %4028 = vmatpush1.msra.mxu0 0.0
      %4029 = vmatprep.subr.mxu0 0.0
      %4030 = vmatpush1.msra.mxu0 0.0
      %4031 = vmatprep.subr.mxu0 0.0
      %4032 = vmatpush1.msra.mxu0 0.0
      %4033 = vmatprep.subr.mxu0 0.0
      %4034 = vmatpush1.msra.mxu0 0.0
      %4035 = vmatprep.subr.mxu0 0.0
      %4036 = vmatpush1.msra.mxu0 0.0
      %4037 = vmatprep.subr.mxu0 0.0
      %4038 = vmatpush1.msra.mxu0 0.0
      %4039 = vmatprep.subr.mxu0 0.0
      %4040 = vmatpush1.msra.mxu0 0.0
      %4041 = vmatprep.subr.mxu0 0.0
      %4042 = vmatpush1.msra.mxu0 0.0
      %4043 = vmatprep.subr.mxu0 0.0
      %4044 = vmatpush1.msra.mxu0 0.0
      %4045 = vmatprep.subr.mxu0 0.0
      %4046 = vmatpush1.msra.mxu0 0.0
      %4047 = vmatprep.subr.mxu0 0.0
      %4048 = vmatpush1.msra.mxu0 0.0
      %4049 = vmatprep.subr.mxu0 0.0
      %4050 = vmatpush1.msra.mxu0 0.0
      %4051 = vmatprep.subr.mxu0 0.0
      %4052 = vmatpush1.msra.mxu0 0.0
      %4053 = vmatprep.subr.mxu0 0.0
      %4054 = vmatpush1.msra.mxu0 0.0
      %4055 = vmatprep.subr.mxu0 0.0
      %4056 = vmatpush1.msra.mxu0 0.0
      %4057 = vmatprep.subr.mxu0 0.0
      %4058 = vmatpush1.msra.mxu0 0.0
      %4059 = vmatprep.subr.mxu0 0.0
      %4060 = vmatpush1.msra.mxu0 0.0
      %4061 = vmatprep.subr.mxu0 0.0
      %4062 = vmatpush1.msra.mxu0 0.0
      %4063 = vmatprep.subr.mxu0 0.0
      %4064 = vmatpush1.msra.mxu0 0.0
      %4065 = vmatprep.subr.mxu0 0.0
      %4066 = vmatpush1.msra.mxu0 0.0
      %4067 = vmatprep.subr.mxu0 0.0
      %4068 = vmatpush1.msra.mxu0 0.0
      %4069 = vmatprep.subr.mxu0 0.0
      %4070 = vmatpush1.msra.mxu0 0.0
      %4071 = vmatprep.subr.mxu0 0.0
      %4072 = vmatpush1.msra.mxu0 0.0
      %4073 = vmatprep.mubr.f32.mxu0 0.0
      %4074 = vmatmul.mubr.f32.gmra.mrb[0].mxu0 %v3902
      %v4075 = vpop.f32.mrb[0].mxu0
      %v4076 = vadd.f32 0.0, %v4075
      %v4077 = vpop.f32.mrb[0].mxu0
      %4078 = vmatprep.mubr.f32.mxu0 0.0
      %4079 = vmatmul.mubr.f32.gmra.mrb[0].mxu0 %v3905
      %v4080 = vpop.f32.mrb[0].mxu0
      %v4081 = vadd.f32 0.0, %v4080
      %v4082 = vpop.f32.mrb[0].mxu0
      %4083 = vmatprep.mubr.f32.mxu0 0.0
      %4084 = vmatmul.mubr.f32.gmra.mrb[0].mxu0 %v3908
      %v4085 = vpop.f32.mrb[0].mxu0
      %v4086 = vadd.f32 0.0, %v4085
      %v4087 = vpop.f32.mrb[0].mxu0
      %4088 = vmatprep.mubr.f32.mxu0 0.0
      %4089 = vmatmul.mubr.f32.gmra.mrb[0].mxu0 %v3911
      %v4090 = vpop.f32.mrb[0].mxu0
      %v4091 = vadd.f32 0.0, %v4090
      %v4092 = vpop.f32.mrb[0].mxu0
      %4093 = vmatprep.mubr.f32.mxu0 0.0
      %4094 = vmatmul.mubr.f32.gmra.mrb[0].mxu0 %v3914
      %v4095 = vpop.f32.mrb[0].mxu0
      %v4096 = vadd.f32 0.0, %v4095
      %v4097 = vpop.f32.mrb[0].mxu0
      %4098 = vmatprep.mubr.f32.mxu0 0.0
      %4099 = vmatmul.mubr.f32.gmra.mrb[0].mxu0 %v3917
      %v4100 = vpop.f32.mrb[0].mxu0
      %v4101 = vadd.f32 0.0, %v4100
      %v4102 = vpop.f32.mrb[0].mxu0
      %4103 = vmatprep.mubr.f32.mxu0 0.0
      %4104 = vmatmul.mubr.f32.gmra.mrb[0].mxu0 %v3920
      %v4105 = vpop.f32.mrb[0].mxu0
      %v4106 = vadd.f32 0.0, %v4105
      %v4107 = vpop.f32.mrb[0].mxu0
      %4108 = vmatprep.mubr.f32.mxu0 0.0
      %4109 = vmatmul.mubr.f32.gmra.mrb[0].mxu0 %v3923
      %v4110 = vpop.f32.mrb[0].mxu0
      %v4111 = vadd.f32 0.0, %v4110
      %v4112 = vpop.f32.mrb[0].mxu0
      %4113 = vmatprep.mubr.f32.mxu0 0.0
      %4114 = vmatmul.mubr.f32.gmra.mrb[0].mxu0 %v3926
      %v4115 = vpop.f32.mrb[0].mxu0
      %v4116 = vadd.f32 0.0, %v4115
      %v4117 = vpop.f32.mrb[0].mxu0
      %4118 = vmatprep.mubr.f32.mxu0 0.0
      %4119 = vmatmul.mubr.f32.gmra.mrb[0].mxu0 %v3929
      %v4120 = vpop.f32.mrb[0].mxu0
      %v4121 = vadd.f32 0.0, %v4120
      %v4122 = vpop.f32.mrb[0].mxu0
      %4123 = vmatprep.mubr.f32.mxu0 0.0
      %4124 = vmatmul.mubr.f32.gmra.mrb[0].mxu0 %v3932
      %v4125 = vpop.f32.mrb[0].mxu0
      %v4126 = vadd.f32 0.0, %v4125
      %v4127 = vpop.f32.mrb[0].mxu0
      %4128 = vmatprep.mubr.f32.mxu0 0.0
      %4129 = vmatmul.mubr.f32.gmra.mrb[0].mxu0 %v3935
      %v4130 = vpop.f32.mrb[0].mxu0
      %v4131 = vadd.f32 0.0, %v4130
      %v4132 = vpop.f32.mrb[0].mxu0
      %4133 = vmatprep.mubr.f32.mxu0 0.0
      %4134 = vmatmul.mubr.f32.gmra.mrb[0].mxu0 %v3938
      %v4135 = vpop.f32.mrb[0].mxu0
      %v4136 = vadd.f32 0.0, %v4135
      %v4137 = vpop.f32.mrb[0].mxu0
      %4138 = vmatprep.mubr.f32.mxu0 0.0
      %4139 = vmatmul.mubr.f32.gmra.mrb[0].mxu0 %v3941
      %v4140 = vpop.f32.mrb[0].mxu0
      %v4141 = vadd.f32 0.0, %v4140
      %v4142 = vpop.f32.mrb[0].mxu0
      %4143 = vmatprep.mubr.f32.mxu0 0.0
      %4144 = vmatmul.mubr.f32.gmra.mrb[0].mxu0 %v3944
      %v4145 = vpop.f32.mrb[0].mxu0
      %v4146 = vadd.f32 0.0, %v4145
      %v4147 = vpop.f32.mrb[0].mxu0
      %4148 = vmatprep.mubr.f32.mxu0 0.0
      %4149 = vmatmul.mubr.f32.gmra.mrb[0].mxu0 %v3947
      %v4150 = vpop.f32.mrb[0].mxu0
      %v4151 = vadd.f32 0.0, %v4150
      %v4152 = vpop.f32.mrb[0].mxu0
      %4153 = vmatprep.mubr.f32.mxu0 0.0
      %4154 = vmatmul.mubr.f32.gmra.mrb[0].mxu0 %v3950
      %v4155 = vpop.f32.mrb[0].mxu0
      %v4156 = vadd.f32 0.0, %v4155
      %v4157 = vpop.f32.mrb[0].mxu0
      %4158 = vmatprep.mubr.f32.mxu0 0.0
      %4159 = vmatmul.mubr.f32.gmra.mrb[0].mxu0 %v3953
      %v4160 = vpop.f32.mrb[0].mxu0
      %v4161 = vadd.f32 0.0, %v4160
      %v4162 = vpop.f32.mrb[0].mxu0
      %4163 = vmatprep.mubr.f32.mxu0 0.0
      %4164 = vmatmul.mubr.f32.gmra.mrb[0].mxu0 %v3956
      %v4165 = vpop.f32.mrb[0].mxu0
      %v4166 = vadd.f32 0.0, %v4165
      %v4167 = vpop.f32.mrb[0].mxu0
      %4168 = vmatprep.mubr.f32.mxu0 0.0
      %4169 = vmatmul.mubr.f32.gmra.mrb[0].mxu0 %v3959
      %v4170 = vpop.f32.mrb[0].mxu0
      %v4171 = vadd.f32 0.0, %v4170
      %v4172 = vpop.f32.mrb[0].mxu0
      %4173 = vmatprep.mubr.f32.mxu0 0.0
      %4174 = vmatmul.mubr.f32.gmra.mrb[0].mxu0 %v3962
      %v4175 = vpop.f32.mrb[0].mxu0
      %v4176 = vadd.f32 0.0, %v4175
      %v4177 = vpop.f32.mrb[0].mxu0
      %4178 = vmatprep.mubr.f32.mxu0 0.0
      %4179 = vmatmul.mubr.f32.gmra.mrb[0].mxu0 %v3965
      %v4180 = vpop.f32.mrb[0].mxu0
      %v4181 = vadd.f32 0.0, %v4180
      %v4182 = vpop.f32.mrb[0].mxu0
      %4183 = vmatprep.mubr.f32.mxu0 0.0
      %4184 = vmatmul.mubr.f32.gmra.mrb[0].mxu0 %v3968
      %v4185 = vpop.f32.mrb[0].mxu0
      %v4186 = vadd.f32 0.0, %v4185
      %v4187 = vpop.f32.mrb[0].mxu0
      %4188 = vmatprep.mubr.f32.mxu0 0.0
      %4189 = vmatmul.mubr.f32.gmra.mrb[0].mxu0 %v3971
      %v4190 = vpop.f32.mrb[0].mxu0
      %v4191 = vadd.f32 0.0, %v4190
      %v4192 = vpop.f32.mrb[0].mxu0
      %4193 = vmatprep.mubr.f32.mxu0 0.0
      %4194 = vmatmul.mubr.f32.gmra.mrb[0].mxu0 %v3974
      %v4195 = vpop.f32.mrb[0].mxu0
      %v4196 = vadd.f32 0.0, %v4195
      %v4197 = vpop.f32.mrb[0].mxu0
      %4198 = vmatprep.mubr.f32.mxu0 0.0
      %4199 = vmatmul.mubr.f32.gmra.mrb[0].mxu0 %v3977
      %v4200 = vpop.f32.mrb[0].mxu0
      %v4201 = vadd.f32 0.0, %v4200
      %v4202 = vpop.f32.mrb[0].mxu0
      %4203 = vmatprep.mubr.f32.mxu0 0.0
      %4204 = vmatmul.mubr.f32.gmra.mrb[0].mxu0 %v3980
      %v4205 = vpop.f32.mrb[0].mxu0
      %v4206 = vadd.f32 0.0, %v4205
      %v4207 = vpop.f32.mrb[0].mxu0
      %4208 = vmatprep.mubr.f32.mxu0 0.0
      %4209 = vmatmul.mubr.f32.gmra.mrb[0].mxu0 %v3983
      %v4210 = vpop.f32.mrb[0].mxu0
      %v4211 = vadd.f32 0.0, %v4210
      %v4212 = vpop.f32.mrb[0].mxu0
      %4213 = vmatprep.mubr.f32.mxu0 0.0
      %4214 = vmatmul.mubr.f32.gmra.mrb[0].mxu0 %v3986
      %v4215 = vpop.f32.mrb[0].mxu0
      %v4216 = vadd.f32 0.0, %v4215
      %v4217 = vpop.f32.mrb[0].mxu0
      %4218 = vmatprep.mubr.f32.mxu0 0.0
      %4219 = vmatmul.mubr.f32.gmra.mrb[0].mxu0 %v3989
      %v4220 = vpop.f32.mrb[0].mxu0
      %v4221 = vadd.f32 0.0, %v4220
      %v4222 = vpop.f32.mrb[0].mxu0
      %4223 = vmatprep.mubr.f32.mxu0 0.0
      %4224 = vmatmul.mubr.f32.gmra.mrb[0].mxu0 %v3992
      %v4225 = vpop.f32.mrb[0].mxu0
      %v4226 = vadd.f32 0.0, %v4225
      %v4227 = vpop.f32.mrb[0].mxu0
      %4228 = vmatprep.mubr.f32.mxu0 0.0
      %4229 = vmatmul.mubr.f32.gmra.mrb[0].mxu0 %v3995
      %v4230 = vpop.f32.mrb[0].mxu0
      %v4231 = vadd.f32 0.0, %v4230
      %v4232 = vpop.f32.mrb[0].mxu0
      %4233 = vmatprep.mubr.f32.mxu0 0.0
      %4234 = vmatmul.mubr.f32.gmra.mrb[0].mxu0 %v3998
      %v4235 = vpop.f32.mrb[0].mxu0
      %v4236 = vadd.f32 0.0, %v4235
      %v4237 = vpop.f32.mrb[0].mxu0
      %4238 = vmatprep.mubr.f32.mxu0 0.0
      %4239 = vmatmul.mubr.f32.gmra.mrb[0].mxu0 %v4001
      %v4240 = vpop.f32.mrb[0].mxu0
      %v4241 = vadd.f32 0.0, %v4240
      %v4242 = vpop.f32.mrb[0].mxu0
      %4243 = vmatprep.mubr.f32.mxu0 0.0
      %4244 = vmatmul.mubr.f32.gmra.mrb[0].mxu0 %v4004
      %v4245 = vpop.f32.mrb[0].mxu0
      %v4246 = vadd.f32 0.0, %v4245
      %v4247 = vpop.f32.mrb[0].mxu0
      %4248 = vmatprep.mubr.f32.mxu0 0.0
      %4249 = vmatmul.mubr.f32.gmra.mrb[0].mxu0 %v4007
      %v4250 = vpop.f32.mrb[0].mxu0
      %v4251 = vadd.f32 0.0, %v4250
      %v4252 = vpop.f32.mrb[0].mxu0
      %4253 = vdwg.mxu0
      %v4254 = vadd.f32 %v3828, %v4076
      %v4255 = vadd.f32 %v3829, %v4081
      %v4256 = vadd.f32 %v3830, %v4086
      %v4257 = vadd.f32 %v3831, %v4091
      %v4258 = vadd.f32 %v3832, %v4096
      %v4259 = vadd.f32 %v3833, %v4101
      %v4260 = vadd.f32 %v3834, %v4106
      %v4261 = vadd.f32 %v3835, %v4111
      %v4262 = vadd.f32 %v3836, %v4116
      %v4263 = vadd.f32 %v3837, %v4121
      %v4264 = vadd.f32 %v3838, %v4126
      %v4265 = vadd.f32 %v3839, %v4131
      %v4266 = vadd.f32 %v3840, %v4136
      %v4267 = vadd.f32 %v3841, %v4141
      %v4268 = vadd.f32 %v3842, %v4146
      %v4269 = vadd.f32 %v3843, %v4151
      %v4270 = vadd.f32 %v3844, %v4156
      %v4271 = vadd.f32 %v3845, %v4161
      %v4272 = vadd.f32 %v3846, %v4166
      %v4273 = vadd.f32 %v3847, %v4171
      %v4274 = vadd.f32 %v3848, %v4176
      %v4275 = vadd.f32 %v3849, %v4181
      %v4276 = vadd.f32 %v3850, %v4186
      %v4277 = vadd.f32 %v3851, %v4191
      %v4278 = vadd.f32 %v3852, %v4196
      %v4279 = vadd.f32 %v3853, %v4201
      %v4280 = vadd.f32 %v3854, %v4206
      %v4281 = vadd.f32 %v3855, %v4211
      %v4282 = vadd.f32 %v3856, %v4216
      %v4283 = vadd.f32 %v3857, %v4221
      %v4284 = vadd.f32 %v3858, %v4226
      %v4285 = vadd.f32 %v3859, %v4231
      %v4286 = vadd.f32 %v3860, %v4236
      %v4287 = vadd.f32 %v3861, %v4241
      %v4288 = vadd.f32 %v3862, %v4246
      %v4289 = vadd.f32 %v3863, %v4251
      %v4290 = vld [vmem:[#allocation2 + $0x26] sm:$0xff]
      %v4291 = vld [vmem:[#allocation2 + $0x2e] sm:$0xff]
      %v4292 = vld [vmem:[#allocation2 + $0x36] sm:$0xff]
      %v4293 = vld [vmem:[#allocation2 + $0x3e] sm:$0xff]
      %v4294 = vld [vmem:[#allocation2 + $0x46] sm:$0xff]
      %v4295 = vld [vmem:[#allocation2 + $0x4e] sm:$0xff]
      %v4296 = vld [vmem:[#allocation2 + $0x56] sm:$0xff]
      %v4297 = vld [vmem:[#allocation2 + $0x5e] sm:$0xff]
      %v4298 = vld [vmem:[#allocation2 + $0x66] sm:$0xff]
      %v4299 = vld [vmem:[#allocation2 + $0x6e] sm:$0xff]
      %v4300 = vld [vmem:[#allocation2 + $0x76] sm:$0xff]
      %v4301 = vld [vmem:[#allocation2 + $0x7e] sm:$0xff]
      %v4302 = vld [vmem:[#allocation2 + $0x86] sm:$0xff]
      %v4303 = vld [vmem:[#allocation2 + $0x8e] sm:$0xff]
      %v4304 = vld [vmem:[#allocation2 + $0x96] sm:$0xff]
      %v4305 = vld [vmem:[#allocation2 + $0x9e] sm:$0xff]
      %v4306 = vld [vmem:[#allocation2 + $0xa6] sm:$0xff]
      %v4307 = vld [vmem:[#allocation2 + $0xae] sm:$0xff]
      %v4308 = vld [vmem:[#allocation2 + $0xb6] sm:$0xff]
      %v4309 = vld [vmem:[#allocation2 + $0xbe] sm:$0xff]
      %v4310 = vld [vmem:[#allocation2 + $0xc6] sm:$0xff]
      %v4311 = vld [vmem:[#allocation2 + $0xce] sm:$0xff]
      %v4312 = vld [vmem:[#allocation2 + $0xd6] sm:$0xff]
      %v4313 = vld [vmem:[#allocation2 + $0xde] sm:$0xff]
      %v4314 = vld [vmem:[#allocation2 + $0xe6] sm:$0xff]
      %v4315 = vld [vmem:[#allocation2 + $0xee] sm:$0xff]
      %v4316 = vld [vmem:[#allocation2 + $0xf6] sm:$0xff]
      %v4317 = vld [vmem:[#allocation2 + $0xfe] sm:$0xff]
      %v4318 = vld [vmem:[#allocation2 + $0x106] sm:$0xff]
      %v4319 = vld [vmem:[#allocation2 + $0x10e] sm:$0xff]
      %v4320 = vld [vmem:[#allocation2 + $0x116] sm:$0xff]
      %v4321 = vld [vmem:[#allocation2 + $0x11e] sm:$0xff]
      %v4322 = vld [vmem:[#allocation2 + $0x126] sm:$0xff]
      %v4323 = vld [vmem:[#allocation2 + $0x12e] sm:$0xff]
      %v4324 = vld [vmem:[#allocation2 + $0x136] sm:$0xff]
      %v4325 = vld [vmem:[#allocation2 + $0x13e] sm:$0x3f]
      %v4326 = vld [vmem:[%s7 + $0x40] sm:$0xff]
      %v4328 = vsel %vm832, %v4290, 0
      %v4331 = vsel %vm832, %v4291, 0
      %v4334 = vsel %vm832, %v4292, 0
      %v4337 = vsel %vm832, %v4293, 0
      %v4340 = vsel %vm832, %v4294, 0
      %v4343 = vsel %vm832, %v4295, 0
      %v4346 = vsel %vm832, %v4296, 0
      %v4349 = vsel %vm832, %v4297, 0
      %v4352 = vsel %vm832, %v4298, 0
      %v4355 = vsel %vm832, %v4299, 0
      %v4358 = vsel %vm832, %v4300, 0
      %v4361 = vsel %vm832, %v4301, 0
      %v4364 = vsel %vm832, %v4302, 0
      %v4367 = vsel %vm832, %v4303, 0
      %v4370 = vsel %vm832, %v4304, 0
      %v4373 = vsel %vm832, %v4305, 0
      %v4376 = vsel %vm832, %v4306, 0
      %v4379 = vsel %vm832, %v4307, 0
      %v4382 = vsel %vm832, %v4308, 0
      %v4385 = vsel %vm832, %v4309, 0
      %v4388 = vsel %vm832, %v4310, 0
      %v4391 = vsel %vm832, %v4311, 0
      %v4394 = vsel %vm832, %v4312, 0
      %v4397 = vsel %vm832, %v4313, 0
      %v4400 = vsel %vm832, %v4314, 0
      %v4403 = vsel %vm832, %v4315, 0
      %v4406 = vsel %vm832, %v4316, 0
      %v4409 = vsel %vm832, %v4317, 0
      %v4412 = vsel %vm832, %v4318, 0
      %v4415 = vsel %vm832, %v4319, 0
      %v4418 = vsel %vm832, %v4320, 0
      %v4421 = vsel %vm832, %v4321, 0
      %v4424 = vsel %vm832, %v4322, 0
      %v4427 = vsel %vm832, %v4323, 0
      %v4430 = vsel %vm832, %v4324, 0
      %v4433 = vsel %vm832, %v4325, 0
      %4435 = vmatprep.subr.mxu0 0.0
      %4436 = vmatpush1.msra.mxu0 %v4326
      %4437 = vmatprep.subr.mxu0 0.0
      %4438 = vmatpush1.msra.mxu0 0.0
      %4439 = vmatprep.subr.mxu0 0.0
      %4440 = vmatpush1.msra.mxu0 0.0
      %4441 = vmatprep.subr.mxu0 0.0
      %4442 = vmatpush1.msra.mxu0 0.0
      %4443 = vmatprep.subr.mxu0 0.0
      %4444 = vmatpush1.msra.mxu0 0.0
      %4445 = vmatprep.subr.mxu0 0.0
      %4446 = vmatpush1.msra.mxu0 0.0
      %4447 = vmatprep.subr.mxu0 0.0
      %4448 = vmatpush1.msra.mxu0 0.0
      %4449 = vmatprep.subr.mxu0 0.0
      %4450 = vmatpush1.msra.mxu0 0.0
      %4451 = vmatprep.subr.mxu0 0.0
      %4452 = vmatpush1.msra.mxu0 0.0
      %4453 = vmatprep.subr.mxu0 0.0
      %4454 = vmatpush1.msra.mxu0 0.0
      %4455 = vmatprep.subr.mxu0 0.0
      %4456 = vmatpush1.msra.mxu0 0.0
      %4457 = vmatprep.subr.mxu0 0.0
      %4458 = vmatpush1.msra.mxu0 0.0
      %4459 = vmatprep.subr.mxu0 0.0
      %4460 = vmatpush1.msra.mxu0 0.0
      %4461 = vmatprep.subr.mxu0 0.0
      %4462 = vmatpush1.msra.mxu0 0.0
      %4463 = vmatprep.subr.mxu0 0.0
      %4464 = vmatpush1.msra.mxu0 0.0
      %4465 = vmatprep.subr.mxu0 0.0
      %4466 = vmatpush1.msra.mxu0 0.0
      %4467 = vmatprep.subr.mxu0 0.0
      %4468 = vmatpush1.msra.mxu0 0.0
      %4469 = vmatprep.subr.mxu0 0.0
      %4470 = vmatpush1.msra.mxu0 0.0
      %4471 = vmatprep.subr.mxu0 0.0
      %4472 = vmatpush1.msra.mxu0 0.0
      %4473 = vmatprep.subr.mxu0 0.0
      %4474 = vmatpush1.msra.mxu0 0.0
      %4475 = vmatprep.subr.mxu0 0.0
      %4476 = vmatpush1.msra.mxu0 0.0
      %4477 = vmatprep.subr.mxu0 0.0
      %4478 = vmatpush1.msra.mxu0 0.0
      %4479 = vmatprep.subr.mxu0 0.0
      %4480 = vmatpush1.msra.mxu0 0.0
      %4481 = vmatprep.subr.mxu0 0.0
      %4482 = vmatpush1.msra.mxu0 0.0
      %4483 = vmatprep.subr.mxu0 0.0
      %4484 = vmatpush1.msra.mxu0 0.0
      %4485 = vmatprep.subr.mxu0 0.0
      %4486 = vmatpush1.msra.mxu0 0.0
      %4487 = vmatprep.subr.mxu0 0.0
      %4488 = vmatpush1.msra.mxu0 0.0
      %4489 = vmatprep.subr.mxu0 0.0
      %4490 = vmatpush1.msra.mxu0 0.0
      %4491 = vmatprep.subr.mxu0 0.0
      %4492 = vmatpush1.msra.mxu0 0.0
      %4493 = vmatprep.subr.mxu0 0.0
      %4494 = vmatpush1.msra.mxu0 0.0
      %4495 = vmatprep.subr.mxu0 0.0
      %4496 = vmatpush1.msra.mxu0 0.0
      %4497 = vmatprep.subr.mxu0 0.0
      %4498 = vmatpush1.msra.mxu0 0.0
      %4499 = vmatprep.mubr.f32.mxu0 0.0
      %4500 = vmatmul.mubr.f32.gmra.mrb[0].mxu0 %v4328
      %v4501 = vpop.f32.mrb[0].mxu0
      %v4502 = vadd.f32 0.0, %v4501
      %v4503 = vpop.f32.mrb[0].mxu0
      %4504 = vmatprep.mubr.f32.mxu0 0.0
      %4505 = vmatmul.mubr.f32.gmra.mrb[0].mxu0 %v4331
      %v4506 = vpop.f32.mrb[0].mxu0
      %v4507 = vadd.f32 0.0, %v4506
      %v4508 = vpop.f32.mrb[0].mxu0
      %4509 = vmatprep.mubr.f32.mxu0 0.0
      %4510 = vmatmul.mubr.f32.gmra.mrb[0].mxu0 %v4334
      %v4511 = vpop.f32.mrb[0].mxu0
      %v4512 = vadd.f32 0.0, %v4511
      %v4513 = vpop.f32.mrb[0].mxu0
      %4514 = vmatprep.mubr.f32.mxu0 0.0
      %4515 = vmatmul.mubr.f32.gmra.mrb[0].mxu0 %v4337
      %v4516 = vpop.f32.mrb[0].mxu0
      %v4517 = vadd.f32 0.0, %v4516
      %v4518 = vpop.f32.mrb[0].mxu0
      %4519 = vmatprep.mubr.f32.mxu0 0.0
      %4520 = vmatmul.mubr.f32.gmra.mrb[0].mxu0 %v4340
      %v4521 = vpop.f32.mrb[0].mxu0
      %v4522 = vadd.f32 0.0, %v4521
      %v4523 = vpop.f32.mrb[0].mxu0
      %4524 = vmatprep.mubr.f32.mxu0 0.0
      %4525 = vmatmul.mubr.f32.gmra.mrb[0].mxu0 %v4343
      %v4526 = vpop.f32.mrb[0].mxu0
      %v4527 = vadd.f32 0.0, %v4526
      %v4528 = vpop.f32.mrb[0].mxu0
      %4529 = vmatprep.mubr.f32.mxu0 0.0
      %4530 = vmatmul.mubr.f32.gmra.mrb[0].mxu0 %v4346
      %v4531 = vpop.f32.mrb[0].mxu0
      %v4532 = vadd.f32 0.0, %v4531
      %v4533 = vpop.f32.mrb[0].mxu0
      %4534 = vmatprep.mubr.f32.mxu0 0.0
      %4535 = vmatmul.mubr.f32.gmra.mrb[0].mxu0 %v4349
      %v4536 = vpop.f32.mrb[0].mxu0
      %v4537 = vadd.f32 0.0, %v4536
      %v4538 = vpop.f32.mrb[0].mxu0
      %4539 = vmatprep.mubr.f32.mxu0 0.0
      %4540 = vmatmul.mubr.f32.gmra.mrb[0].mxu0 %v4352
      %v4541 = vpop.f32.mrb[0].mxu0
      %v4542 = vadd.f32 0.0, %v4541
      %v4543 = vpop.f32.mrb[0].mxu0
      %4544 = vmatprep.mubr.f32.mxu0 0.0
      %4545 = vmatmul.mubr.f32.gmra.mrb[0].mxu0 %v4355
      %v4546 = vpop.f32.mrb[0].mxu0
      %v4547 = vadd.f32 0.0, %v4546
      %v4548 = vpop.f32.mrb[0].mxu0
      %4549 = vmatprep.mubr.f32.mxu0 0.0
      %4550 = vmatmul.mubr.f32.gmra.mrb[0].mxu0 %v4358
      %v4551 = vpop.f32.mrb[0].mxu0
      %v4552 = vadd.f32 0.0, %v4551
      %v4553 = vpop.f32.mrb[0].mxu0
      %4554 = vmatprep.mubr.f32.mxu0 0.0
      %4555 = vmatmul.mubr.f32.gmra.mrb[0].mxu0 %v4361
      %v4556 = vpop.f32.mrb[0].mxu0
      %v4557 = vadd.f32 0.0, %v4556
      %v4558 = vpop.f32.mrb[0].mxu0
      %4559 = vmatprep.mubr.f32.mxu0 0.0
      %4560 = vmatmul.mubr.f32.gmra.mrb[0].mxu0 %v4364
      %v4561 = vpop.f32.mrb[0].mxu0
      %v4562 = vadd.f32 0.0, %v4561
      %v4563 = vpop.f32.mrb[0].mxu0
      %4564 = vmatprep.mubr.f32.mxu0 0.0
      %4565 = vmatmul.mubr.f32.gmra.mrb[0].mxu0 %v4367
      %v4566 = vpop.f32.mrb[0].mxu0
      %v4567 = vadd.f32 0.0, %v4566
      %v4568 = vpop.f32.mrb[0].mxu0
      %4569 = vmatprep.mubr.f32.mxu0 0.0
      %4570 = vmatmul.mubr.f32.gmra.mrb[0].mxu0 %v4370
      %v4571 = vpop.f32.mrb[0].mxu0
      %v4572 = vadd.f32 0.0, %v4571
      %v4573 = vpop.f32.mrb[0].mxu0
      %4574 = vmatprep.mubr.f32.mxu0 0.0
      %4575 = vmatmul.mubr.f32.gmra.mrb[0].mxu0 %v4373
      %v4576 = vpop.f32.mrb[0].mxu0
      %v4577 = vadd.f32 0.0, %v4576
      %v4578 = vpop.f32.mrb[0].mxu0
      %4579 = vmatprep.mubr.f32.mxu0 0.0
      %4580 = vmatmul.mubr.f32.gmra.mrb[0].mxu0 %v4376
      %v4581 = vpop.f32.mrb[0].mxu0
      %v4582 = vadd.f32 0.0, %v4581
      %v4583 = vpop.f32.mrb[0].mxu0
      %4584 = vmatprep.mubr.f32.mxu0 0.0
      %4585 = vmatmul.mubr.f32.gmra.mrb[0].mxu0 %v4379
      %v4586 = vpop.f32.mrb[0].mxu0
      %v4587 = vadd.f32 0.0, %v4586
      %v4588 = vpop.f32.mrb[0].mxu0
      %4589 = vmatprep.mubr.f32.mxu0 0.0
      %4590 = vmatmul.mubr.f32.gmra.mrb[0].mxu0 %v4382
      %v4591 = vpop.f32.mrb[0].mxu0
      %v4592 = vadd.f32 0.0, %v4591
      %v4593 = vpop.f32.mrb[0].mxu0
      %4594 = vmatprep.mubr.f32.mxu0 0.0
      %4595 = vmatmul.mubr.f32.gmra.mrb[0].mxu0 %v4385
      %v4596 = vpop.f32.mrb[0].mxu0
      %v4597 = vadd.f32 0.0, %v4596
      %v4598 = vpop.f32.mrb[0].mxu0
      %4599 = vmatprep.mubr.f32.mxu0 0.0
      %4600 = vmatmul.mubr.f32.gmra.mrb[0].mxu0 %v4388
      %v4601 = vpop.f32.mrb[0].mxu0
      %v4602 = vadd.f32 0.0, %v4601
      %v4603 = vpop.f32.mrb[0].mxu0
      %4604 = vmatprep.mubr.f32.mxu0 0.0
      %4605 = vmatmul.mubr.f32.gmra.mrb[0].mxu0 %v4391
      %v4606 = vpop.f32.mrb[0].mxu0
      %v4607 = vadd.f32 0.0, %v4606
      %v4608 = vpop.f32.mrb[0].mxu0
      %4609 = vmatprep.mubr.f32.mxu0 0.0
      %4610 = vmatmul.mubr.f32.gmra.mrb[0].mxu0 %v4394
      %v4611 = vpop.f32.mrb[0].mxu0
      %v4612 = vadd.f32 0.0, %v4611
      %v4613 = vpop.f32.mrb[0].mxu0
      %4614 = vmatprep.mubr.f32.mxu0 0.0
      %4615 = vmatmul.mubr.f32.gmra.mrb[0].mxu0 %v4397
      %v4616 = vpop.f32.mrb[0].mxu0
      %v4617 = vadd.f32 0.0, %v4616
      %v4618 = vpop.f32.mrb[0].mxu0
      %4619 = vmatprep.mubr.f32.mxu0 0.0
      %4620 = vmatmul.mubr.f32.gmra.mrb[0].mxu0 %v4400
      %v4621 = vpop.f32.mrb[0].mxu0
      %v4622 = vadd.f32 0.0, %v4621
      %v4623 = vpop.f32.mrb[0].mxu0
      %4624 = vmatprep.mubr.f32.mxu0 0.0
      %4625 = vmatmul.mubr.f32.gmra.mrb[0].mxu0 %v4403
      %v4626 = vpop.f32.mrb[0].mxu0
      %v4627 = vadd.f32 0.0, %v4626
      %v4628 = vpop.f32.mrb[0].mxu0
      %4629 = vmatprep.mubr.f32.mxu0 0.0
      %4630 = vmatmul.mubr.f32.gmra.mrb[0].mxu0 %v4406
      %v4631 = vpop.f32.mrb[0].mxu0
      %v4632 = vadd.f32 0.0, %v4631
      %v4633 = vpop.f32.mrb[0].mxu0
      %4634 = vmatprep.mubr.f32.mxu0 0.0
      %4635 = vmatmul.mubr.f32.gmra.mrb[0].mxu0 %v4409
      %v4636 = vpop.f32.mrb[0].mxu0
      %v4637 = vadd.f32 0.0, %v4636
      %v4638 = vpop.f32.mrb[0].mxu0
      %4639 = vmatprep.mubr.f32.mxu0 0.0
      %4640 = vmatmul.mubr.f32.gmra.mrb[0].mxu0 %v4412
      %v4641 = vpop.f32.mrb[0].mxu0
      %v4642 = vadd.f32 0.0, %v4641
      %v4643 = vpop.f32.mrb[0].mxu0
      %4644 = vmatprep.mubr.f32.mxu0 0.0
      %4645 = vmatmul.mubr.f32.gmra.mrb[0].mxu0 %v4415
      %v4646 = vpop.f32.mrb[0].mxu0
      %v4647 = vadd.f32 0.0, %v4646
      %v4648 = vpop.f32.mrb[0].mxu0
      %4649 = vmatprep.mubr.f32.mxu0 0.0
      %4650 = vmatmul.mubr.f32.gmra.mrb[0].mxu0 %v4418
      %v4651 = vpop.f32.mrb[0].mxu0
      %v4652 = vadd.f32 0.0, %v4651
      %v4653 = vpop.f32.mrb[0].mxu0
      %4654 = vmatprep.mubr.f32.mxu0 0.0
      %4655 = vmatmul.mubr.f32.gmra.mrb[0].mxu0 %v4421
      %v4656 = vpop.f32.mrb[0].mxu0
      %v4657 = vadd.f32 0.0, %v4656
      %v4658 = vpop.f32.mrb[0].mxu0
      %4659 = vmatprep.mubr.f32.mxu0 0.0
      %4660 = vmatmul.mubr.f32.gmra.mrb[0].mxu0 %v4424
      %v4661 = vpop.f32.mrb[0].mxu0
      %v4662 = vadd.f32 0.0, %v4661
      %v4663 = vpop.f32.mrb[0].mxu0
      %4664 = vmatprep.mubr.f32.mxu0 0.0
      %4665 = vmatmul.mubr.f32.gmra.mrb[0].mxu0 %v4427
      %v4666 = vpop.f32.mrb[0].mxu0
      %v4667 = vadd.f32 0.0, %v4666
      %v4668 = vpop.f32.mrb[0].mxu0
      %4669 = vmatprep.mubr.f32.mxu0 0.0
      %4670 = vmatmul.mubr.f32.gmra.mrb[0].mxu0 %v4430
      %v4671 = vpop.f32.mrb[0].mxu0
      %v4672 = vadd.f32 0.0, %v4671
      %v4673 = vpop.f32.mrb[0].mxu0
      %4674 = vmatprep.mubr.f32.mxu0 0.0
      %4675 = vmatmul.mubr.f32.gmra.mrb[0].mxu0 %v4433
      %v4676 = vpop.f32.mrb[0].mxu0
      %v4677 = vadd.f32 0.0, %v4676
      %v4678 = vpop.f32.mrb[0].mxu0
      %4679 = vdwg.mxu0
      %v4680 = vadd.f32 %v4254, %v4502
      %v4681 = vadd.f32 %v4255, %v4507
      %v4682 = vadd.f32 %v4256, %v4512
      %v4683 = vadd.f32 %v4257, %v4517
      %v4684 = vadd.f32 %v4258, %v4522
      %v4685 = vadd.f32 %v4259, %v4527
      %v4686 = vadd.f32 %v4260, %v4532
      %v4687 = vadd.f32 %v4261, %v4537
      %v4688 = vadd.f32 %v4262, %v4542
      %v4689 = vadd.f32 %v4263, %v4547
      %v4690 = vadd.f32 %v4264, %v4552
      %v4691 = vadd.f32 %v4265, %v4557
      %v4692 = vadd.f32 %v4266, %v4562
      %v4693 = vadd.f32 %v4267, %v4567
      %v4694 = vadd.f32 %v4268, %v4572
      %v4695 = vadd.f32 %v4269, %v4577
      %v4696 = vadd.f32 %v4270, %v4582
      %v4697 = vadd.f32 %v4271, %v4587
      %v4698 = vadd.f32 %v4272, %v4592
      %v4699 = vadd.f32 %v4273, %v4597
      %v4700 = vadd.f32 %v4274, %v4602
      %v4701 = vadd.f32 %v4275, %v4607
      %v4702 = vadd.f32 %v4276, %v4612
      %v4703 = vadd.f32 %v4277, %v4617
      %v4704 = vadd.f32 %v4278, %v4622
      %v4705 = vadd.f32 %v4279, %v4627
      %v4706 = vadd.f32 %v4280, %v4632
      %v4707 = vadd.f32 %v4281, %v4637
      %v4708 = vadd.f32 %v4282, %v4642
      %v4709 = vadd.f32 %v4283, %v4647
      %v4710 = vadd.f32 %v4284, %v4652
      %v4711 = vadd.f32 %v4285, %v4657
      %v4712 = vadd.f32 %v4286, %v4662
      %v4713 = vadd.f32 %v4287, %v4667
      %v4714 = vadd.f32 %v4288, %v4672
      %v4715 = vadd.f32 %v4289, %v4677
      %v4716 = vld [vmem:[%s395] sm:$0x1]
      %v4718 = vlaneseq
      %v4719 = vshrl.u32 %v4718, 7
      %v4720 = vsub.s32 0, %v4719
      %v4721 = vrot.slane %v4716, %v4720
      %v4723 = vadd.f32 %v4680, %v4721
      %v4724 = vadd.f32 %v4681, %v4721
      %v4725 = vadd.f32 %v4682, %v4721
      %v4726 = vadd.f32 %v4683, %v4721
      %v4727 = vadd.f32 %v4684, %v4721
      %v4728 = vadd.f32 %v4685, %v4721
      %v4729 = vadd.f32 %v4686, %v4721
      %v4730 = vadd.f32 %v4687, %v4721
      %v4731 = vadd.f32 %v4688, %v4721
      %v4732 = vadd.f32 %v4689, %v4721
      %v4733 = vadd.f32 %v4690, %v4721
      %v4734 = vadd.f32 %v4691, %v4721
      %v4735 = vadd.f32 %v4692, %v4721
      %v4736 = vadd.f32 %v4693, %v4721
      %v4737 = vadd.f32 %v4694, %v4721
      %v4738 = vadd.f32 %v4695, %v4721
      %v4739 = vadd.f32 %v4696, %v4721
      %v4740 = vadd.f32 %v4697, %v4721
      %v4741 = vadd.f32 %v4698, %v4721
      %v4742 = vadd.f32 %v4699, %v4721
      %v4743 = vadd.f32 %v4700, %v4721
      %v4744 = vadd.f32 %v4701, %v4721
      %v4745 = vadd.f32 %v4702, %v4721
      %v4746 = vadd.f32 %v4703, %v4721
      %v4747 = vadd.f32 %v4704, %v4721
      %v4748 = vadd.f32 %v4705, %v4721
      %v4749 = vadd.f32 %v4706, %v4721
      %v4750 = vadd.f32 %v4707, %v4721
      %v4751 = vadd.f32 %v4708, %v4721
      %v4752 = vadd.f32 %v4709, %v4721
      %v4753 = vadd.f32 %v4710, %v4721
      %v4754 = vadd.f32 %v4711, %v4721
      %v4755 = vadd.f32 %v4712, %v4721
      %v4756 = vadd.f32 %v4713, %v4721
      %v4757 = vadd.f32 %v4714, %v4721
      %v4758 = vadd.f32 %v4715, %v4721
      %v4759 = vmul.f32 %v4723, 0.70710677
      %v4760 = vmul.f32 %v4724, 0.70710677
      %v4761 = vmul.f32 %v4725, 0.70710677
      %v4762 = vmul.f32 %v4726, 0.70710677
      %v4763 = vmul.f32 %v4727, 0.70710677
      %v4764 = vmul.f32 %v4728, 0.70710677
      %v4765 = vmul.f32 %v4729, 0.70710677
      %v4766 = vmul.f32 %v4730, 0.70710677
      %v4767 = vmul.f32 %v4731, 0.70710677
      %v4768 = vmul.f32 %v4732, 0.70710677
      %v4769 = vmul.f32 %v4733, 0.70710677
      %v4770 = vmul.f32 %v4734, 0.70710677
      %v4771 = vmul.f32 %v4735, 0.70710677
      %v4772 = vmul.f32 %v4736, 0.70710677
      %v4773 = vmul.f32 %v4737, 0.70710677
      %v4774 = vmul.f32 %v4738, 0.70710677
      %v4775 = vmul.f32 %v4739, 0.70710677
      %v4776 = vmul.f32 %v4740, 0.70710677
      %v4777 = vmul.f32 %v4741, 0.70710677
      %v4778 = vmul.f32 %v4742, 0.70710677
      %v4779 = vmul.f32 %v4743, 0.70710677
      %v4780 = vmul.f32 %v4744, 0.70710677
      %v4781 = vmul.f32 %v4745, 0.70710677
      %v4782 = vmul.f32 %v4746, 0.70710677
      %v4783 = vmul.f32 %v4747, 0.70710677
      %v4784 = vmul.f32 %v4748, 0.70710677
      %v4785 = vmul.f32 %v4749, 0.70710677
      %v4786 = vmul.f32 %v4750, 0.70710677
      %v4787 = vmul.f32 %v4751, 0.70710677
      %v4788 = vmul.f32 %v4752, 0.70710677
      %v4789 = vmul.f32 %v4753, 0.70710677
      %v4790 = vmul.f32 %v4754, 0.70710677
      %v4791 = vmul.f32 %v4755, 0.70710677
      %v4792 = vmul.f32 %v4756, 0.70710677
      %v4793 = vmul.f32 %v4757, 0.70710677
      %v4794 = vmul.f32 %v4758, 0.70710677
      %v4795 = vxor.u32 %v4759, 2147483648
      %v4796 = vxor.u32 %v4760, 2147483648
      %v4797 = vxor.u32 %v4761, 2147483648
      %v4798 = vxor.u32 %v4762, 2147483648
      %v4799 = vxor.u32 %v4763, 2147483648
      %v4800 = vxor.u32 %v4764, 2147483648
      %v4801 = vxor.u32 %v4765, 2147483648
      %v4802 = vxor.u32 %v4766, 2147483648
      %v4803 = vxor.u32 %v4767, 2147483648
      %v4804 = vxor.u32 %v4768, 2147483648
      %v4805 = vxor.u32 %v4769, 2147483648
      %v4806 = vxor.u32 %v4770, 2147483648
      %v4807 = vxor.u32 %v4771, 2147483648
      %v4808 = vxor.u32 %v4772, 2147483648
      %v4809 = vxor.u32 %v4773, 2147483648
      %v4810 = vxor.u32 %v4774, 2147483648
      %v4811 = vxor.u32 %v4775, 2147483648
      %v4812 = vxor.u32 %v4776, 2147483648
      %v4813 = vxor.u32 %v4777, 2147483648
      %v4814 = vxor.u32 %v4778, 2147483648
      %v4815 = vxor.u32 %v4779, 2147483648
      %v4816 = vxor.u32 %v4780, 2147483648
      %v4817 = vxor.u32 %v4781, 2147483648
      %v4818 = vxor.u32 %v4782, 2147483648
      %v4819 = vxor.u32 %v4783, 2147483648
      %v4820 = vxor.u32 %v4784, 2147483648
      %v4821 = vxor.u32 %v4785, 2147483648
      %v4822 = vxor.u32 %v4786, 2147483648
      %v4823 = vxor.u32 %v4787, 2147483648
      %v4824 = vxor.u32 %v4788, 2147483648
      %v4825 = vxor.u32 %v4789, 2147483648
      %v4826 = vxor.u32 %v4790, 2147483648
      %v4827 = vxor.u32 %v4791, 2147483648
      %v4828 = vxor.u32 %v4792, 2147483648
      %v4829 = vxor.u32 %v4793, 2147483648
      %v4830 = vxor.u32 %v4794, 2147483648
      %v4831 = vmul.f32 %v4795, 1.442695
      %v4832 = vpow.pop %v4831
      %v4833 = vmul.f32 %v4796, 1.442695
      %v4834 = vpow.pop %v4833
      %v4835 = vmul.f32 %v4797, 1.442695
      %v4836 = vpow.pop %v4835
      %v4837 = vmul.f32 %v4798, 1.442695
      %v4838 = vpow.pop %v4837
      %v4839 = vmul.f32 %v4799, 1.442695
      %v4840 = vpow.pop %v4839
      %v4841 = vmul.f32 %v4800, 1.442695
      %v4842 = vpow.pop %v4841
      %v4843 = vmul.f32 %v4801, 1.442695
      %v4844 = vpow.pop %v4843
      %v4845 = vmul.f32 %v4802, 1.442695
      %v4846 = vpow.pop %v4845
      %v4847 = vmul.f32 %v4803, 1.442695
      %v4848 = vpow.pop %v4847
      %v4849 = vmul.f32 %v4804, 1.442695
      %v4850 = vpow.pop %v4849
      %v4851 = vmul.f32 %v4805, 1.442695
      %v4852 = vpow.pop %v4851
      %v4853 = vmul.f32 %v4806, 1.442695
      %v4854 = vpow.pop %v4853
      %v4855 = vmul.f32 %v4807, 1.442695
      %v4856 = vpow.pop %v4855
      %v4857 = vmul.f32 %v4808, 1.442695
      %v4858 = vpow.pop %v4857
      %v4859 = vmul.f32 %v4809, 1.442695
      %v4860 = vpow.pop %v4859
      %v4861 = vmul.f32 %v4810, 1.442695
      %v4862 = vpow.pop %v4861
      %v4863 = vmul.f32 %v4811, 1.442695
      %v4864 = vpow.pop %v4863
      %v4865 = vmul.f32 %v4812, 1.442695
      %v4866 = vpow.pop %v4865
      %v4867 = vmul.f32 %v4813, 1.442695
      %v4868 = vpow.pop %v4867
      %v4869 = vmul.f32 %v4814, 1.442695
      %v4870 = vpow.pop %v4869
      %v4871 = vmul.f32 %v4815, 1.442695
      %v4872 = vpow.pop %v4871
      %v4873 = vmul.f32 %v4816, 1.442695
      %v4874 = vpow.pop %v4873
      %v4875 = vmul.f32 %v4817, 1.442695
      %v4876 = vpow.pop %v4875
      %v4877 = vmul.f32 %v4818, 1.442695
      %v4878 = vpow.pop %v4877
      %v4879 = vmul.f32 %v4819, 1.442695
      %v4880 = vpow.pop %v4879
      %v4881 = vmul.f32 %v4820, 1.442695
      %v4882 = vpow.pop %v4881
      %v4883 = vmul.f32 %v4821, 1.442695
      %v4884 = vpow.pop %v4883
      %v4885 = vmul.f32 %v4822, 1.442695
      %v4886 = vpow.pop %v4885
      %v4887 = vmul.f32 %v4823, 1.442695
      %v4888 = vpow.pop %v4887
      %v4889 = vmul.f32 %v4824, 1.442695
      %v4890 = vpow.pop %v4889
      %v4891 = vmul.f32 %v4825, 1.442695
      %v4892 = vpow.pop %v4891
      %v4893 = vmul.f32 %v4826, 1.442695
      %v4894 = vpow.pop %v4893
      %v4895 = vmul.f32 %v4827, 1.442695
      %v4896 = vpow.pop %v4895
      %v4897 = vmul.f32 %v4828, 1.442695
      %v4898 = vpow.pop %v4897
      %v4899 = vmul.f32 %v4829, 1.442695
      %v4900 = vpow.pop %v4899
      %v4901 = vmul.f32 %v4830, 1.442695
      %v4902 = vpow.pop %v4901
      %v4903 = vadd.f32 %v4832, 1.0
      %v4904 = vadd.f32 %v4834, 1.0
      %v4905 = vadd.f32 %v4836, 1.0
      %v4906 = vadd.f32 %v4838, 1.0
      %v4907 = vadd.f32 %v4840, 1.0
      %v4908 = vadd.f32 %v4842, 1.0
      %v4909 = vadd.f32 %v4844, 1.0
      %v4910 = vadd.f32 %v4846, 1.0
      %v4911 = vadd.f32 %v4848, 1.0
      %v4912 = vadd.f32 %v4850, 1.0
      %v4913 = vadd.f32 %v4852, 1.0
      %v4914 = vadd.f32 %v4854, 1.0
      %v4915 = vadd.f32 %v4856, 1.0
      %v4916 = vadd.f32 %v4858, 1.0
      %v4917 = vadd.f32 %v4860, 1.0
      %v4918 = vadd.f32 %v4862, 1.0
      %v4919 = vadd.f32 %v4864, 1.0
      %v4920 = vadd.f32 %v4866, 1.0
      %v4921 = vadd.f32 %v4868, 1.0
      %v4922 = vadd.f32 %v4870, 1.0
      %v4923 = vadd.f32 %v4872, 1.0
      %v4924 = vadd.f32 %v4874, 1.0
      %v4925 = vadd.f32 %v4876, 1.0
      %v4926 = vadd.f32 %v4878, 1.0
      %v4927 = vadd.f32 %v4880, 1.0
      %v4928 = vadd.f32 %v4882, 1.0
      %v4929 = vadd.f32 %v4884, 1.0
      %v4930 = vadd.f32 %v4886, 1.0
      %v4931 = vadd.f32 %v4888, 1.0
      %v4932 = vadd.f32 %v4890, 1.0
      %v4933 = vadd.f32 %v4892, 1.0
      %v4934 = vadd.f32 %v4894, 1.0
      %v4935 = vadd.f32 %v4896, 1.0
      %v4936 = vadd.f32 %v4898, 1.0
      %v4937 = vadd.f32 %v4900, 1.0
      %v4938 = vadd.f32 %v4902, 1.0
      %v4939 = vrcp.pop %v4903
      %v4940 = vmul.f32 1.0, %v4939
      %v4941 = vrcp.pop %v4904
      %v4942 = vmul.f32 1.0, %v4941
      %v4943 = vrcp.pop %v4905
      %v4944 = vmul.f32 1.0, %v4943
      %v4945 = vrcp.pop %v4906
      %v4946 = vmul.f32 1.0, %v4945
      %v4947 = vrcp.pop %v4907
      %v4948 = vmul.f32 1.0, %v4947
      %v4949 = vrcp.pop %v4908
      %v4950 = vmul.f32 1.0, %v4949
      %v4951 = vrcp.pop %v4909
      %v4952 = vmul.f32 1.0, %v4951
      %v4953 = vrcp.pop %v4910
      %v4954 = vmul.f32 1.0, %v4953
      %v4955 = vrcp.pop %v4911
      %v4956 = vmul.f32 1.0, %v4955
      %v4957 = vrcp.pop %v4912
      %v4958 = vmul.f32 1.0, %v4957
      %v4959 = vrcp.pop %v4913
      %v4960 = vmul.f32 1.0, %v4959
      %v4961 = vrcp.pop %v4914
      %v4962 = vmul.f32 1.0, %v4961
      %v4963 = vrcp.pop %v4915
      %v4964 = vmul.f32 1.0, %v4963
      %v4965 = vrcp.pop %v4916
      %v4966 = vmul.f32 1.0, %v4965
      %v4967 = vrcp.pop %v4917
      %v4968 = vmul.f32 1.0, %v4967
      %v4969 = vrcp.pop %v4918
      %v4970 = vmul.f32 1.0, %v4969
      %v4971 = vrcp.pop %v4919
      %v4972 = vmul.f32 1.0, %v4971
      %v4973 = vrcp.pop %v4920
      %v4974 = vmul.f32 1.0, %v4973
      %v4975 = vrcp.pop %v4921
      %v4976 = vmul.f32 1.0, %v4975
      %v4977 = vrcp.pop %v4922
      %v4978 = vmul.f32 1.0, %v4977
      %v4979 = vrcp.pop %v4923
      %v4980 = vmul.f32 1.0, %v4979
      %v4981 = vrcp.pop %v4924
      %v4982 = vmul.f32 1.0, %v4981
      %v4983 = vrcp.pop %v4925
      %v4984 = vmul.f32 1.0, %v4983
      %v4985 = vrcp.pop %v4926
      %v4986 = vmul.f32 1.0, %v4985
      %v4987 = vrcp.pop %v4927
      %v4988 = vmul.f32 1.0, %v4987
      %v4989 = vrcp.pop %v4928
      %v4990 = vmul.f32 1.0, %v4989
      %v4991 = vrcp.pop %v4929
      %v4992 = vmul.f32 1.0, %v4991
      %v4993 = vrcp.pop %v4930
      %v4994 = vmul.f32 1.0, %v4993
      %v4995 = vrcp.pop %v4931
      %v4996 = vmul.f32 1.0, %v4995
      %v4997 = vrcp.pop %v4932
      %v4998 = vmul.f32 1.0, %v4997
      %v4999 = vrcp.pop %v4933
      %v5000 = vmul.f32 1.0, %v4999
      %v5001 = vrcp.pop %v4934
      %v5002 = vmul.f32 1.0, %v5001
      %v5003 = vrcp.pop %v4935
      %v5004 = vmul.f32 1.0, %v5003
      %v5005 = vrcp.pop %v4936
      %v5006 = vmul.f32 1.0, %v5005
      %v5007 = vrcp.pop %v4937
      %v5008 = vmul.f32 1.0, %v5007
      %v5009 = vrcp.pop %v4938
      %v5010 = vmul.f32 1.0, %v5009
      %5047 = vrot.lane.b32.xlu0 %v4759, 124
      %v5048 = vpop.permute.xlu0 %5047
      %5049 = vrot.lane.b32.xlu0 %v4760, 124
      %v5050 = vpop.permute.xlu0 %5049
      %5051 = vrot.lane.b32.xlu0 %v4761, 124
      %v5052 = vpop.permute.xlu0 %5051
      %5053 = vrot.lane.b32.xlu0 %v4762, 124
      %v5054 = vpop.permute.xlu0 %5053
      %5055 = vrot.lane.b32.xlu0 %v4763, 124
      %v5056 = vpop.permute.xlu0 %5055
      %5057 = vrot.lane.b32.xlu0 %v4764, 124
      %v5058 = vpop.permute.xlu0 %5057
      %5059 = vrot.lane.b32.xlu0 %v4765, 124
      %v5060 = vpop.permute.xlu0 %5059
      %5061 = vrot.lane.b32.xlu0 %v4766, 124
      %v5062 = vpop.permute.xlu0 %5061
      %5063 = vrot.lane.b32.xlu0 %v4767, 124
      %v5064 = vpop.permute.xlu0 %5063
      %5065 = vrot.lane.b32.xlu0 %v4768, 124
      %v5066 = vpop.permute.xlu0 %5065
      %5067 = vrot.lane.b32.xlu0 %v4769, 124
      %v5068 = vpop.permute.xlu0 %5067
      %5069 = vrot.lane.b32.xlu0 %v4770, 124
      %v5070 = vpop.permute.xlu0 %5069
      %5071 = vrot.lane.b32.xlu0 %v4771, 124
      %v5072 = vpop.permute.xlu0 %5071
      %5073 = vrot.lane.b32.xlu0 %v4772, 124
      %v5074 = vpop.permute.xlu0 %5073
      %5075 = vrot.lane.b32.xlu0 %v4773, 124
      %v5076 = vpop.permute.xlu0 %5075
      %5077 = vrot.lane.b32.xlu0 %v4774, 124
      %v5078 = vpop.permute.xlu0 %5077
      %5079 = vrot.lane.b32.xlu0 %v4775, 124
      %v5080 = vpop.permute.xlu0 %5079
      %5081 = vrot.lane.b32.xlu0 %v4776, 124
      %v5082 = vpop.permute.xlu0 %5081
      %5083 = vrot.lane.b32.xlu0 %v4777, 124
      %v5084 = vpop.permute.xlu0 %5083
      %5085 = vrot.lane.b32.xlu0 %v4778, 124
      %v5086 = vpop.permute.xlu0 %5085
      %5087 = vrot.lane.b32.xlu0 %v4779, 124
      %v5088 = vpop.permute.xlu0 %5087
      %5089 = vrot.lane.b32.xlu0 %v4780, 124
      %v5090 = vpop.permute.xlu0 %5089
      %5091 = vrot.lane.b32.xlu0 %v4781, 124
      %v5092 = vpop.permute.xlu0 %5091
      %5093 = vrot.lane.b32.xlu0 %v4782, 124
      %v5094 = vpop.permute.xlu0 %5093
      %5095 = vrot.lane.b32.xlu0 %v4783, 124
      %v5096 = vpop.permute.xlu0 %5095
      %5097 = vrot.lane.b32.xlu0 %v4784, 124
      %v5098 = vpop.permute.xlu0 %5097
      %5099 = vrot.lane.b32.xlu0 %v4785, 124
      %v5100 = vpop.permute.xlu0 %5099
      %5101 = vrot.lane.b32.xlu0 %v4786, 124
      %v5102 = vpop.permute.xlu0 %5101
      %5103 = vrot.lane.b32.xlu0 %v4787, 124
      %v5104 = vpop.permute.xlu0 %5103
      %5105 = vrot.lane.b32.xlu0 %v4788, 124
      %v5106 = vpop.permute.xlu0 %5105
      %5107 = vrot.lane.b32.xlu0 %v4789, 124
      %v5108 = vpop.permute.xlu0 %5107
      %5109 = vrot.lane.b32.xlu0 %v4790, 124
      %v5110 = vpop.permute.xlu0 %5109
      %5111 = vrot.lane.b32.xlu0 %v4791, 124
      %v5112 = vpop.permute.xlu0 %5111
      %5113 = vrot.lane.b32.xlu0 %v4792, 124
      %v5114 = vpop.permute.xlu0 %5113
      %5115 = vrot.lane.b32.xlu0 %v4793, 124
      %v5116 = vpop.permute.xlu0 %5115
      %5117 = vrot.lane.b32.xlu0 %v4794, 124
      %v5118 = vpop.permute.xlu0 %5117
      %v5155 = vmul.f32 %v4940, %v5048
      %v5156 = vmul.f32 %v4942, %v5050
      %v5157 = vmul.f32 %v4944, %v5052
      %v5158 = vmul.f32 %v4946, %v5054
      %v5159 = vmul.f32 %v4948, %v5056
      %v5160 = vmul.f32 %v4950, %v5058
      %v5161 = vmul.f32 %v4952, %v5060
      %v5162 = vmul.f32 %v4954, %v5062
      %v5163 = vmul.f32 %v4956, %v5064
      %v5164 = vmul.f32 %v4958, %v5066
      %v5165 = vmul.f32 %v4960, %v5068
      %v5166 = vmul.f32 %v4962, %v5070
      %v5167 = vmul.f32 %v4964, %v5072
      %v5168 = vmul.f32 %v4966, %v5074
      %v5169 = vmul.f32 %v4968, %v5076
      %v5170 = vmul.f32 %v4970, %v5078
      %v5171 = vmul.f32 %v4972, %v5080
      %v5172 = vmul.f32 %v4974, %v5082
      %v5173 = vmul.f32 %v4976, %v5084
      %v5174 = vmul.f32 %v4978, %v5086
      %v5175 = vmul.f32 %v4980, %v5088
      %v5176 = vmul.f32 %v4982, %v5090
      %v5177 = vmul.f32 %v4984, %v5092
      %v5178 = vmul.f32 %v4986, %v5094
      %v5179 = vmul.f32 %v4988, %v5096
      %v5180 = vmul.f32 %v4990, %v5098
      %v5181 = vmul.f32 %v4992, %v5100
      %v5182 = vmul.f32 %v4994, %v5102
      %v5183 = vmul.f32 %v4996, %v5104
      %v5184 = vmul.f32 %v4998, %v5106
      %v5185 = vmul.f32 %v5000, %v5108
      %v5186 = vmul.f32 %v5002, %v5110
      %v5187 = vmul.f32 %v5004, %v5112
      %v5188 = vmul.f32 %v5006, %v5114
      %v5189 = vmul.f32 %v5008, %v5116
      %v5190 = vmul.f32 %v5010, %v5118
      %v5191 = vld [vmem:[%s9] sm:$0xf]
      %v5192 = vld [vmem:[%s10] sm:$0x1]
      %v5194 = vlaneseq
      %v5195 = vshrl.u32 %v5194, 7
      %v5196 = vsub.s32 0, %v5195
      %v5197 = vrot.slane %v5192, %v5196
      %vm5199 = vcmask 31744
      %v5201 = vsel %vm5199, %v5155, 0
      %v5204 = vsel %vm5199, %v5156, 0
      %v5207 = vsel %vm5199, %v5157, 0
      %v5210 = vsel %vm5199, %v5158, 0
      %v5213 = vsel %vm5199, %v5159, 0
      %v5216 = vsel %vm5199, %v5160, 0
      %v5219 = vsel %vm5199, %v5161, 0
      %v5222 = vsel %vm5199, %v5162, 0
      %v5225 = vsel %vm5199, %v5163, 0
      %v5228 = vsel %vm5199, %v5164, 0
      %v5231 = vsel %vm5199, %v5165, 0
      %v5234 = vsel %vm5199, %v5166, 0
      %v5237 = vsel %vm5199, %v5167, 0
      %v5240 = vsel %vm5199, %v5168, 0
      %v5243 = vsel %vm5199, %v5169, 0
      %v5246 = vsel %vm5199, %v5170, 0
      %v5249 = vsel %vm5199, %v5171, 0
      %v5252 = vsel %vm5199, %v5172, 0
      %v5255 = vsel %vm5199, %v5173, 0
      %v5258 = vsel %vm5199, %v5174, 0
      %v5261 = vsel %vm5199, %v5175, 0
      %v5264 = vsel %vm5199, %v5176, 0
      %v5267 = vsel %vm5199, %v5177, 0
      %v5270 = vsel %vm5199, %v5178, 0
      %v5273 = vsel %vm5199, %v5179, 0
      %v5276 = vsel %vm5199, %v5180, 0
      %v5279 = vsel %vm5199, %v5181, 0
      %v5282 = vsel %vm5199, %v5182, 0
      %v5285 = vsel %vm5199, %v5183, 0
      %v5288 = vsel %vm5199, %v5184, 0
      %v5291 = vsel %vm5199, %v5185, 0
      %v5294 = vsel %vm5199, %v5186, 0
      %v5297 = vsel %vm5199, %v5187, 0
      %v5300 = vsel %vm5199, %v5188, 0
      %v5303 = vsel %vm5199, %v5189, 0
      %v5306 = vsel %vm5199, %v5190, 0
      %vm5308 = vcmask 1043456
      %v5310 = vsel %vm5308, %v5191, 0
      %5312 = vmatprep.subr.mxu0 0.0
      %5313 = vmatpush1.msra.mxu0 %v5310
      %5314 = vmatprep.subr.mxu0 0.0
      %5315 = vmatpush1.msra.mxu0 0.0
      %5316 = vmatprep.subr.mxu0 0.0
      %5317 = vmatpush1.msra.mxu0 0.0
      %5318 = vmatprep.subr.mxu0 0.0
      %5319 = vmatpush1.msra.mxu0 0.0
      %5320 = vmatprep.subr.mxu0 0.0
      %5321 = vmatpush1.msra.mxu0 0.0
      %5322 = vmatprep.subr.mxu0 0.0
      %5323 = vmatpush1.msra.mxu0 0.0
      %5324 = vmatprep.subr.mxu0 0.0
      %5325 = vmatpush1.msra.mxu0 0.0
      %5326 = vmatprep.subr.mxu0 0.0
      %5327 = vmatpush1.msra.mxu0 0.0
      %5328 = vmatprep.subr.mxu0 0.0
      %5329 = vmatpush1.msra.mxu0 0.0
      %5330 = vmatprep.subr.mxu0 0.0
      %5331 = vmatpush1.msra.mxu0 0.0
      %5332 = vmatprep.subr.mxu0 0.0
      %5333 = vmatpush1.msra.mxu0 0.0
      %5334 = vmatprep.subr.mxu0 0.0
      %5335 = vmatpush1.msra.mxu0 0.0
      %5336 = vmatprep.subr.mxu0 0.0
      %5337 = vmatpush1.msra.mxu0 0.0
      %5338 = vmatprep.subr.mxu0 0.0
      %5339 = vmatpush1.msra.mxu0 0.0
      %5340 = vmatprep.subr.mxu0 0.0
      %5341 = vmatpush1.msra.mxu0 0.0
      %5342 = vmatprep.subr.mxu0 0.0
      %5343 = vmatpush1.msra.mxu0 0.0
      %5344 = vmatprep.subr.mxu0 0.0
      %5345 = vmatpush1.msra.mxu0 0.0
      %5346 = vmatprep.subr.mxu0 0.0
      %5347 = vmatpush1.msra.mxu0 0.0
      %5348 = vmatprep.subr.mxu0 0.0
      %5349 = vmatpush1.msra.mxu0 0.0
      %5350 = vmatprep.subr.mxu0 0.0
      %5351 = vmatpush1.msra.mxu0 0.0
      %5352 = vmatprep.subr.mxu0 0.0
      %5353 = vmatpush1.msra.mxu0 0.0
      %5354 = vmatprep.subr.mxu0 0.0
      %5355 = vmatpush1.msra.mxu0 0.0
      %5356 = vmatprep.subr.mxu0 0.0
      %5357 = vmatpush1.msra.mxu0 0.0
      %5358 = vmatprep.subr.mxu0 0.0
      %5359 = vmatpush1.msra.mxu0 0.0
      %5360 = vmatprep.subr.mxu0 0.0
      %5361 = vmatpush1.msra.mxu0 0.0
      %5362 = vmatprep.subr.mxu0 0.0
      %5363 = vmatpush1.msra.mxu0 0.0
      %5364 = vmatprep.subr.mxu0 0.0
      %5365 = vmatpush1.msra.mxu0 0.0
      %5366 = vmatprep.subr.mxu0 0.0
      %5367 = vmatpush1.msra.mxu0 0.0
      %5368 = vmatprep.subr.mxu0 0.0
      %5369 = vmatpush1.msra.mxu0 0.0
      %5370 = vmatprep.subr.mxu0 0.0
      %5371 = vmatpush1.msra.mxu0 0.0
      %5372 = vmatprep.subr.mxu0 0.0
      %5373 = vmatpush1.msra.mxu0 0.0
      %5374 = vmatprep.subr.mxu0 0.0
      %5375 = vmatpush1.msra.mxu0 0.0
      %5376 = vmatprep.mubr.f32.mxu0 0.0
      %5377 = vmatmul.mubr.f32.gmra.mrb[0].mxu0 %v5201
      %v5378 = vpop.f32.mrb[0].mxu0
      %v5379 = vadd.f32 %v5197, %v5378
      %v5380 = vpop.f32.mrb[0].mxu0
      %5381 = vmatprep.mubr.f32.mxu0 0.0
      %5382 = vmatmul.mubr.f32.gmra.mrb[0].mxu0 %v5204
      %v5383 = vpop.f32.mrb[0].mxu0
      %v5384 = vadd.f32 %v5197, %v5383
      %v5385 = vpop.f32.mrb[0].mxu0
      %5386 = vmatprep.mubr.f32.mxu0 0.0
      %5387 = vmatmul.mubr.f32.gmra.mrb[0].mxu0 %v5207
      %v5388 = vpop.f32.mrb[0].mxu0
      %v5389 = vadd.f32 %v5197, %v5388
      %v5390 = vpop.f32.mrb[0].mxu0
      %5391 = vmatprep.mubr.f32.mxu0 0.0
      %5392 = vmatmul.mubr.f32.gmra.mrb[0].mxu0 %v5210
      %v5393 = vpop.f32.mrb[0].mxu0
      %v5394 = vadd.f32 %v5197, %v5393
      %v5395 = vpop.f32.mrb[0].mxu0
      %5396 = vmatprep.mubr.f32.mxu0 0.0
      %5397 = vmatmul.mubr.f32.gmra.mrb[0].mxu0 %v5213
      %v5398 = vpop.f32.mrb[0].mxu0
      %v5399 = vadd.f32 %v5197, %v5398
      %v5400 = vpop.f32.mrb[0].mxu0
      %5401 = vmatprep.mubr.f32.mxu0 0.0
      %5402 = vmatmul.mubr.f32.gmra.mrb[0].mxu0 %v5216
      %v5403 = vpop.f32.mrb[0].mxu0
      %v5404 = vadd.f32 %v5197, %v5403
      %v5405 = vpop.f32.mrb[0].mxu0
      %5406 = vmatprep.mubr.f32.mxu0 0.0
      %5407 = vmatmul.mubr.f32.gmra.mrb[0].mxu0 %v5219
      %v5408 = vpop.f32.mrb[0].mxu0
      %v5409 = vadd.f32 %v5197, %v5408
      %v5410 = vpop.f32.mrb[0].mxu0
      %5411 = vmatprep.mubr.f32.mxu0 0.0
      %5412 = vmatmul.mubr.f32.gmra.mrb[0].mxu0 %v5222
      %v5413 = vpop.f32.mrb[0].mxu0
      %v5414 = vadd.f32 %v5197, %v5413
      %v5415 = vpop.f32.mrb[0].mxu0
      %5416 = vmatprep.mubr.f32.mxu0 0.0
      %5417 = vmatmul.mubr.f32.gmra.mrb[0].mxu0 %v5225
      %v5418 = vpop.f32.mrb[0].mxu0
      %v5419 = vadd.f32 %v5197, %v5418
      %v5420 = vpop.f32.mrb[0].mxu0
      %5421 = vmatprep.mubr.f32.mxu0 0.0
      %5422 = vmatmul.mubr.f32.gmra.mrb[0].mxu0 %v5228
      %v5423 = vpop.f32.mrb[0].mxu0
      %v5424 = vadd.f32 %v5197, %v5423
      %v5425 = vpop.f32.mrb[0].mxu0
      %5426 = vmatprep.mubr.f32.mxu0 0.0
      %5427 = vmatmul.mubr.f32.gmra.mrb[0].mxu0 %v5231
      %v5428 = vpop.f32.mrb[0].mxu0
      %v5429 = vadd.f32 %v5197, %v5428
      %v5430 = vpop.f32.mrb[0].mxu0
      %5431 = vmatprep.mubr.f32.mxu0 0.0
      %5432 = vmatmul.mubr.f32.gmra.mrb[0].mxu0 %v5234
      %v5433 = vpop.f32.mrb[0].mxu0
      %v5434 = vadd.f32 %v5197, %v5433
      %v5435 = vpop.f32.mrb[0].mxu0
      %5436 = vmatprep.mubr.f32.mxu0 0.0
      %5437 = vmatmul.mubr.f32.gmra.mrb[0].mxu0 %v5237
      %v5438 = vpop.f32.mrb[0].mxu0
      %v5439 = vadd.f32 %v5197, %v5438
      %v5440 = vpop.f32.mrb[0].mxu0
      %5441 = vmatprep.mubr.f32.mxu0 0.0
      %5442 = vmatmul.mubr.f32.gmra.mrb[0].mxu0 %v5240
      %v5443 = vpop.f32.mrb[0].mxu0
      %v5444 = vadd.f32 %v5197, %v5443
      %v5445 = vpop.f32.mrb[0].mxu0
      %5446 = vmatprep.mubr.f32.mxu0 0.0
      %5447 = vmatmul.mubr.f32.gmra.mrb[0].mxu0 %v5243
      %v5448 = vpop.f32.mrb[0].mxu0
      %v5449 = vadd.f32 %v5197, %v5448
      %v5450 = vpop.f32.mrb[0].mxu0
      %5451 = vmatprep.mubr.f32.mxu0 0.0
      %5452 = vmatmul.mubr.f32.gmra.mrb[0].mxu0 %v5246
      %v5453 = vpop.f32.mrb[0].mxu0
      %v5454 = vadd.f32 %v5197, %v5453
      %v5455 = vpop.f32.mrb[0].mxu0
      %5456 = vmatprep.mubr.f32.mxu0 0.0
      %5457 = vmatmul.mubr.f32.gmra.mrb[0].mxu0 %v5249
      %v5458 = vpop.f32.mrb[0].mxu0
      %v5459 = vadd.f32 %v5197, %v5458
      %v5460 = vpop.f32.mrb[0].mxu0
      %5461 = vmatprep.mubr.f32.mxu0 0.0
      %5462 = vmatmul.mubr.f32.gmra.mrb[0].mxu0 %v5252
      %v5463 = vpop.f32.mrb[0].mxu0
      %v5464 = vadd.f32 %v5197, %v5463
      %v5465 = vpop.f32.mrb[0].mxu0
      %5466 = vmatprep.mubr.f32.mxu0 0.0
      %5467 = vmatmul.mubr.f32.gmra.mrb[0].mxu0 %v5255
      %v5468 = vpop.f32.mrb[0].mxu0
      %v5469 = vadd.f32 %v5197, %v5468
      %v5470 = vpop.f32.mrb[0].mxu0
      %5471 = vmatprep.mubr.f32.mxu0 0.0
      %5472 = vmatmul.mubr.f32.gmra.mrb[0].mxu0 %v5258
      %v5473 = vpop.f32.mrb[0].mxu0
      %v5474 = vadd.f32 %v5197, %v5473
      %v5475 = vpop.f32.mrb[0].mxu0
      %5476 = vmatprep.mubr.f32.mxu0 0.0
      %5477 = vmatmul.mubr.f32.gmra.mrb[0].mxu0 %v5261
      %v5478 = vpop.f32.mrb[0].mxu0
      %v5479 = vadd.f32 %v5197, %v5478
      %v5480 = vpop.f32.mrb[0].mxu0
      %5481 = vmatprep.mubr.f32.mxu0 0.0
      %5482 = vmatmul.mubr.f32.gmra.mrb[0].mxu0 %v5264
      %v5483 = vpop.f32.mrb[0].mxu0
      %v5484 = vadd.f32 %v5197, %v5483
      %v5485 = vpop.f32.mrb[0].mxu0
      %5486 = vmatprep.mubr.f32.mxu0 0.0
      %5487 = vmatmul.mubr.f32.gmra.mrb[0].mxu0 %v5267
      %v5488 = vpop.f32.mrb[0].mxu0
      %v5489 = vadd.f32 %v5197, %v5488
      %v5490 = vpop.f32.mrb[0].mxu0
      %5491 = vmatprep.mubr.f32.mxu0 0.0
      %5492 = vmatmul.mubr.f32.gmra.mrb[0].mxu0 %v5270
      %v5493 = vpop.f32.mrb[0].mxu0
      %v5494 = vadd.f32 %v5197, %v5493
      %v5495 = vpop.f32.mrb[0].mxu0
      %5496 = vmatprep.mubr.f32.mxu0 0.0
      %5497 = vmatmul.mubr.f32.gmra.mrb[0].mxu0 %v5273
      %v5498 = vpop.f32.mrb[0].mxu0
      %v5499 = vadd.f32 %v5197, %v5498
      %v5500 = vpop.f32.mrb[0].mxu0
      %5501 = vmatprep.mubr.f32.mxu0 0.0
      %5502 = vmatmul.mubr.f32.gmra.mrb[0].mxu0 %v5276
      %v5503 = vpop.f32.mrb[0].mxu0
      %v5504 = vadd.f32 %v5197, %v5503
      %v5505 = vpop.f32.mrb[0].mxu0
      %5506 = vmatprep.mubr.f32.mxu0 0.0
      %5507 = vmatmul.mubr.f32.gmra.mrb[0].mxu0 %v5279
      %v5508 = vpop.f32.mrb[0].mxu0
      %v5509 = vadd.f32 %v5197, %v5508
      %v5510 = vpop.f32.mrb[0].mxu0
      %5511 = vmatprep.mubr.f32.mxu0 0.0
      %5512 = vmatmul.mubr.f32.gmra.mrb[0].mxu0 %v5282
      %v5513 = vpop.f32.mrb[0].mxu0
      %v5514 = vadd.f32 %v5197, %v5513
      %v5515 = vpop.f32.mrb[0].mxu0
      %5516 = vmatprep.mubr.f32.mxu0 0.0
      %5517 = vmatmul.mubr.f32.gmra.mrb[0].mxu0 %v5285
      %v5518 = vpop.f32.mrb[0].mxu0
      %v5519 = vadd.f32 %v5197, %v5518
      %v5520 = vpop.f32.mrb[0].mxu0
      %5521 = vmatprep.mubr.f32.mxu0 0.0
      %5522 = vmatmul.mubr.f32.gmra.mrb[0].mxu0 %v5288
      %v5523 = vpop.f32.mrb[0].mxu0
      %v5524 = vadd.f32 %v5197, %v5523
      %v5525 = vpop.f32.mrb[0].mxu0
      %5526 = vmatprep.mubr.f32.mxu0 0.0
      %5527 = vmatmul.mubr.f32.gmra.mrb[0].mxu0 %v5291
      %v5528 = vpop.f32.mrb[0].mxu0
      %v5529 = vadd.f32 %v5197, %v5528
      %v5530 = vpop.f32.mrb[0].mxu0
      %5531 = vmatprep.mubr.f32.mxu0 0.0
      %5532 = vmatmul.mubr.f32.gmra.mrb[0].mxu0 %v5294
      %v5533 = vpop.f32.mrb[0].mxu0
      %v5534 = vadd.f32 %v5197, %v5533
      %v5535 = vpop.f32.mrb[0].mxu0
      %5536 = vmatprep.mubr.f32.mxu0 0.0
      %5537 = vmatmul.mubr.f32.gmra.mrb[0].mxu0 %v5297
      %v5538 = vpop.f32.mrb[0].mxu0
      %v5539 = vadd.f32 %v5197, %v5538
      %v5540 = vpop.f32.mrb[0].mxu0
      %5541 = vmatprep.mubr.f32.mxu0 0.0
      %5542 = vmatmul.mubr.f32.gmra.mrb[0].mxu0 %v5300
      %v5543 = vpop.f32.mrb[0].mxu0
      %v5544 = vadd.f32 %v5197, %v5543
      %v5545 = vpop.f32.mrb[0].mxu0
      %5546 = vmatprep.mubr.f32.mxu0 0.0
      %5547 = vmatmul.mubr.f32.gmra.mrb[0].mxu0 %v5303
      %v5548 = vpop.f32.mrb[0].mxu0
      %v5549 = vadd.f32 %v5197, %v5548
      %v5550 = vpop.f32.mrb[0].mxu0
      %5551 = vmatprep.mubr.f32.mxu0 0.0
      %5552 = vmatmul.mubr.f32.gmra.mrb[0].mxu0 %v5306
      %v5553 = vpop.f32.mrb[0].mxu0
      %v5554 = vadd.f32 %v5197, %v5553
      %v5555 = vpop.f32.mrb[0].mxu0
      %5556 = vdwg.mxu0
      %v5557 = vld [vmem:[%s392 + $0x13] sm:$0xff]
      %v5558 = vld [vmem:[%s392 + $0x1b] sm:$0xff]
      %v5559 = vld [vmem:[%s392 + $0x23] sm:$0xff]
      %v5560 = vld [vmem:[%s392 + $0x2b] sm:$0xff]
      %v5561 = vld [vmem:[%s392 + $0x33] sm:$0xff]
      %v5562 = vld [vmem:[%s392 + $0x3b] sm:$0xff]
      %v5563 = vld [vmem:[%s392 + $0x43] sm:$0xff]
      %v5564 = vld [vmem:[%s392 + $0x4b] sm:$0xff]
      %v5565 = vld [vmem:[%s392 + $0x53] sm:$0xff]
      %v5566 = vld [vmem:[%s392 + $0x5b] sm:$0xff]
      %v5567 = vld [vmem:[%s392 + $0x63] sm:$0xff]
      %v5568 = vld [vmem:[%s392 + $0x6b] sm:$0xff]
      %v5569 = vld [vmem:[%s392 + $0x73] sm:$0xff]
      %v5570 = vld [vmem:[%s392 + $0x7b] sm:$0xff]
      %v5571 = vld [vmem:[%s392 + $0x83] sm:$0xff]
      %v5572 = vld [vmem:[%s392 + $0x8b] sm:$0xff]
      %v5573 = vld [vmem:[%s392 + $0x93] sm:$0xff]
      %v5574 = vld [vmem:[%s392 + $0x9b] sm:$0xff]
      %v5575 = vld [vmem:[%s392 + $0xa3] sm:$0xff]
      %v5576 = vld [vmem:[%s392 + $0xab] sm:$0xff]
      %v5577 = vld [vmem:[%s392 + $0xb3] sm:$0xff]
      %v5578 = vld [vmem:[%s392 + $0xbb] sm:$0xff]
      %v5579 = vld [vmem:[%s392 + $0xc3] sm:$0xff]
      %v5580 = vld [vmem:[%s392 + $0xcb] sm:$0xff]
      %v5581 = vld [vmem:[%s392 + $0xd3] sm:$0xff]
      %v5582 = vld [vmem:[%s392 + $0xdb] sm:$0xff]
      %v5583 = vld [vmem:[%s392 + $0xe3] sm:$0xff]
      %v5584 = vld [vmem:[%s392 + $0xeb] sm:$0xff]
      %v5585 = vld [vmem:[%s392 + $0xf3] sm:$0xff]
      %v5586 = vld [vmem:[%s392 + $0xfb] sm:$0xff]
      %v5587 = vld [vmem:[%s392 + $0x103] sm:$0xff]
      %v5588 = vld [vmem:[%s392 + $0x10b] sm:$0xff]
      %v5589 = vld [vmem:[%s392 + $0x113] sm:$0xff]
      %v5590 = vld [vmem:[%s392 + $0x11b] sm:$0xff]
      %v5591 = vld [vmem:[%s392 + $0x123] sm:$0xff]
      %v5592 = vld [vmem:[%s392 + $0x12b] sm:$0x3f]
      %v5593 = vadd.f32 %v5379, %v5557
      %v5594 = vadd.f32 %v5384, %v5558
      %v5595 = vadd.f32 %v5389, %v5559
      %v5596 = vadd.f32 %v5394, %v5560
      %v5597 = vadd.f32 %v5399, %v5561
      %v5598 = vadd.f32 %v5404, %v5562
      %v5599 = vadd.f32 %v5409, %v5563
      %v5600 = vadd.f32 %v5414, %v5564
      %v5601 = vadd.f32 %v5419, %v5565
      %v5602 = vadd.f32 %v5424, %v5566
      %v5603 = vadd.f32 %v5429, %v5567
      %v5604 = vadd.f32 %v5434, %v5568
      %v5605 = vadd.f32 %v5439, %v5569
      %v5606 = vadd.f32 %v5444, %v5570
      %v5607 = vadd.f32 %v5449, %v5571
      %v5608 = vadd.f32 %v5454, %v5572
      %v5609 = vadd.f32 %v5459, %v5573
      %v5610 = vadd.f32 %v5464, %v5574
      %v5611 = vadd.f32 %v5469, %v5575
      %v5612 = vadd.f32 %v5474, %v5576
      %v5613 = vadd.f32 %v5479, %v5577
      %v5614 = vadd.f32 %v5484, %v5578
      %v5615 = vadd.f32 %v5489, %v5579
      %v5616 = vadd.f32 %v5494, %v5580
      %v5617 = vadd.f32 %v5499, %v5581
      %v5618 = vadd.f32 %v5504, %v5582
      %v5619 = vadd.f32 %v5509, %v5583
      %v5620 = vadd.f32 %v5514, %v5584
      %v5621 = vadd.f32 %v5519, %v5585
      %v5622 = vadd.f32 %v5524, %v5586
      %v5623 = vadd.f32 %v5529, %v5587
      %v5624 = vadd.f32 %v5534, %v5588
      %v5625 = vadd.f32 %v5539, %v5589
      %v5626 = vadd.f32 %v5544, %v5590
      %v5627 = vadd.f32 %v5549, %v5591
      %v5628 = vadd.f32 %v5554, %v5592
      %v5629 = vmul.f32 %v5593, 0.70710677
      %v5630 = vmul.f32 %v5594, 0.70710677
      %v5631 = vmul.f32 %v5595, 0.70710677
      %v5632 = vmul.f32 %v5596, 0.70710677
      %v5633 = vmul.f32 %v5597, 0.70710677
      %v5634 = vmul.f32 %v5598, 0.70710677
      %v5635 = vmul.f32 %v5599, 0.70710677
      %v5636 = vmul.f32 %v5600, 0.70710677
      %v5637 = vmul.f32 %v5601, 0.70710677
      %v5638 = vmul.f32 %v5602, 0.70710677
      %v5639 = vmul.f32 %v5603, 0.70710677
      %v5640 = vmul.f32 %v5604, 0.70710677
      %v5641 = vmul.f32 %v5605, 0.70710677
      %v5642 = vmul.f32 %v5606, 0.70710677
      %v5643 = vmul.f32 %v5607, 0.70710677
      %v5644 = vmul.f32 %v5608, 0.70710677
      %v5645 = vmul.f32 %v5609, 0.70710677
      %v5646 = vmul.f32 %v5610, 0.70710677
      %v5647 = vmul.f32 %v5611, 0.70710677
      %v5648 = vmul.f32 %v5612, 0.70710677
      %v5649 = vmul.f32 %v5613, 0.70710677
      %v5650 = vmul.f32 %v5614, 0.70710677
      %v5651 = vmul.f32 %v5615, 0.70710677
      %v5652 = vmul.f32 %v5616, 0.70710677
      %v5653 = vmul.f32 %v5617, 0.70710677
      %v5654 = vmul.f32 %v5618, 0.70710677
      %v5655 = vmul.f32 %v5619, 0.70710677
      %v5656 = vmul.f32 %v5620, 0.70710677
      %v5657 = vmul.f32 %v5621, 0.70710677
      %v5658 = vmul.f32 %v5622, 0.70710677
      %v5659 = vmul.f32 %v5623, 0.70710677
      %v5660 = vmul.f32 %v5624, 0.70710677
      %v5661 = vmul.f32 %v5625, 0.70710677
      %v5662 = vmul.f32 %v5626, 0.70710677
      %v5663 = vmul.f32 %v5627, 0.70710677
      %v5664 = vmul.f32 %v5628, 0.70710677
      %vm5665 = vcmask 130048
      %5666 = vst.msk [vmem:[%s400] sm:$0xff] %vm5665, %v5629
      %5667 = vst.msk [vmem:[%s400 + $0x8] sm:$0xff] %vm5665, %v5630
      %5668 = vst.msk [vmem:[%s400 + $0x10] sm:$0xff] %vm5665, %v5631
      %5669 = vst.msk [vmem:[%s400 + $0x18] sm:$0xff] %vm5665, %v5632
      %5670 = vst.msk [vmem:[%s400 + $0x20] sm:$0xff] %vm5665, %v5633
      %5671 = vst.msk [vmem:[%s400 + $0x28] sm:$0xff] %vm5665, %v5634
      %5672 = vst.msk [vmem:[%s400 + $0x30] sm:$0xff] %vm5665, %v5635
      %5673 = vst.msk [vmem:[%s400 + $0x38] sm:$0xff] %vm5665, %v5636
      %5674 = vst.msk [vmem:[%s400 + $0x40] sm:$0xff] %vm5665, %v5637
      %5675 = vst.msk [vmem:[%s400 + $0x48] sm:$0xff] %vm5665, %v5638
      %5676 = vst.msk [vmem:[%s400 + $0x50] sm:$0xff] %vm5665, %v5639
      %5677 = vst.msk [vmem:[%s400 + $0x58] sm:$0xff] %vm5665, %v5640
      %5678 = vst.msk [vmem:[%s400 + $0x60] sm:$0xff] %vm5665, %v5641
      %5679 = vst.msk [vmem:[%s400 + $0x68] sm:$0xff] %vm5665, %v5642
      %5680 = vst.msk [vmem:[%s400 + $0x70] sm:$0xff] %vm5665, %v5643
      %5681 = vst.msk [vmem:[%s400 + $0x78] sm:$0xff] %vm5665, %v5644
      %5682 = vst.msk [vmem:[%s400 + $0x80] sm:$0xff] %vm5665, %v5645
      %5683 = vst.msk [vmem:[%s400 + $0x88] sm:$0xff] %vm5665, %v5646
      %5684 = vst.msk [vmem:[%s400 + $0x90] sm:$0xff] %vm5665, %v5647
      %5685 = vst.msk [vmem:[%s400 + $0x98] sm:$0xff] %vm5665, %v5648
      %5686 = vst.msk [vmem:[%s400 + $0xa0] sm:$0xff] %vm5665, %v5649
      %5687 = vst.msk [vmem:[%s400 + $0xa8] sm:$0xff] %vm5665, %v5650
      %5688 = vst.msk [vmem:[%s400 + $0xb0] sm:$0xff] %vm5665, %v5651
      %5689 = vst.msk [vmem:[%s400 + $0xb8] sm:$0xff] %vm5665, %v5652
      %5690 = vst.msk [vmem:[%s400 + $0xc0] sm:$0xff] %vm5665, %v5653
      %5691 = vst.msk [vmem:[%s400 + $0xc8] sm:$0xff] %vm5665, %v5654
      %5692 = vst.msk [vmem:[%s400 + $0xd0] sm:$0xff] %vm5665, %v5655
      %5693 = vst.msk [vmem:[%s400 + $0xd8] sm:$0xff] %vm5665, %v5656
      %5694 = vst.msk [vmem:[%s400 + $0xe0] sm:$0xff] %vm5665, %v5657
      %5695 = vst.msk [vmem:[%s400 + $0xe8] sm:$0xff] %vm5665, %v5658
      %5696 = vst.msk [vmem:[%s400 + $0xf0] sm:$0xff] %vm5665, %v5659
      %5697 = vst.msk [vmem:[%s400 + $0xf8] sm:$0xff] %vm5665, %v5660
      %5698 = vst.msk [vmem:[%s400 + $0x100] sm:$0xff] %vm5665, %v5661
      %5699 = vst.msk [vmem:[%s400 + $0x108] sm:$0xff] %vm5665, %v5662
      %5700 = vst.msk [vmem:[%s400 + $0x110] sm:$0xff] %vm5665, %v5663
      %vm5701 = vcmask 128000
      %5702 = vst.msk [vmem:[%s400 + $0x118] sm:$0x3f] %vm5701, %v5664
      %p5703 = scmp.lt.s32.totalorder %s22, 1
      %s5704 = scalar_select %p5703, %s22, 1
      %s5705 = smul.addr %s5704, 36
      %s5706 = smul.addr %s5705, 8
      %s5707 = scalar_lea.vmem %s11, %s5706
      // Predicated region
      $region65: #{conv_glu_forward.3} parent=63 // pred_check
        %p5708 = pneg %p281
      $region66: #{conv_glu_forward.3} parent=63 // pred_check_branch
        %5710 = sbr.rel (%p5708) target = $region68
      $region67: #{conv_glu_forward.3} parent=63 // pred_region
        _
      $region68: #{conv_glu_forward.3} parent=63 // pred_fallthru
        _
    $region64: #{conv_glu_forward.3} parent=5 // pred_fallthru
      _
    %p5711 = scmp.le.s32.totalorder 2, %s17
    // Predicated region
    $region69: #{conv_glu_forward.3} parent=5 // pred_check
      %p5712 = pneg %p5711
    $region70: #{conv_glu_forward.3} parent=5 // pred_check_branch
      %5714 = sbr.rel (%p5712) target = $region72
    $region71: #{conv_glu_forward.3} parent=5 // pred_region
      %s5715 = ssub.s32 %s17, 2
      // Predicated region
      $region73: #{conv_glu_forward.3} parent=71 // pred_check
        %p5716 = pneg %p287
      $region74: #{conv_glu_forward.3} parent=71 // pred_check_branch
        %5718 = sbr.rel (%p5716) target = $region76
      $region75: #{conv_glu_forward.3} parent=71 // pred_region
        %p5719 = scmp.lt.s32.totalorder %s23, 1
        %s5720 = scalar_select %p5719, %s23, 1
        %s5721 = smul.addr %s5720, 36
        %s5722 = smul.addr %s5721, 8
        %s5723 = scalar_lea.vmem %s11, %s5722
      $region76: #{conv_glu_forward.3} parent=71 // pred_fallthru
        _
    $region72: #{conv_glu_forward.3} parent=5 // pred_fallthru
      _
  $region6: #{conv_glu_forward.3} parent=0 // loop_footer
    %s21 = sadd.s32 1, %s17
  $region7: #{conv_glu_forward.3} parent=0 // loop_footer_branch
    %16 = sbr.rel target = $region3
  $region8: #{conv_glu_forward.3} parent=0 // loop_exit
    _

</llo_original>
